<compile_context>
chip_gen: v7x
topology: tpu7x:2x2x1
jax: 0.10.0
libtpu: 0.0.40
codegen_flags: <defaults>
</compile_context>

<pallas_src>
import functools
import math

import jax
import jax.numpy as jnp
from jax.experimental import pallas as pl
from jax.experimental.pallas import tpu as pltpu


_HALF_LOG_2PIE = 0.5 * math.log(2.0 * math.pi * math.e)
_LOG2 = math.log(2.0)
_HIGHEST = jax.lax.Precision.HIGHEST


# ---------------------------------------------------------------------------
# Parameter / constant setup (glue, plain JAX)
# ---------------------------------------------------------------------------
def _dct8_matrix():
    """Orthonormal 8-point DCT-II matrix D (D @ D.T = I)."""
    n = jnp.arange(8, dtype=jnp.float32)
    k = n[:, None]
    basis = jnp.cos((2.0 * n[None, :] + 1.0) * k * math.pi / 16.0)
    scale = jnp.where(k == 0, math.sqrt(1.0 / 8.0), math.sqrt(2.0 / 8.0))
    return (scale * basis).astype(jnp.float32)


def _positive_qstep(qstep, min_qstep):
    """F.elu(qstep, alpha=0.01) + min_qstep."""
    return jnp.where(qstep > 0, qstep, 0.01 * (jnp.exp(qstep) - 1.0)) + min_qstep


def _pick_tile(dim, target, align):
    """Largest tile <= target that divides dim and is a multiple of `align`
    (falls back to the full dim, which always satisfies the TPU block rule)."""
    if dim <= target:
        return dim
    best = None
    t = align
    while t <= target:
        if dim % t == 0:
            best = t
        t += align
    return best if best is not None else dim


def _pick_width_multiple(w, tw, lane_target):
    """Number of MXU-width column sub-slabs per block (block width n*tw | w)."""
    n_sub, k = 1, 1
    while k * tw <= max(lane_target, tw):
        if w % (k * tw) == 0:
            n_sub = k
        k += 1
    return n_sub


def _default_tile_target():
    """128-wide transforms fill v5e's 128^2 MXUs; 256 fills v6e/v7x's 256^2."""
    try:
        kind = jax.devices()[0].device_kind.lower()
    except Exception:
        kind = ""
    if "v5 lite" in kind or "v5e" in kind or "v5lite" in kind:
        return 128
    return 256


# ---------------------------------------------------------------------------
# Pallas kernel: one (plane, tile_row, tile_col) block per grid step
# ---------------------------------------------------------------------------
def _tile_kernel(inv_q_ref, x_ref, dh_ref, dhtq_ref, dw_ref, dwt_ref,
                 sh_ref, swt_ref, out_ref, s1_ref, s2_ref, *, tw, n_sub):
    inv_q = inv_q_ref[0]          # 1 / positive_qstep (SMEM scalar)

    dh = dh_ref[...]              # I (x) D                     [th, th]
    dhtq = dhtq_ref[...]          # qstep * (I (x) D)^T         [th, th]
    dw = dw_ref[...]              # I (x) D                     [tw, tw]
    dwt = dwt_ref[...]            # (I (x) D)^T                 [tw, tw]
    sh = sh_ref[...]              # per-frequency row selector  [8, th]
    swt = swt_ref[...]            # per-frequency col selector  [tw, 8]

    s1 = jnp.zeros((8, 8), jnp.float32)
    s2 = jnp.zeros((8, 8), jnp.float32)

    # n_sub independent MXU-width column sub-slabs: the DCT/IDCT/stats chains
    # of different sub-slabs are independent, keeping multiple MXUs fed, and
    # the larger block amortizes the per-grid-step overhead.
    for k in range(n_sub):
        lo = k * tw
        x = jnp.round(x_ref[0, :, lo:lo + tw])               # rounding_fn(input)

        # Blockwise 8x8 2-D DCT via block-diagonal (I (x) D) matrices on the
        # MXU: C = (I(x)D) X (I(x)D)^T.  Full-f32 precision is required so
        # round(C / qstep) is not perturbed at qstep ~ 1.
        coeff = jnp.dot(
            jnp.dot(dh, x, precision=_HIGHEST,
                    preferred_element_type=jnp.float32),
            dwt, precision=_HIGHEST, preferred_element_type=jnp.float32)

        # Quantize: r = round(C / qstep) (quantization tables are all ones).
        r = jnp.round(coeff * inv_q)

        # Dequantize + inverse blockwise DCT (+ qstep folded into dhtq),
        # then clip to [0, 255].
        recon = jnp.dot(
            jnp.dot(dhtq, r, precision=_HIGHEST,
                    preferred_element_type=jnp.float32),
            dw, precision=_HIGHEST, preferred_element_type=jnp.float32)
        out_ref[0, :, lo:lo + tw] = jnp.clip(recon, 0.0, 255.0)

        # Per-frequency (8x8) sum and sum-of-squares of r over the blocks of
        # this sub-slab via selector matmuls S_H @ r @ S_W^T.
        s1 = s1 + jnp.dot(
            jnp.dot(sh, r, precision=_HIGHEST,
                    preferred_element_type=jnp.float32),
            swt, precision=_HIGHEST, preferred_element_type=jnp.float32)
        s2 = s2 + jnp.dot(
            jnp.dot(sh, r * r, precision=_HIGHEST,
                    preferred_element_type=jnp.float32),
            swt, precision=_HIGHEST, preferred_element_type=jnp.float32)

    # Per-step partials (combined with a stable parallel-variance in the
    # wrapper); every output block is written exactly once, so all grid axes
    # can be marked "parallel" (megacore-friendly).
    s1_ref[0] = s1
    s2_ref[0] = s2


# ---------------------------------------------------------------------------
# Wrapper
# ---------------------------------------------------------------------------
def encode_decode_intra(inputs, qstep_init=1.0, min_qstep=0.0, *,
                        tile_target=None, lane_target=512, channels_last=True):
    """Forward pass.

    inputs: [b, n, m, c] (channels_last=True, torch layout) or [b, c, n, m]
            (channels_last=False, avoids the NHWC<->planar HBM round-trips).
    Returns (dequantized in the input layout, rate [b]).
    """
    if inputs.ndim != 4:
        raise ValueError("inputs must have rank 4")
    if channels_last:
        b, h, w, c = inputs.shape
        planes = jnp.transpose(inputs, (0, 3, 1, 2)).reshape(b * c, h, w)
    else:
        b, c, h, w = inputs.shape
        planes = inputs.reshape(b * c, h, w)
    assert h % 8 == 0 and w % 8 == 0, "image dims must be multiples of 8"
    planes = planes.astype(jnp.float32)
    bc = b * c

    if tile_target is None:
        tile_target = _default_tile_target()

    q = _positive_qstep(jnp.float32(qstep_init), jnp.float32(min_qstep))
    inv_q = (1.0 / q).reshape(1).astype(jnp.float32)       # SMEM scalar

    # Transform widths stay at MXU size; the block is widened with n_sub
    # independent sub-slabs instead (second-minor multiple of 8, lane multiple
    # of 128 or the full extent).
    th = _pick_tile(h, tile_target, 8)
    tw = _pick_tile(w, tile_target, 128)
    n_sub = _pick_width_multiple(w, tw, lane_target)
    bw = n_sub * tw
    nth, ntw = h // th, w // bw
    steps = nth * ntw

    d = _dct8_matrix()
    eye8 = jnp.eye(8, dtype=jnp.float32)
    dh = jnp.kron(jnp.eye(th // 8, dtype=jnp.float32), d)      # [th, th]
    dw = jnp.kron(jnp.eye(tw // 8, dtype=jnp.float32), d)      # [tw, tw]
    dhtq = dh.T * q                                            # qstep folded in
    dwt = dw.T
    sh = jnp.kron(jnp.ones((1, th // 8), jnp.float32), eye8)   # [8, th]
    swt = jnp.kron(jnp.ones((tw // 8, 1), jnp.float32), eye8)  # [tw, 8]

    const2d = lambda p, i, j: (0, 0)
    stat_map = lambda p, i, j: (p * steps + i * ntw + j, 0, 0)

    per_sub = (4 * th * th * tw + 4 * th * tw * tw          # DCT + IDCT
               + 4 * 8 * th * tw + 4 * 8 * tw * 8)          # stats selectors
    cost = pl.CostEstimate(
        flops=int(bc * steps * n_sub * per_sub),
        transcendentals=0,
        bytes_accessed=int(4 * (2 * bc * h * w
                                + 2 * th * th + 2 * tw * tw
                                + 16 * th + 16 * tw + 128 * bc * steps)))

    kernel = functools.partial(_tile_kernel, tw=tw, n_sub=n_sub)

    recon_planes, s1, s2 = pl.pallas_call(
        kernel,
        out_shape=(
            jax.ShapeDtypeStruct((bc, h, w), jnp.float32),
            jax.ShapeDtypeStruct((bc * steps, 8, 8), jnp.float32),
            jax.ShapeDtypeStruct((bc * steps, 8, 8), jnp.float32),
        ),
        grid=(bc, nth, ntw),
        in_specs=[
            pl.BlockSpec(memory_space=pltpu.MemorySpace.SMEM),     # [1/qstep]
            pl.BlockSpec((1, th, bw), lambda p, i, j: (p, i, j)),  # plane block
            pl.BlockSpec((th, th), const2d),                       # DH  = I(x)D
            pl.BlockSpec((th, th), const2d),                       # q * DH^T
            pl.BlockSpec((tw, tw), const2d),                       # DW  = I(x)D
            pl.BlockSpec((tw, tw), const2d),                       # DW^T
            pl.BlockSpec((8, th), const2d),                        # SH
            pl.BlockSpec((tw, 8), const2d),                        # SW^T
        ],
        out_specs=(
            pl.BlockSpec((1, th, bw), lambda p, i, j: (p, i, j)),
            pl.BlockSpec((1, 8, 8), stat_map),
            pl.BlockSpec((1, 8, 8), stat_map),
        ),
        compiler_params=pltpu.CompilerParams(
            dimension_semantics=("parallel", "parallel", "parallel")),
        cost_estimate=cost,
    )(inv_q, planes, dh, dhtq, dw, dwt, sh, swt)

    # Gaussian rate proxy finalization on tiny [bc*steps, 8, 8] partials in
    # plain XLA, with a Chan-style stable combine across blocks-per-step groups
    # (avoids the one-pass f32 cancellation of a global sum-of-squares).
    n_blk_step = (th // 8) * (bw // 8)          # 8x8 blocks per grid step
    nblk = (h // 8) * (w // 8)                  # 8x8 blocks per plane
    s1 = s1.reshape(bc, steps, 8, 8)
    s2 = s2.reshape(bc, steps, 8, 8)
    m_i = s1 / n_blk_step
    m2_i = jnp.maximum(s2 - n_blk_step * m_i * m_i, 0.0)
    mu = jnp.sum(s1, axis=1) / nblk                              # [bc, 8, 8]
    m2 = jnp.sum(m2_i, axis=1) + n_blk_step * jnp.sum((m_i - mu[:, None]) ** 2,
                                                      axis=1)
    # nblk == 1 yields std = 0 here (torch's unbiased std would yield NaN).
    var = m2 / max(nblk - 1, 1)
    std_over_q = jnp.sqrt(var)        # std(dequantized)/qstep == std(round(C/q))
    eps = jnp.float32(jnp.finfo(jnp.float32).eps)
    entropy = jnp.maximum(jnp.log(std_over_q + eps) + _HALF_LOG_2PIE, 0.0)
    rate_per_plane = entropy.reshape(bc, -1).sum(axis=-1) * (float(nblk) * 64.0) / _LOG2
    rate = rate_per_plane.reshape(b, c).sum(axis=1)

    if channels_last:
        dequantized = recon_planes.reshape(b, c, h, w).transpose(0, 2, 3, 1)
    else:
        dequantized = recon_planes.reshape(b, c, h, w)
    return dequantized, rate


# ---------------------------------------------------------------------------
# Pure-JAX reference (sanity check only)
# ---------------------------------------------------------------------------
def _reference(inputs, qstep_init=1.0, min_qstep=0.0):
    b, h, w, c = inputs.shape
    q = _positive_qstep(jnp.float32(qstep_init), jnp.float32(min_qstep))
    d = _dct8_matrix()
    x = jnp.round(inputs).astype(jnp.float32)
    xb = x.reshape(b, h // 8, 8, w // 8, 8, c)
    coeff = jnp.einsum('ia,bhawdc,jd->bhiwjc', d, xb, d, precision=_HIGHEST)
    deq = jnp.round(coeff / q) * q
    recon = jnp.einsum('ia,bhiwjc,jd->bhawdc', d, deq, d, precision=_HIGHEST)
    recon = jnp.clip(recon.reshape(b, h, w, c), 0.0, 255.0)

    nblk = (h // 8) * (w // 8)
    blocks = deq.transpose(0, 5, 1, 3, 2, 4).reshape(b, c, nblk, 8, 8)
    std = jnp.std(blocks, axis=2, ddof=1)
    eps = jnp.finfo(jnp.float32).eps
    ent = jnp.maximum(jnp.log(std / q + eps) + _HALF_LOG_2PIE, 0.0)
    rate = ent.reshape(b, c, -1).sum(-1) * (float(nblk) * 64.0) / _LOG2
    return recon, rate.sum(axis=1)


if __name__ == "__main__":
    key = jax.random.PRNGKey(0)
    k0, k1, k2 = jax.random.split(key, 3)

    # 1) Small NHWC input matching the torch module's [b, n, m, c] layout.
    x = jax.random.uniform(k0, (2, 16, 16, 3), jnp.float32, 0.0, 255.0)
    deq, rate = encode_decode_intra(x)
    deq, rate = jax.block_until_ready((deq, rate))
    assert deq.shape == x.shape and rate.shape == (2,)
    ref_deq, ref_rate = _reference(x)
    # atol=1.0: a DCT coefficient sitting ~exactly on a rounding boundary may
    # round differently between the kron-block MXU path and the XLA einsum
    # path; each such flip perturbs its 8x8 block by <= 0.125/pixel.
    assert jnp.allclose(deq, ref_deq, atol=1.0), "reconstruction mismatch"
    assert jnp.allclose(rate, ref_rate, rtol=5e-3, atol=1.0), "rate mismatch"

    # 2) Exercise the in-kernel multi-sub-slab path (two 128-wide chunks/step)
    #    and the planar (no-transpose) I/O path.
    x2 = jax.random.uniform(k1, (1, 64, 256, 2), jnp.float32, 0.0, 255.0)
    deq2, rate2 = encode_decode_intra(x2, tile_target=128, lane_target=256)
    deq2, rate2 = jax.block_until_ready((deq2, rate2))
    ref_deq2, ref_rate2 = _reference(x2)
    assert jnp.allclose(deq2, ref_deq2, atol=1.0), "sub-slab reconstruction mismatch"
    assert jnp.allclose(rate2, ref_rate2, rtol=5e-3, atol=1.0), "sub-slab rate mismatch"

    x2p = jnp.transpose(x2, (0, 3, 1, 2))
    deq2p, rate2p = encode_decode_intra(x2p, tile_target=128, lane_target=256,
                                        channels_last=False)
    deq2p, rate2p = jax.block_until_ready((deq2p, rate2p))
    assert jnp.allclose(jnp.transpose(deq2p, (0, 2, 3, 1)), deq2, atol=1e-5)
    assert jnp.allclose(rate2p, rate2, rtol=1e-6, atol=1e-3)

    # 3) Exercise multiple spatial grid steps per plane (2x2 tiles) and the
    #    cross-tile stable variance combine.
    x3 = jax.random.uniform(k2, (1, 256, 256, 1), jnp.float32, 0.0, 255.0)
    deq3, rate3 = encode_decode_intra(x3, tile_target=128, lane_target=128)
    deq3, rate3 = jax.block_until_ready((deq3, rate3))
    ref_deq3, ref_rate3 = _reference(x3)
    assert jnp.allclose(deq3, ref_deq3, atol=1.0), "tiled reconstruction mismatch"
    assert jnp.allclose(rate3, ref_rate3, rtol=5e-3, atol=1.0), "tiled rate mismatch"

    print("KERNEL_OK")
</pallas_src>

<mosaic_0001>
module attributes {stable_mosaic.version = 11 : i64} {
  func.func @_tile_kernel(%arg0: i32, %arg1: i32, %arg2: i32, %arg3: memref<1xf32, #tpu.memory_space<smem>>, %arg4: memref<1x16x16xf32, #tpu.memory_space<vmem>>, %arg5: memref<16x16xf32, #tpu.memory_space<vmem>>, %arg6: memref<16x16xf32, #tpu.memory_space<vmem>>, %arg7: memref<16x16xf32, #tpu.memory_space<vmem>>, %arg8: memref<16x16xf32, #tpu.memory_space<vmem>>, %arg9: memref<8x16xf32, #tpu.memory_space<vmem>>, %arg10: memref<16x8xf32, #tpu.memory_space<vmem>>, %arg11: memref<1x16x16xf32, #tpu.memory_space<vmem>>, %arg12: memref<1x8x8xf32, #tpu.memory_space<vmem>>, %arg13: memref<1x8x8xf32, #tpu.memory_space<vmem>>) attributes {dimension_semantics = [#tpu.dimension_semantics<parallel>, #tpu.dimension_semantics<parallel>, #tpu.dimension_semantics<parallel>], iteration_bounds = array<i64: 6, 1, 1>, scalar_prefetch = 0 : i64, scratch_operands = 0 : i64, tpu.core_type = #tpu.core_type<tc>, window_params = [{transform_indices = @transform_0, window_bounds = array<i64: 1>}, {transform_indices = @transform_1, window_bounds = array<i64: 1, 16, 16>}, {pipeline_mode = #tpu.pipeline_mode<synchronous>, transform_indices = @transform_2, window_bounds = array<i64: 16, 16>}, {pipeline_mode = #tpu.pipeline_mode<synchronous>, transform_indices = @transform_3, window_bounds = array<i64: 16, 16>}, {pipeline_mode = #tpu.pipeline_mode<synchronous>, transform_indices = @transform_4, window_bounds = array<i64: 16, 16>}, {pipeline_mode = #tpu.pipeline_mode<synchronous>, transform_indices = @transform_5, window_bounds = array<i64: 16, 16>}, {pipeline_mode = #tpu.pipeline_mode<synchronous>, transform_indices = @transform_6, window_bounds = array<i64: 8, 16>}, {pipeline_mode = #tpu.pipeline_mode<synchronous>, transform_indices = @transform_7, window_bounds = array<i64: 16, 8>}, {transform_indices = @transform_8, window_bounds = array<i64: 1, 16, 16>}, {transform_indices = @transform_9, window_bounds = array<i64: 1, 8, 8>}, {transform_indices = @transform_10, window_bounds = array<i64: 1, 8, 8>}]} {
    %c0 = arith.constant 0 : index
    %0 = memref.load %arg3[%c0] : memref<1xf32, #tpu.memory_space<smem>>
    %c0_0 = arith.constant 0 : index
    %c0_1 = arith.constant 0 : index
    %1 = vector.load %arg5[%c0_0, %c0_1] : memref<16x16xf32, #tpu.memory_space<vmem>>, vector<16x16xf32>
    %c0_2 = arith.constant 0 : index
    %c0_3 = arith.constant 0 : index
    %2 = vector.load %arg6[%c0_2, %c0_3] : memref<16x16xf32, #tpu.memory_space<vmem>>, vector<16x16xf32>
    %c0_4 = arith.constant 0 : index
    %c0_5 = arith.constant 0 : index
    %3 = vector.load %arg7[%c0_4, %c0_5] : memref<16x16xf32, #tpu.memory_space<vmem>>, vector<16x16xf32>
    %c0_6 = arith.constant 0 : index
    %c0_7 = arith.constant 0 : index
    %4 = vector.load %arg8[%c0_6, %c0_7] : memref<16x16xf32, #tpu.memory_space<vmem>>, vector<16x16xf32>
    %c0_8 = arith.constant 0 : index
    %c0_9 = arith.constant 0 : index
    %5 = vector.load %arg9[%c0_8, %c0_9] : memref<8x16xf32, #tpu.memory_space<vmem>>, vector<8x16xf32>
    %c0_10 = arith.constant 0 : index
    %c0_11 = arith.constant 0 : index
    %6 = vector.load %arg10[%c0_10, %c0_11] : memref<16x8xf32, #tpu.memory_space<vmem>>, vector<16x8xf32>
    %cst = arith.constant 0.000000e+00 : f32
    %7 = vector.broadcast %cst : f32 to vector<8x8xf32>
    %cst_12 = arith.constant 0.000000e+00 : f32
    %8 = vector.broadcast %cst_12 : f32 to vector<8x8xf32>
    %c0_13 = arith.constant 0 : index
    %c0_14 = arith.constant 0 : index
    %c0_15 = arith.constant 0 : index
    %9 = vector.load %arg4[%c0_13, %c0_14, %c0_15] : memref<1x16x16xf32, #tpu.memory_space<vmem>>, vector<1x16x16xf32>
    %10 = vector.shape_cast %9 : vector<1x16x16xf32> to vector<16x16xf32>
    %11 = math.roundeven %10 : vector<16x16xf32>
    %cst_16 = arith.constant dense<0.000000e+00> : vector<16x16xf32>
    %12 = tpu.matmul %1, %11, %cst_16 {dimension_numbers = #tpu.dot_dimension_numbers<[1], [0], [0], [1], [0, 0, 1, 1], [], []>, precision = #tpu.contract_precision<fp32>} : vector<16x16xf32>, vector<16x16xf32>, vector<16x16xf32> -> vector<16x16xf32>
    %cst_17 = arith.constant dense<0.000000e+00> : vector<16x16xf32>
    %13 = tpu.matmul %12, %4, %cst_17 {dimension_numbers = #tpu.dot_dimension_numbers<[1], [0], [0], [1], [0, 0, 1, 1], [], []>, precision = #tpu.contract_precision<fp32>} : vector<16x16xf32>, vector<16x16xf32>, vector<16x16xf32> -> vector<16x16xf32>
    %14 = vector.broadcast %0 : f32 to vector<16x16xf32>
    %15 = arith.mulf %13, %14 : vector<16x16xf32>
    %16 = math.roundeven %15 : vector<16x16xf32>
    %cst_18 = arith.constant dense<0.000000e+00> : vector<16x16xf32>
    %17 = tpu.matmul %2, %16, %cst_18 {dimension_numbers = #tpu.dot_dimension_numbers<[1], [0], [0], [1], [0, 0, 1, 1], [], []>, precision = #tpu.contract_precision<fp32>} : vector<16x16xf32>, vector<16x16xf32>, vector<16x16xf32> -> vector<16x16xf32>
    %cst_19 = arith.constant dense<0.000000e+00> : vector<16x16xf32>
    %18 = tpu.matmul %17, %3, %cst_19 {dimension_numbers = #tpu.dot_dimension_numbers<[1], [0], [0], [1], [0, 0, 1, 1], [], []>, precision = #tpu.contract_precision<fp32>} : vector<16x16xf32>, vector<16x16xf32>, vector<16x16xf32> -> vector<16x16xf32>
    %cst_20 = arith.constant 0.000000e+00 : f32
    %cst_21 = arith.constant 2.550000e+02 : f32
    %19 = vector.broadcast %cst_20 : f32 to vector<16x16xf32>
    %20 = arith.maximumf %19, %18 : vector<16x16xf32>
    %21 = vector.broadcast %cst_21 : f32 to vector<16x16xf32>
    %22 = arith.minimumf %21, %20 : vector<16x16xf32>
    %c0_22 = arith.constant 0 : index
    %c0_23 = arith.constant 0 : index
    %c0_24 = arith.constant 0 : index
    %23 = vector.load %arg11[%c0_22, %c0_23, %c0_24] : memref<1x16x16xf32, #tpu.memory_space<vmem>>, vector<1x16x16xf32>
    %24 = vector.shape_cast %23 : vector<1x16x16xf32> to vector<16x16xf32>
    %25 = vector.shape_cast %22 : vector<16x16xf32> to vector<1x16x16xf32>
    tpu.vector_store %arg11[%c0_22, %c0_23, %c0_24], %25 {strides = array<i32>} : memref<1x16x16xf32, #tpu.memory_space<vmem>>, vector<1x16x16xf32>,
    %cst_25 = arith.constant dense<0.000000e+00> : vector<8x16xf32>
    %26 = tpu.matmul %5, %16, %cst_25 {dimension_numbers = #tpu.dot_dimension_numbers<[1], [0], [0], [1], [0, 0, 1, 1], [], []>, precision = #tpu.contract_precision<fp32>} : vector<8x16xf32>, vector<16x16xf32>, vector<8x16xf32> -> vector<8x16xf32>
    %cst_26 = arith.constant dense<0.000000e+00> : vector<8x8xf32>
    %27 = tpu.matmul %26, %6, %cst_26 {dimension_numbers = #tpu.dot_dimension_numbers<[1], [0], [0], [1], [0, 0, 1, 1], [], []>, precision = #tpu.contract_precision<fp32>} : vector<8x16xf32>, vector<16x8xf32>, vector<8x8xf32> -> vector<8x8xf32>
    %28 = arith.addf %7, %27 : vector<8x8xf32>
    %29 = arith.mulf %16, %16 : vector<16x16xf32>
    %cst_27 = arith.constant dense<0.000000e+00> : vector<8x16xf32>
    %30 = tpu.matmul %5, %29, %cst_27 {dimension_numbers = #tpu.dot_dimension_numbers<[1], [0], [0], [1], [0, 0, 1, 1], [], []>, precision = #tpu.contract_precision<fp32>} : vector<8x16xf32>, vector<16x16xf32>, vector<8x16xf32> -> vector<8x16xf32>
    %cst_28 = arith.constant dense<0.000000e+00> : vector<8x8xf32>
    %31 = tpu.matmul %30, %6, %cst_28 {dimension_numbers = #tpu.dot_dimension_numbers<[1], [0], [0], [1], [0, 0, 1, 1], [], []>, precision = #tpu.contract_precision<fp32>} : vector<8x16xf32>, vector<16x8xf32>, vector<8x8xf32> -> vector<8x8xf32>
    %32 = arith.addf %8, %31 : vector<8x8xf32>
    %c0_29 = arith.constant 0 : index
    %c0_30 = arith.constant 0 : index
    %c0_31 = arith.constant 0 : index
    %33 = vector.load %arg12[%c0_29, %c0_30, %c0_31] : memref<1x8x8xf32, #tpu.memory_space<vmem>>, vector<1x8x8xf32>
    %34 = vector.shape_cast %33 : vector<1x8x8xf32> to vector<8x8xf32>
    %35 = vector.shape_cast %28 : vector<8x8xf32> to vector<1x8x8xf32>
    tpu.vector_store %arg12[%c0_29, %c0_30, %c0_31], %35 {strides = array<i32>} : memref<1x8x8xf32, #tpu.memory_space<vmem>>, vector<1x8x8xf32>,
    %c0_32 = arith.constant 0 : index
    %c0_33 = arith.constant 0 : index
    %c0_34 = arith.constant 0 : index
    %36 = vector.load %arg13[%c0_32, %c0_33, %c0_34] : memref<1x8x8xf32, #tpu.memory_space<vmem>>, vector<1x8x8xf32>
    %37 = vector.shape_cast %36 : vector<1x8x8xf32> to vector<8x8xf32>
    %38 = vector.shape_cast %32 : vector<8x8xf32> to vector<1x8x8xf32>
    tpu.vector_store %arg13[%c0_32, %c0_33, %c0_34], %38 {strides = array<i32>} : memref<1x8x8xf32, #tpu.memory_space<vmem>>, vector<1x8x8xf32>,
    return
  }
  func.func @transform_0(%arg0: i32, %arg1: i32, %arg2: i32) -> i32 {
    %c0_i32 = arith.constant 0 : i32
    %c0_i32_0 = arith.constant 0 : i32
    return %c0_i32 : i32
  }
  func.func @transform_1(%arg0: i32, %arg1: i32, %arg2: i32) -> (i32, i32, i32) {
    %c0_i32 = arith.constant 0 : i32
    return %arg0, %arg1, %arg2 : i32, i32, i32
  }
  func.func @transform_2(%arg0: i32, %arg1: i32, %arg2: i32) -> (i32, i32) {
    %c0_i32 = arith.constant 0 : i32
    %c0_i32_0 = arith.constant 0 : i32
    %c0_i32_1 = arith.constant 0 : i32
    return %c0_i32, %c0_i32_0 : i32, i32
  }
  func.func @transform_3(%arg0: i32, %arg1: i32, %arg2: i32) -> (i32, i32) {
    %c0_i32 = arith.constant 0 : i32
    %c0_i32_0 = arith.constant 0 : i32
    %c0_i32_1 = arith.constant 0 : i32
    return %c0_i32, %c0_i32_0 : i32, i32
  }
  func.func @transform_4(%arg0: i32, %arg1: i32, %arg2: i32) -> (i32, i32) {
    %c0_i32 = arith.constant 0 : i32
    %c0_i32_0 = arith.constant 0 : i32
    %c0_i32_1 = arith.constant 0 : i32
    return %c0_i32, %c0_i32_0 : i32, i32
  }
  func.func @transform_5(%arg0: i32, %arg1: i32, %arg2: i32) -> (i32, i32) {
    %c0_i32 = arith.constant 0 : i32
    %c0_i32_0 = arith.constant 0 : i32
    %c0_i32_1 = arith.constant 0 : i32
    return %c0_i32, %c0_i32_0 : i32, i32
  }
  func.func @transform_6(%arg0: i32, %arg1: i32, %arg2: i32) -> (i32, i32) {
    %c0_i32 = arith.constant 0 : i32
    %c0_i32_0 = arith.constant 0 : i32
    %c0_i32_1 = arith.constant 0 : i32
    return %c0_i32, %c0_i32_0 : i32, i32
  }
  func.func @transform_7(%arg0: i32, %arg1: i32, %arg2: i32) -> (i32, i32) {
    %c0_i32 = arith.constant 0 : i32
    %c0_i32_0 = arith.constant 0 : i32
    %c0_i32_1 = arith.constant 0 : i32
    return %c0_i32, %c0_i32_0 : i32, i32
  }
  func.func @transform_8(%arg0: i32, %arg1: i32, %arg2: i32) -> (i32, i32, i32) {
    %c0_i32 = arith.constant 0 : i32
    return %arg0, %arg1, %arg2 : i32, i32, i32
  }
  func.func @transform_9(%arg0: i32, %arg1: i32, %arg2: i32) -> (i32, i32, i32) {
    %c1_i32 = arith.constant 1 : i32
    %0 = arith.muli %arg0, %c1_i32 : i32
    %c1_i32_0 = arith.constant 1 : i32
    %1 = arith.muli %arg1, %c1_i32_0 : i32
    %2 = arith.addi %0, %1 : i32
    %3 = arith.addi %2, %arg2 : i32
    %c0_i32 = arith.constant 0 : i32
    %c0_i32_1 = arith.constant 0 : i32
    %c0_i32_2 = arith.constant 0 : i32
    return %3, %c0_i32, %c0_i32_1 : i32, i32, i32
  }
  func.func @transform_10(%arg0: i32, %arg1: i32, %arg2: i32) -> (i32, i32, i32) {
    %c1_i32 = arith.constant 1 : i32
    %0 = arith.muli %arg0, %c1_i32 : i32
    %c1_i32_0 = arith.constant 1 : i32
    %1 = arith.muli %arg1, %c1_i32_0 : i32
    %2 = arith.addi %0, %1 : i32
    %3 = arith.addi %2, %arg2 : i32
    %c0_i32 = arith.constant 0 : i32
    %c0_i32_1 = arith.constant 0 : i32
    %c0_i32_2 = arith.constant 0 : i32
    return %3, %c0_i32, %c0_i32_1 : i32, i32, i32
  }
}

</mosaic_0001>

<llo_original>
// kernel: tpu_custom_call.1
$region0: #{tpu_custom_call.1}
  #allocation0 [shape = 'u32[]', space=smem, size = 0x4, offset = 0x4, fixed_abs, tag = 'smem constant byte address 0x4 - core index']
  #allocation1 [shape = 'u32[144,128]{1,0:T(1,128)}', space=vmem, size = 0x12000, scoped, tag = 'internal scratch']
  #allocation2 [shape = 'f32[1]{0:T(128)S(6)}', space=smem, size = 0x200, scoped, tag = 'scoped memory for tpu_custom_call.1']
  %s0 = inlined_call_operand.<no memory space> [shape: f32[1], index: 0, kind: input, shape index: {}]
  %s1 = inlined_call_operand.hbm [shape: f32[6,16,16], index: 1, kind: input, shape index: {}]
  %s2 = inlined_call_operand.vmem [shape: f32[16,16], index: 2, kind: input, shape index: {}]
  %s3 = inlined_call_operand.vmem [shape: f32[16,16], index: 3, kind: input, shape index: {}]
  %s4 = inlined_call_operand.hbm [shape: f32[16,16], index: 4, kind: input, shape index: {}]
  %s5 = inlined_call_operand.hbm [shape: f32[16,16], index: 5, kind: input, shape index: {}]
  %s6 = inlined_call_operand.hbm [shape: f32[8,16], index: 6, kind: input, shape index: {}]
  %s7 = inlined_call_operand.vmem [shape: f32[16,8], index: 7, kind: input, shape index: {}]
  %s8 = inlined_call_operand.hbm [shape: f32[6,16,16], index: 8, kind: output, shape index: {0}]
  %s9 = inlined_call_operand.hbm [shape: f32[6,8,8], index: 9, kind: output, shape index: {1}]
  %s10 = inlined_call_operand.hbm [shape: f32[6,8,8], index: 10, kind: output, shape index: {2}]
  %11 = xla_tuple %s8, %s9, %s10
  %s12 = sld [smem:[#allocation0]]
  $region97: #{tpu_custom_call.1} parent=0
    _
  %s14 = ssub.s32 1, %s12
  %s15 = scalar_select 0, %s14, %s12
  %16 = sst [smem:[#allocation2]] %s0
  $region1: #{tpu_custom_call.1} parent=0
    #allocation3 [shape = 'u8[16384]{0}', space=vmem, size = 0x4000, scoped, tag = 'input window, operand 1']
    #allocation4 [shape = 's32[2]{0}', space=sflag, size = 0x8, scoped, tag = 'scoped memory for tpu_custom_call.1']
    #allocation5 [shape = 's32[2]{0}', space=sflag, size = 0x8, scoped, tag = 'scoped memory for tpu_custom_call.1']
    #allocation6 [shape = 'u8[8192]{0}', space=vmem, size = 0x2000, scoped, tag = 'input window, operand 4, single buffered']
    #allocation7 [shape = 's32[1]{0}', space=sflag, size = 0x4, scoped, tag = 'scoped memory for tpu_custom_call.1']
    #allocation8 [shape = 'u8[8192]{0}', space=vmem, size = 0x2000, scoped, tag = 'input window, operand 5, single buffered']
    #allocation9 [shape = 'u8[4096]{0}', space=vmem, size = 0x1000, scoped, tag = 'input window, operand 6, single buffered']
    #allocation10 [shape = 's32[1]{0}', space=sflag, size = 0x4, scoped, tag = 'scoped memory for tpu_custom_call.1']
    #allocation11 [shape = 'u8[16384]{0}', space=vmem, size = 0x4000, scoped, tag = 'output window, operand 0']
    #allocation12 [shape = 'u8[8192]{0}', space=vmem, size = 0x2000, scoped, tag = 'output window, operand 1']
    #allocation13 [shape = 's32[2]{0}', space=sflag, size = 0x8, scoped, tag = 'scoped memory for tpu_custom_call.1']
    #allocation14 [shape = 'u8[8192]{0}', space=vmem, size = 0x2000, scoped, tag = 'output window, operand 2']
    %17 = vsyncpa [#allocation4], 0
    %s18 = scalar_lea.sflag [#allocation4], 1
    %19 = vsyncpa %s18, 0
    %20 = vsyncpa [#allocation7], 0
    %21 = vsyncpa [#allocation10], 0
    %22 = vsyncpa [#allocation5], 0
    %s23 = scalar_lea.sflag [#allocation5], 1
    %24 = vsyncpa %s23, 0
    %25 = vsyncpa [#allocation13], 0
    %s26 = scalar_lea.sflag [#allocation13], 1
    %27 = vsyncpa %s26, 0
    loop: start=0, step=1, limit=8
    $region2: #{tpu_custom_call.1} parent=1 // loop_pre_header
      _
    $region3: #{tpu_custom_call.1} parent=1 // loop_header
      %s29 = sphi 0, %s33
      %p30 = scmp.ge.s32.totalorder %s29, 8
      %s36 = sphi 0, %s55
      %s37 = sphi 0, %s51
      %s38 = sphi 0, %s47
      %s39 = sphi 0, %s36
      %s40 = sphi 0, %s37
      %s41 = sphi 0, %s38
      %s42 = sphi 0, %s39
      %s43 = sphi 0, %s40
      %s44 = sphi 0, %s41
      %s56 = sphi 0, %s56
      %s58 = sphi 0, %s56
      %s59 = sphi 0, %s58
      %s73 = sphi 0, %s59
      %s83 = sphi 0, %s85
      %s86 = sphi 0, %s83
      %s87 = sphi 0, %s86
      %s103 = sphi 0, %s87
      %s107 = sphi 0, %s107
      %s109 = sphi 0, %s107
      %s110 = sphi 0, %s109
      %s124 = sphi 0, %s110
      %s128 = sphi 0, %s128
      %s130 = sphi 0, %s128
      %s131 = sphi 0, %s130
      %s145 = sphi 0, %s131
      %s149 = sphi 0, %s149
      %s151 = sphi 0, %s149
      %s152 = sphi 0, %s151
      %s166 = sphi 0, %s152
      %s170 = sphi 0, %s170
      %s172 = sphi 0, %s170
      %s173 = sphi 0, %s172
      %s187 = sphi 0, %s173
      %s191 = sphi 0, %s191
      %s193 = sphi 0, %s191
      %s194 = sphi 0, %s193
      %s208 = sphi 0, %s194
      %s212 = sphi 0, %s212
      %s214 = sphi 0, %s212
      %s215 = sphi 0, %s214
      %s229 = sphi 0, %s215
      %s239 = sphi 0, %s241
      %s242 = sphi 0, %s239
      %s243 = sphi 0, %s242
      %s259 = sphi 0, %s243
      %s269 = sphi 0, %s271
      %s272 = sphi 0, %s269
      %s273 = sphi 0, %s272
      %s289 = sphi 0, %s273
      %s299 = sphi 0, %s301
      %s302 = sphi 0, %s299
      %s303 = sphi 0, %s302
      %s319 = sphi 0, %s303
    $region4: #{tpu_custom_call.1} parent=1 // loop_header_branch
      %32 = sbr.rel (%p30) target = $region8
    $region5: #{tpu_custom_call.1} parent=1 // loop_body
      %s34 = ssub.s32 %s29, 1
      %s35 = ssub.s32 %s29, 2
      %s45 = sadd.s32 1, %s38
      %p46 = scmp.ge.s32.totalorder %s45, 1
      %s47 = scalar_select %p46, 0, %s45
      %s48 = sadd.s32 1, %s37
      %s49 = scalar_select %p46, %s48, %s37
      %p50 = scmp.ge.s32.totalorder %s49, 1
      %s51 = scalar_select %p50, 0, %s49
      %s52 = sadd.s32 1, %s36
      %s53 = scalar_select %p50, %s52, %s36
      %p54 = scmp.ge.s32.totalorder %s53, 6
      %s55 = scalar_select %p54, 0, %s53
      %s57 = sadd.s32 %s56, 1
      %p60 = scmp.eq.s32.totalorder %s29, 5
      %p61 = scmp.ne.s32.totalorder %s56, %s58
      %p62 = scmp.eq.s32.totalorder %s29, 0
      %p63 = por %p61, %p62
      %p64 = scmp.ne.s32.totalorder %s56, %s58
      %p65 = scmp.eq.s32.totalorder %s34, 5
      %p66 = por %p64, %p65
      %p67 = scmp.ne.s32.totalorder %s58, %s59
      %p68 = scmp.eq.s32.totalorder %s34, 0
      %p69 = por %p67, %p68
      %p70 = scmp.ne.s32.totalorder %s58, %s59
      %p71 = scmp.eq.s32.totalorder %s35, 5
      %p72 = por %p70, %p71
      %p74 = scmp.ne.s32.totalorder %s59, %s73
      %p75 = scmp.eq.s32.totalorder %s35, 0
      %p76 = por %p74, %p75
      %s77 = ssub.s32 %s36, %s55
      %s78 = ssub.s32 %s37, %s51
      %s79 = sor.u32 %s77, %s78
      %s80 = ssub.s32 %s38, %s47
      %s81 = sor.u32 %s79, %s80
      %p82 = scmp.eq.s32.totalorder %s81, 0
      %s84 = sadd.s32 %s83, 1
      %s85 = scalar_select %p82, %s83, %s84
      %p88 = pneg %p82
      %p89 = scmp.eq.s32.totalorder %s29, 5
      %p90 = por %p88, %p89
      %p91 = scmp.ne.s32.totalorder %s83, %s86
      %p92 = scmp.eq.s32.totalorder %s29, 0
      %p93 = por %p91, %p92
      %p94 = scmp.ne.s32.totalorder %s83, %s86
      %p95 = scmp.eq.s32.totalorder %s34, 5
      %p96 = por %p94, %p95
      %p97 = scmp.ne.s32.totalorder %s86, %s87
      %p98 = scmp.eq.s32.totalorder %s34, 0
      %p99 = por %p97, %p98
      %p100 = scmp.ne.s32.totalorder %s86, %s87
      %p101 = scmp.eq.s32.totalorder %s35, 5
      %p102 = por %p100, %p101
      %p104 = scmp.ne.s32.totalorder %s87, %s103
      %p105 = scmp.eq.s32.totalorder %s35, 0
      %p106 = por %p104, %p105
      %s108 = sadd.s32 %s107, 1
      %p111 = scmp.eq.s32.totalorder %s29, 5
      %p112 = scmp.ne.s32.totalorder %s107, %s109
      %p113 = scmp.eq.s32.totalorder %s29, 0
      %p114 = por %p112, %p113
      %p115 = scmp.ne.s32.totalorder %s107, %s109
      %p116 = scmp.eq.s32.totalorder %s34, 5
      %p117 = por %p115, %p116
      %p118 = scmp.ne.s32.totalorder %s109, %s110
      %p119 = scmp.eq.s32.totalorder %s34, 0
      %p120 = por %p118, %p119
      %p121 = scmp.ne.s32.totalorder %s109, %s110
      %p122 = scmp.eq.s32.totalorder %s35, 5
      %p123 = por %p121, %p122
      %p125 = scmp.ne.s32.totalorder %s110, %s124
      %p126 = scmp.eq.s32.totalorder %s35, 0
      %p127 = por %p125, %p126
      %s129 = sadd.s32 %s128, 1
      %p132 = scmp.eq.s32.totalorder %s29, 5
      %p133 = scmp.ne.s32.totalorder %s128, %s130
      %p134 = scmp.eq.s32.totalorder %s29, 0
      %p135 = por %p133, %p134
      %p136 = scmp.ne.s32.totalorder %s128, %s130
      %p137 = scmp.eq.s32.totalorder %s34, 5
      %p138 = por %p136, %p137
      %p139 = scmp.ne.s32.totalorder %s130, %s131
      %p140 = scmp.eq.s32.totalorder %s34, 0
      %p141 = por %p139, %p140
      %p142 = scmp.ne.s32.totalorder %s130, %s131
      %p143 = scmp.eq.s32.totalorder %s35, 5
      %p144 = por %p142, %p143
      %p146 = scmp.ne.s32.totalorder %s131, %s145
      %p147 = scmp.eq.s32.totalorder %s35, 0
      %p148 = por %p146, %p147
      %s150 = sadd.s32 %s149, 1
      %p153 = scmp.eq.s32.totalorder %s29, 5
      %p154 = scmp.ne.s32.totalorder %s149, %s151
      %p155 = scmp.eq.s32.totalorder %s29, 0
      %p156 = por %p154, %p155
      %p157 = scmp.ne.s32.totalorder %s149, %s151
      %p158 = scmp.eq.s32.totalorder %s34, 5
      %p159 = por %p157, %p158
      %p160 = scmp.ne.s32.totalorder %s151, %s152
      %p161 = scmp.eq.s32.totalorder %s34, 0
      %p162 = por %p160, %p161
      %p163 = scmp.ne.s32.totalorder %s151, %s152
      %p164 = scmp.eq.s32.totalorder %s35, 5
      %p165 = por %p163, %p164
      %p167 = scmp.ne.s32.totalorder %s152, %s166
      %p168 = scmp.eq.s32.totalorder %s35, 0
      %p169 = por %p167, %p168
      %s171 = sadd.s32 %s170, 1
      %p174 = scmp.eq.s32.totalorder %s29, 5
      %p175 = scmp.ne.s32.totalorder %s170, %s172
      %p176 = scmp.eq.s32.totalorder %s29, 0
      %p177 = por %p175, %p176
      %p178 = scmp.ne.s32.totalorder %s170, %s172
      %p179 = scmp.eq.s32.totalorder %s34, 5
      %p180 = por %p178, %p179
      %p181 = scmp.ne.s32.totalorder %s172, %s173
      %p182 = scmp.eq.s32.totalorder %s34, 0
      %p183 = por %p181, %p182
      %p184 = scmp.ne.s32.totalorder %s172, %s173
      %p185 = scmp.eq.s32.totalorder %s35, 5
      %p186 = por %p184, %p185
      %p188 = scmp.ne.s32.totalorder %s173, %s187
      %p189 = scmp.eq.s32.totalorder %s35, 0
      %p190 = por %p188, %p189
      %s192 = sadd.s32 %s191, 1
      %p195 = scmp.eq.s32.totalorder %s29, 5
      %p196 = scmp.ne.s32.totalorder %s191, %s193
      %p197 = scmp.eq.s32.totalorder %s29, 0
      %p198 = por %p196, %p197
      %p199 = scmp.ne.s32.totalorder %s191, %s193
      %p200 = scmp.eq.s32.totalorder %s34, 5
      %p201 = por %p199, %p200
      %p202 = scmp.ne.s32.totalorder %s193, %s194
      %p203 = scmp.eq.s32.totalorder %s34, 0
      %p204 = por %p202, %p203
      %p205 = scmp.ne.s32.totalorder %s193, %s194
      %p206 = scmp.eq.s32.totalorder %s35, 5
      %p207 = por %p205, %p206
      %p209 = scmp.ne.s32.totalorder %s194, %s208
      %p210 = scmp.eq.s32.totalorder %s35, 0
      %p211 = por %p209, %p210
      %s213 = sadd.s32 %s212, 1
      %p216 = scmp.eq.s32.totalorder %s29, 5
      %p217 = scmp.ne.s32.totalorder %s212, %s214
      %p218 = scmp.eq.s32.totalorder %s29, 0
      %p219 = por %p217, %p218
      %p220 = scmp.ne.s32.totalorder %s212, %s214
      %p221 = scmp.eq.s32.totalorder %s34, 5
      %p222 = por %p220, %p221
      %p223 = scmp.ne.s32.totalorder %s214, %s215
      %p224 = scmp.eq.s32.totalorder %s34, 0
      %p225 = por %p223, %p224
      %p226 = scmp.ne.s32.totalorder %s214, %s215
      %p227 = scmp.eq.s32.totalorder %s35, 5
      %p228 = por %p226, %p227
      %p230 = scmp.ne.s32.totalorder %s215, %s229
      %p231 = scmp.eq.s32.totalorder %s35, 0
      %p232 = por %p230, %p231
      %s233 = ssub.s32 %s36, %s55
      %s234 = ssub.s32 %s37, %s51
      %s235 = sor.u32 %s233, %s234
      %s236 = ssub.s32 %s38, %s47
      %s237 = sor.u32 %s235, %s236
      %p238 = scmp.eq.s32.totalorder %s237, 0
      %s240 = sadd.s32 %s239, 1
      %s241 = scalar_select %p238, %s239, %s240
      %p244 = pneg %p238
      %p245 = scmp.eq.s32.totalorder %s29, 5
      %p246 = por %p244, %p245
      %p247 = scmp.ne.s32.totalorder %s239, %s242
      %p248 = scmp.eq.s32.totalorder %s29, 0
      %p249 = por %p247, %p248
      %p250 = scmp.ne.s32.totalorder %s239, %s242
      %p251 = scmp.eq.s32.totalorder %s34, 5
      %p252 = por %p250, %p251
      %p253 = scmp.ne.s32.totalorder %s242, %s243
      %p254 = scmp.eq.s32.totalorder %s34, 0
      %p255 = por %p253, %p254
      %p256 = scmp.ne.s32.totalorder %s242, %s243
      %p257 = scmp.eq.s32.totalorder %s35, 5
      %p258 = por %p256, %p257
      %p260 = scmp.ne.s32.totalorder %s243, %s259
      %p261 = scmp.eq.s32.totalorder %s35, 0
      %p262 = por %p260, %p261
      %s263 = sadd.s32 %s36, %s37
      %s264 = sadd.s32 %s263, %s38
      %s265 = sadd.s32 %s55, %s51
      %s266 = sadd.s32 %s265, %s47
      %s267 = ssub.s32 %s264, %s266
      %p268 = scmp.eq.s32.totalorder %s267, 0
      %s270 = sadd.s32 %s269, 1
      %s271 = scalar_select %p268, %s269, %s270
      %p274 = pneg %p268
      %p275 = scmp.eq.s32.totalorder %s29, 5
      %p276 = por %p274, %p275
      %p277 = scmp.ne.s32.totalorder %s269, %s272
      %p278 = scmp.eq.s32.totalorder %s29, 0
      %p279 = por %p277, %p278
      %p280 = scmp.ne.s32.totalorder %s269, %s272
      %p281 = scmp.eq.s32.totalorder %s34, 5
      %p282 = por %p280, %p281
      %p283 = scmp.ne.s32.totalorder %s272, %s273
      %p284 = scmp.eq.s32.totalorder %s34, 0
      %p285 = por %p283, %p284
      %p286 = scmp.ne.s32.totalorder %s272, %s273
      %p287 = scmp.eq.s32.totalorder %s35, 5
      %p288 = por %p286, %p287
      %p290 = scmp.ne.s32.totalorder %s273, %s289
      %p291 = scmp.eq.s32.totalorder %s35, 0
      %p292 = por %p290, %p291
      %s293 = sadd.s32 %s36, %s37
      %s294 = sadd.s32 %s293, %s38
      %s295 = sadd.s32 %s55, %s51
      %s296 = sadd.s32 %s295, %s47
      %s297 = ssub.s32 %s294, %s296
      %p298 = scmp.eq.s32.totalorder %s297, 0
      %s300 = sadd.s32 %s299, 1
      %s301 = scalar_select %p298, %s299, %s300
      %p304 = pneg %p298
      %p305 = scmp.eq.s32.totalorder %s29, 5
      %p306 = por %p304, %p305
      %p307 = scmp.ne.s32.totalorder %s299, %s302
      %p308 = scmp.eq.s32.totalorder %s29, 0
      %p309 = por %p307, %p308
      %p310 = scmp.ne.s32.totalorder %s299, %s302
      %p311 = scmp.eq.s32.totalorder %s34, 5
      %p312 = por %p310, %p311
      %p313 = scmp.ne.s32.totalorder %s302, %s303
      %p314 = scmp.eq.s32.totalorder %s34, 0
      %p315 = por %p313, %p314
      %p316 = scmp.ne.s32.totalorder %s302, %s303
      %p317 = scmp.eq.s32.totalorder %s35, 5
      %p318 = por %p316, %p317
      %p320 = scmp.ne.s32.totalorder %s303, %s319
      %p321 = scmp.eq.s32.totalorder %s35, 0
      %p322 = por %p320, %p321
      %p323 = scmp.le.s32.totalorder 1, %s29
      %p324 = scmp.lt.s32.totalorder %s29, 7
      %p325 = pnand %p323, %p324
      %p326 = pneg %p325
      // Predicated region
      $region9: #{tpu_custom_call.1} parent=5 // pred_check
        _
      $region10: #{tpu_custom_call.1} parent=5 // pred_check_branch
        %328 = sbr.rel (%p325) target = $region12
      $region11: #{tpu_custom_call.1} parent=5 // pred_region
        %s329 = ssub.s32 %s29, 1
        // Predicated region
        $region13: #{tpu_custom_call.1} parent=11 // pred_check
          %p330 = pneg %p69
        $region14: #{tpu_custom_call.1} parent=11 // pred_check_branch
          %332 = sbr.rel (%p330) target = $region16
        $region15: #{tpu_custom_call.1} parent=11 // pred_region
          _
        $region16: #{tpu_custom_call.1} parent=11 // pred_fallthru
          _
        // Predicated region
        $region17: #{tpu_custom_call.1} parent=11 // pred_check
          %p333 = pneg %p120
        $region18: #{tpu_custom_call.1} parent=11 // pred_check_branch
          %335 = sbr.rel (%p333) target = $region20
        $region19: #{tpu_custom_call.1} parent=11 // pred_region
          _
        $region20: #{tpu_custom_call.1} parent=11 // pred_fallthru
          _
        // Predicated region
        $region21: #{tpu_custom_call.1} parent=11 // pred_check
          %p336 = pneg %p141
        $region22: #{tpu_custom_call.1} parent=11 // pred_check_branch
          %338 = sbr.rel (%p336) target = $region24
        $region23: #{tpu_custom_call.1} parent=11 // pred_region
          _
        $region24: #{tpu_custom_call.1} parent=11 // pred_fallthru
          _
        // Predicated region
        $region25: #{tpu_custom_call.1} parent=11 // pred_check
          %p339 = pneg %p162
        $region26: #{tpu_custom_call.1} parent=11 // pred_check_branch
          %341 = sbr.rel (%p339) target = $region28
        $region27: #{tpu_custom_call.1} parent=11 // pred_region
          %s343 = ssub.s32 256, 256
          %344 = vsyncadd [#allocation7], %s343
          %s345 = sshll.u32 [#allocation6], 4
          %s346 = int_to_ptr.vmem [resolvable:$true] %s345
          %351 = dma.hbm_to_vmem [thread:$0]  %s4, 256, %s346, [#allocation7], 128, 128, 8
        $region28: #{tpu_custom_call.1} parent=11 // pred_fallthru
          _
        // Predicated region
        $region29: #{tpu_custom_call.1} parent=11 // pred_check
          %p352 = pneg %p183
        $region30: #{tpu_custom_call.1} parent=11 // pred_check_branch
          %354 = sbr.rel (%p352) target = $region32
        $region31: #{tpu_custom_call.1} parent=11 // pred_region
          %s356 = ssub.s32 256, 256
          %357 = vsyncadd [#allocation7], %s356
          %s358 = sshll.u32 [#allocation8], 4
          %s359 = int_to_ptr.vmem [resolvable:$true] %s358
          %364 = dma.hbm_to_vmem [thread:$0]  %s5, 256, %s359, [#allocation7], 128, 128, 8
        $region32: #{tpu_custom_call.1} parent=11 // pred_fallthru
          _
        // Predicated region
        $region33: #{tpu_custom_call.1} parent=11 // pred_check
          %p365 = pneg %p204
        $region34: #{tpu_custom_call.1} parent=11 // pred_check_branch
          %367 = sbr.rel (%p365) target = $region36
        $region35: #{tpu_custom_call.1} parent=11 // pred_region
          %s369 = ssub.s32 128, 128
          %370 = vsyncadd [#allocation10], %s369
          %s372 = sshll.u32 [#allocation9], 4
          %s373 = int_to_ptr.vmem [resolvable:$true] %s372
          %375 = dma.hbm_to_vmem [thread:$0]  %s6, 128, %s373, [#allocation10]
        $region36: #{tpu_custom_call.1} parent=11 // pred_fallthru
          _
        // Predicated region
        $region37: #{tpu_custom_call.1} parent=11 // pred_check
          %p376 = pneg %p225
        $region38: #{tpu_custom_call.1} parent=11 // pred_check_branch
          %378 = sbr.rel (%p376) target = $region40
        $region39: #{tpu_custom_call.1} parent=11 // pred_region
          _
        $region40: #{tpu_custom_call.1} parent=11 // pred_fallthru
          _
      $region12: #{tpu_custom_call.1} parent=5 // pred_fallthru
        _
      %p379 = scmp.lt.s32.totalorder %s29, 6
      // Predicated region
      $region41: #{tpu_custom_call.1} parent=5 // pred_check
        %p380 = pneg %p379
      $region42: #{tpu_custom_call.1} parent=5 // pred_check_branch
        %382 = sbr.rel (%p380) target = $region44
      $region43: #{tpu_custom_call.1} parent=5 // pred_region
        // Predicated region
        $region45: #{tpu_custom_call.1} parent=43 // pred_check
          %p383 = pneg %p93
        $region46: #{tpu_custom_call.1} parent=43 // pred_check_branch
          %385 = sbr.rel (%p383) target = $region48
        $region47: #{tpu_custom_call.1} parent=43 // pred_region
          %s386 = sand.u32 %s83, 1
          %s387 = scalar_lea.sflag [#allocation4], %s386
          %s388 = sand.u32 %s83, 1
          %s389 = smul.addr %s388, 16
          %s390 = scalar_lea.vmem [#allocation3], %s389
          %s391 = smul.u32 2, %s37
          %s393 = ssub.s32 256, 256
          %394 = vsyncadd %s387, %s393
          %s395 = sadd.s32 %s38, %s391
          %s396 = smul.addr %s36, 2
          %s397 = sadd.s32 %s395, %s396
          %s398 = smul.addr %s397, 128
          %s399 = scalar_lea.hbm %s1, %s398
          %s400 = sshll.u32 %s390, 4
          %s401 = int_to_ptr.vmem [resolvable:$true] %s400
          %406 = dma.hbm_to_vmem [thread:$0]  %s399, 256, %s401, %s387, 128, 128, 8
        $region48: #{tpu_custom_call.1} parent=43 // pred_fallthru
          _
      $region44: #{tpu_custom_call.1} parent=5 // pred_fallthru
        _
      %p407 = scmp.le.s32.totalorder 1, %s29
      %p408 = scmp.lt.s32.totalorder %s29, 7
      %p409 = pnand %p407, %p408
      %p410 = pneg %p409
      // Predicated region
      $region49: #{tpu_custom_call.1} parent=5 // pred_check
        _
      $region50: #{tpu_custom_call.1} parent=5 // pred_check_branch
        %412 = sbr.rel (%p409) target = $region52
      $region51: #{tpu_custom_call.1} parent=5 // pred_region
        %s413 = ssub.s32 %s29, 1
        %s414 = sand.u32 %s86, 1
        %s415 = scalar_lea.sflag [#allocation4], %s414
        %s416 = sand.u32 %s86, 1
        %s417 = smul.addr %s416, 16
        %s418 = scalar_lea.vmem [#allocation3], %s417
        // Predicated region
        $region53: #{tpu_custom_call.1} parent=51 // pred_check
          %p419 = pneg %p99
        $region54: #{tpu_custom_call.1} parent=51 // pred_check_branch
          %421 = sbr.rel (%p419) target = $region56
        $region55: #{tpu_custom_call.1} parent=51 // pred_region
          %422 = dma.done %s415, 256
        $region56: #{tpu_custom_call.1} parent=51 // pred_fallthru
          _
        // Predicated region
        $region57: #{tpu_custom_call.1} parent=51 // pred_check
          %p423 = pneg %p162
        $region58: #{tpu_custom_call.1} parent=51 // pred_check_branch
          %425 = sbr.rel (%p423) target = $region60
        $region59: #{tpu_custom_call.1} parent=51 // pred_region
          %426 = dma.done [#allocation7], 256
        $region60: #{tpu_custom_call.1} parent=51 // pred_fallthru
          _
        // Predicated region
        $region61: #{tpu_custom_call.1} parent=51 // pred_check
          %p427 = pneg %p183
        $region62: #{tpu_custom_call.1} parent=51 // pred_check_branch
          %429 = sbr.rel (%p427) target = $region64
        $region63: #{tpu_custom_call.1} parent=51 // pred_region
          %430 = dma.done [#allocation7], 256
        $region64: #{tpu_custom_call.1} parent=51 // pred_fallthru
          _
        // Predicated region
        $region65: #{tpu_custom_call.1} parent=51 // pred_check
          %p431 = pneg %p204
        $region66: #{tpu_custom_call.1} parent=51 // pred_check_branch
          %433 = sbr.rel (%p431) target = $region68
        $region67: #{tpu_custom_call.1} parent=51 // pred_region
          %434 = dma.done [#allocation10], 128
        $region68: #{tpu_custom_call.1} parent=51 // pred_fallthru
          _
        %p435 = pneg %p69
        %p436 = pneg %p66
        %s437 = sand.u32 %s86, 1
        %s438 = scalar_lea.sflag [#allocation4], %s437
        %s439 = sand.u32 %s86, 1
        %s440 = smul.addr %s439, 16
        %s441 = scalar_lea.vmem [#allocation3], %s440
        %p442 = pneg %p99
        %p443 = pneg %p96
        %p444 = pneg %p120
        %p445 = pneg %p117
        %p446 = pneg %p141
        %p447 = pneg %p138
        %p448 = pneg %p162
        %p449 = pneg %p159
        %p450 = pneg %p183
        %p451 = pneg %p180
        %p452 = pneg %p204
        %p453 = pneg %p201
        %p454 = pneg %p225
        %p455 = pneg %p222
        %p456 = pneg %p255
        %p457 = pneg %p252
        %s458 = sand.u32 %s242, 1
        %s459 = scalar_lea.sflag [#allocation5], %s458
        %s460 = sand.u32 %s242, 1
        %s461 = smul.addr %s460, 16
        %s462 = scalar_lea.vmem [#allocation11], %s461
        %p463 = pneg %p285
        %p464 = pneg %p282
        %s465 = sand.u32 %s34, 1
        %s466 = scalar_lea.sflag [#allocation13], %s465
        %s467 = sand.u32 %s272, 1
        %s468 = smul.addr %s467, 8
        %s469 = scalar_lea.vmem [#allocation12], %s468
        %p470 = pneg %p315
        %p471 = pneg %p312
        %s472 = sand.u32 %s34, 1
        %s473 = scalar_lea.sflag [#allocation13], %s472
        %s474 = sand.u32 %s302, 1
        %s475 = smul.addr %s474, 8
        %s476 = scalar_lea.vmem [#allocation14], %s475
        %s477 = smul.u32 2, %s40
        %s478 = smul.u32 2, %s40
        %s479 = sadd.s32 %s39, %s40
        %s480 = sadd.s32 %s479, %s41
        %s481 = sadd.s32 %s39, %s40
        %s482 = sadd.s32 %s481, %s41
        %s483 = sld [smem:[#allocation2]]
        %v484 = vld [vmem:[%s2] sm:$0xff]
        %v485 = vld [vmem:[%s2 + $0x8] sm:$0xff]
        %v486 = vld [vmem:[%s3] sm:$0xff]
        %v487 = vld [vmem:[%s3 + $0x8] sm:$0xff]
        %v488 = vld [vmem:[#allocation6] sm:$0xff]
        %v489 = vld [vmem:[#allocation6 + $0x8] sm:$0xff]
        %v490 = vld [vmem:[#allocation8] sm:$0xff]
        %v491 = vld [vmem:[#allocation8 + $0x8] sm:$0xff]
        %v492 = vld [vmem:[#allocation9] sm:$0xff]
        %v493 = vld [vmem:[%s7] sm:$0xff]
        %v494 = vld [vmem:[%s7 + $0x8] sm:$0xff]
        %v495 = vld [vmem:[%s418] sm:$0xff]
        %v496 = vld [vmem:[%s418 + $0x8] sm:$0xff]
        %v497 = vround.ne.pseudo %v495
        %v498 = vround.ne.pseudo %v496
        %vm499 = vcmask 130048
        %v501 = vsel %vm499, %v484, 0
        %v504 = vsel %vm499, %v485, 0
        %506 = vmatprep.subr.mxu0 0.0
        %v507 = vand.u32 %v497, 4294901760
        %508 = vmatpush1.msra.mxu0 %v507
        %509 = vmatprep.subr.mxu0 0.0
        %v510 = vand.u32 %v498, 4294901760
        %511 = vmatpush1.msra.mxu0 %v510
        %512 = vmatprep.subr.mxu0 0.0
        %513 = vmatpush1.msra.mxu0 0.0
        %514 = vmatprep.subr.mxu0 0.0
        %515 = vmatpush1.msra.mxu0 0.0
        %516 = vmatprep.subr.mxu0 0.0
        %517 = vmatpush1.msra.mxu0 0.0
        %518 = vmatprep.subr.mxu0 0.0
        %519 = vmatpush1.msra.mxu0 0.0
        %520 = vmatprep.subr.mxu0 0.0
        %521 = vmatpush1.msra.mxu0 0.0
        %522 = vmatprep.subr.mxu0 0.0
        %523 = vmatpush1.msra.mxu0 0.0
        %524 = vmatprep.subr.mxu0 0.0
        %525 = vmatpush1.msra.mxu0 0.0
        %526 = vmatprep.subr.mxu0 0.0
        %527 = vmatpush1.msra.mxu0 0.0
        %528 = vmatprep.subr.mxu0 0.0
        %529 = vmatpush1.msra.mxu0 0.0
        %530 = vmatprep.subr.mxu0 0.0
        %531 = vmatpush1.msra.mxu0 0.0
        %532 = vmatprep.subr.mxu0 0.0
        %533 = vmatpush1.msra.mxu0 0.0
        %534 = vmatprep.subr.mxu0 0.0
        %535 = vmatpush1.msra.mxu0 0.0
        %536 = vmatprep.subr.mxu0 0.0
        %537 = vmatpush1.msra.mxu0 0.0
        %538 = vmatprep.subr.mxu0 0.0
        %539 = vmatpush1.msra.mxu0 0.0
        %540 = vmatprep.subr.mxu0 0.0
        %541 = vmatpush1.msra.mxu0 0.0
        %542 = vmatprep.subr.mxu0 0.0
        %543 = vmatpush1.msra.mxu0 0.0
        %544 = vmatprep.subr.mxu0 0.0
        %545 = vmatpush1.msra.mxu0 0.0
        %546 = vmatprep.subr.mxu0 0.0
        %547 = vmatpush1.msra.mxu0 0.0
        %548 = vmatprep.subr.mxu0 0.0
        %549 = vmatpush1.msra.mxu0 0.0
        %550 = vmatprep.subr.mxu0 0.0
        %551 = vmatpush1.msra.mxu0 0.0
        %552 = vmatprep.subr.mxu0 0.0
        %553 = vmatpush1.msra.mxu0 0.0
        %554 = vmatprep.subr.mxu0 0.0
        %555 = vmatpush1.msra.mxu0 0.0
        %556 = vmatprep.subr.mxu0 0.0
        %557 = vmatpush1.msra.mxu0 0.0
        %558 = vmatprep.subr.mxu0 0.0
        %559 = vmatpush1.msra.mxu0 0.0
        %560 = vmatprep.subr.mxu0 0.0
        %561 = vmatpush1.msra.mxu0 0.0
        %562 = vmatprep.subr.mxu0 0.0
        %563 = vmatpush1.msra.mxu0 0.0
        %564 = vmatprep.subr.mxu0 0.0
        %565 = vmatpush1.msra.mxu0 0.0
        %566 = vmatprep.subr.mxu0 0.0
        %567 = vmatpush1.msra.mxu0 0.0
        %568 = vmatprep.subr.mxu0 0.0
        %569 = vmatpush1.msra.mxu0 0.0
        %570 = vmatprep.subr.mxu0 0.0
        %571 = vmatpush1.msra.mxu0 0.0
        %572 = vmatprep.mubr.f32.mxu0 0.0
        %v573 = vand.u32 %v501, 4294901760
        %v574 = vsub.f32 %v501, %v573
        %v575 = vand.u32 %v574, 4294901760
        %v576 = vsub.f32 %v574, %v575
        %v577 = vand.u32 %v576, 4294901760
        %578 = vmatmul.mubr.f32.gmra.mrb[0].mxu0 %v577
        %v579 = vpop.f32.mrb[0].mxu0
        %v580 = vadd.f32 0.0, %v579
        %v581 = vpop.f32.mrb[0].mxu0
        %582 = vmatprep.mubr.f32.mxu0 0.0
        %v583 = vand.u32 %v504, 4294901760
        %v584 = vsub.f32 %v504, %v583
        %v585 = vand.u32 %v584, 4294901760
        %v586 = vsub.f32 %v584, %v585
        %v587 = vand.u32 %v586, 4294901760
        %588 = vmatmul.mubr.f32.gmra.mrb[0].mxu0 %v587
        %v589 = vpop.f32.mrb[0].mxu0
        %v590 = vadd.f32 0.0, %v589
        %v591 = vpop.f32.mrb[0].mxu0
        %592 = vdwg.mxu0
        %593 = vmatprep.subr.mxu0 0.0
        %v594 = vand.u32 %v497, 4294901760
        %v595 = vsub.f32 %v497, %v594
        %v596 = vand.u32 %v595, 4294901760
        %v597 = vsub.f32 %v595, %v596
        %v598 = vand.u32 %v597, 4294901760
        %599 = vmatpush1.msra.mxu0 %v598
        %600 = vmatprep.subr.mxu0 0.0
        %v601 = vand.u32 %v498, 4294901760
        %v602 = vsub.f32 %v498, %v601
        %v603 = vand.u32 %v602, 4294901760
        %v604 = vsub.f32 %v602, %v603
        %v605 = vand.u32 %v604, 4294901760
        %606 = vmatpush1.msra.mxu0 %v605
        %607 = vmatprep.subr.mxu0 0.0
        %608 = vmatpush1.msra.mxu0 0.0
        %609 = vmatprep.subr.mxu0 0.0
        %610 = vmatpush1.msra.mxu0 0.0
        %611 = vmatprep.subr.mxu0 0.0
        %612 = vmatpush1.msra.mxu0 0.0
        %613 = vmatprep.subr.mxu0 0.0
        %614 = vmatpush1.msra.mxu0 0.0
        %615 = vmatprep.subr.mxu0 0.0
        %616 = vmatpush1.msra.mxu0 0.0
        %617 = vmatprep.subr.mxu0 0.0
        %618 = vmatpush1.msra.mxu0 0.0
        %619 = vmatprep.subr.mxu0 0.0
        %620 = vmatpush1.msra.mxu0 0.0
        %621 = vmatprep.subr.mxu0 0.0
        %622 = vmatpush1.msra.mxu0 0.0
        %623 = vmatprep.subr.mxu0 0.0
        %624 = vmatpush1.msra.mxu0 0.0
        %625 = vmatprep.subr.mxu0 0.0
        %626 = vmatpush1.msra.mxu0 0.0
        %627 = vmatprep.subr.mxu0 0.0
        %628 = vmatpush1.msra.mxu0 0.0
        %629 = vmatprep.subr.mxu0 0.0
        %630 = vmatpush1.msra.mxu0 0.0
        %631 = vmatprep.subr.mxu0 0.0
        %632 = vmatpush1.msra.mxu0 0.0
        %633 = vmatprep.subr.mxu0 0.0
        %634 = vmatpush1.msra.mxu0 0.0
        %635 = vmatprep.subr.mxu0 0.0
        %636 = vmatpush1.msra.mxu0 0.0
        %637 = vmatprep.subr.mxu0 0.0
        %638 = vmatpush1.msra.mxu0 0.0
        %639 = vmatprep.subr.mxu0 0.0
        %640 = vmatpush1.msra.mxu0 0.0
        %641 = vmatprep.subr.mxu0 0.0
        %642 = vmatpush1.msra.mxu0 0.0
        %643 = vmatprep.subr.mxu0 0.0
        %644 = vmatpush1.msra.mxu0 0.0
        %645 = vmatprep.subr.mxu0 0.0
        %646 = vmatpush1.msra.mxu0 0.0
        %647 = vmatprep.subr.mxu0 0.0
        %648 = vmatpush1.msra.mxu0 0.0
        %649 = vmatprep.subr.mxu0 0.0
        %650 = vmatpush1.msra.mxu0 0.0
        %651 = vmatprep.subr.mxu0 0.0
        %652 = vmatpush1.msra.mxu0 0.0
        %653 = vmatprep.subr.mxu0 0.0
        %654 = vmatpush1.msra.mxu0 0.0
        %655 = vmatprep.subr.mxu0 0.0
        %656 = vmatpush1.msra.mxu0 0.0
        %657 = vmatprep.subr.mxu0 0.0
        %658 = vmatpush1.msra.mxu0 0.0
        %659 = vmatprep.subr.mxu0 0.0
        %660 = vmatpush1.msra.mxu0 0.0
        %661 = vmatprep.subr.mxu0 0.0
        %662 = vmatpush1.msra.mxu0 0.0
        %663 = vmatprep.subr.mxu0 0.0
        %664 = vmatpush1.msra.mxu0 0.0
        %665 = vmatprep.subr.mxu0 0.0
        %666 = vmatpush1.msra.mxu0 0.0
        %667 = vmatprep.mubr.f32.mxu0 0.0
        %v668 = vand.u32 %v501, 4294901760
        %669 = vmatmul.mubr.f32.gmra.mrb[0].mxu0 %v668
        %v670 = vpop.f32.mrb[0].mxu0
        %v671 = vadd.f32 %v580, %v670
        %v672 = vpop.f32.mrb[0].mxu0
        %673 = vmatprep.mubr.f32.mxu0 0.0
        %v674 = vand.u32 %v504, 4294901760
        %675 = vmatmul.mubr.f32.gmra.mrb[0].mxu0 %v674
        %v676 = vpop.f32.mrb[0].mxu0
        %v677 = vadd.f32 %v590, %v676
        %v678 = vpop.f32.mrb[0].mxu0
        %679 = vdwg.mxu0
        %680 = vmatprep.subr.mxu0 0.0
        %v681 = vand.u32 %v497, 4294901760
        %v682 = vsub.f32 %v497, %v681
        %683 = vmatpush1.msra.mxu0 %v682
        %684 = vmatprep.subr.mxu0 0.0
        %v685 = vand.u32 %v498, 4294901760
        %v686 = vsub.f32 %v498, %v685
        %687 = vmatpush1.msra.mxu0 %v686
        %688 = vmatprep.subr.mxu0 0.0
        %689 = vmatpush1.msra.mxu0 0.0
        %690 = vmatprep.subr.mxu0 0.0
        %691 = vmatpush1.msra.mxu0 0.0
        %692 = vmatprep.subr.mxu0 0.0
        %693 = vmatpush1.msra.mxu0 0.0
        %694 = vmatprep.subr.mxu0 0.0
        %695 = vmatpush1.msra.mxu0 0.0
        %696 = vmatprep.subr.mxu0 0.0
        %697 = vmatpush1.msra.mxu0 0.0
        %698 = vmatprep.subr.mxu0 0.0
        %699 = vmatpush1.msra.mxu0 0.0
        %700 = vmatprep.subr.mxu0 0.0
        %701 = vmatpush1.msra.mxu0 0.0
        %702 = vmatprep.subr.mxu0 0.0
        %703 = vmatpush1.msra.mxu0 0.0
        %704 = vmatprep.subr.mxu0 0.0
        %705 = vmatpush1.msra.mxu0 0.0
        %706 = vmatprep.subr.mxu0 0.0
        %707 = vmatpush1.msra.mxu0 0.0
        %708 = vmatprep.subr.mxu0 0.0
        %709 = vmatpush1.msra.mxu0 0.0
        %710 = vmatprep.subr.mxu0 0.0
        %711 = vmatpush1.msra.mxu0 0.0
        %712 = vmatprep.subr.mxu0 0.0
        %713 = vmatpush1.msra.mxu0 0.0
        %714 = vmatprep.subr.mxu0 0.0
        %715 = vmatpush1.msra.mxu0 0.0
        %716 = vmatprep.subr.mxu0 0.0
        %717 = vmatpush1.msra.mxu0 0.0
        %718 = vmatprep.subr.mxu0 0.0
        %719 = vmatpush1.msra.mxu0 0.0
        %720 = vmatprep.subr.mxu0 0.0
        %721 = vmatpush1.msra.mxu0 0.0
        %722 = vmatprep.subr.mxu0 0.0
        %723 = vmatpush1.msra.mxu0 0.0
        %724 = vmatprep.subr.mxu0 0.0
        %725 = vmatpush1.msra.mxu0 0.0
        %726 = vmatprep.subr.mxu0 0.0
        %727 = vmatpush1.msra.mxu0 0.0
        %728 = vmatprep.subr.mxu0 0.0
        %729 = vmatpush1.msra.mxu0 0.0
        %730 = vmatprep.subr.mxu0 0.0
        %731 = vmatpush1.msra.mxu0 0.0
        %732 = vmatprep.subr.mxu0 0.0
        %733 = vmatpush1.msra.mxu0 0.0
        %734 = vmatprep.subr.mxu0 0.0
        %735 = vmatpush1.msra.mxu0 0.0
        %736 = vmatprep.subr.mxu0 0.0
        %737 = vmatpush1.msra.mxu0 0.0
        %738 = vmatprep.subr.mxu0 0.0
        %739 = vmatpush1.msra.mxu0 0.0
        %740 = vmatprep.subr.mxu0 0.0
        %741 = vmatpush1.msra.mxu0 0.0
        %742 = vmatprep.subr.mxu0 0.0
        %743 = vmatpush1.msra.mxu0 0.0
        %744 = vmatprep.subr.mxu0 0.0
        %745 = vmatpush1.msra.mxu0 0.0
        %746 = vmatprep.subr.mxu0 0.0
        %747 = vmatpush1.msra.mxu0 0.0
        %748 = vmatprep.mubr.f32.mxu0 0.0
        %v749 = vand.u32 %v501, 4294901760
        %v750 = vsub.f32 %v501, %v749
        %751 = vmatmul.mubr.f32.gmra.mrb[0].mxu0 %v750
        %v752 = vpop.f32.mrb[0].mxu0
        %v753 = vadd.f32 %v671, %v752
        %v754 = vpop.f32.mrb[0].mxu0
        %755 = vmatprep.mubr.f32.mxu0 0.0
        %v756 = vand.u32 %v504, 4294901760
        %v757 = vsub.f32 %v504, %v756
        %758 = vmatmul.mubr.f32.gmra.mrb[0].mxu0 %v757
        %v759 = vpop.f32.mrb[0].mxu0
        %v760 = vadd.f32 %v677, %v759
        %v761 = vpop.f32.mrb[0].mxu0
        %762 = vdwg.mxu0
        %763 = vmatprep.subr.mxu0 0.0
        %v764 = vand.u32 %v497, 4294901760
        %765 = vmatpush1.msra.mxu0 %v764
        %766 = vmatprep.subr.mxu0 0.0
        %v767 = vand.u32 %v498, 4294901760
        %768 = vmatpush1.msra.mxu0 %v767
        %769 = vmatprep.subr.mxu0 0.0
        %770 = vmatpush1.msra.mxu0 0.0
        %771 = vmatprep.subr.mxu0 0.0
        %772 = vmatpush1.msra.mxu0 0.0
        %773 = vmatprep.subr.mxu0 0.0
        %774 = vmatpush1.msra.mxu0 0.0
        %775 = vmatprep.subr.mxu0 0.0
        %776 = vmatpush1.msra.mxu0 0.0
        %777 = vmatprep.subr.mxu0 0.0
        %778 = vmatpush1.msra.mxu0 0.0
        %779 = vmatprep.subr.mxu0 0.0
        %780 = vmatpush1.msra.mxu0 0.0
        %781 = vmatprep.subr.mxu0 0.0
        %782 = vmatpush1.msra.mxu0 0.0
        %783 = vmatprep.subr.mxu0 0.0
        %784 = vmatpush1.msra.mxu0 0.0
        %785 = vmatprep.subr.mxu0 0.0
        %786 = vmatpush1.msra.mxu0 0.0
        %787 = vmatprep.subr.mxu0 0.0
        %788 = vmatpush1.msra.mxu0 0.0
        %789 = vmatprep.subr.mxu0 0.0
        %790 = vmatpush1.msra.mxu0 0.0
        %791 = vmatprep.subr.mxu0 0.0
        %792 = vmatpush1.msra.mxu0 0.0
        %793 = vmatprep.subr.mxu0 0.0
        %794 = vmatpush1.msra.mxu0 0.0
        %795 = vmatprep.subr.mxu0 0.0
        %796 = vmatpush1.msra.mxu0 0.0
        %797 = vmatprep.subr.mxu0 0.0
        %798 = vmatpush1.msra.mxu0 0.0
        %799 = vmatprep.subr.mxu0 0.0
        %800 = vmatpush1.msra.mxu0 0.0
        %801 = vmatprep.subr.mxu0 0.0
        %802 = vmatpush1.msra.mxu0 0.0
        %803 = vmatprep.subr.mxu0 0.0
        %804 = vmatpush1.msra.mxu0 0.0
        %805 = vmatprep.subr.mxu0 0.0
        %806 = vmatpush1.msra.mxu0 0.0
        %807 = vmatprep.subr.mxu0 0.0
        %808 = vmatpush1.msra.mxu0 0.0
        %809 = vmatprep.subr.mxu0 0.0
        %810 = vmatpush1.msra.mxu0 0.0
        %811 = vmatprep.subr.mxu0 0.0
        %812 = vmatpush1.msra.mxu0 0.0
        %813 = vmatprep.subr.mxu0 0.0
        %814 = vmatpush1.msra.mxu0 0.0
        %815 = vmatprep.subr.mxu0 0.0
        %816 = vmatpush1.msra.mxu0 0.0
        %817 = vmatprep.subr.mxu0 0.0
        %818 = vmatpush1.msra.mxu0 0.0
        %819 = vmatprep.subr.mxu0 0.0
        %820 = vmatpush1.msra.mxu0 0.0
        %821 = vmatprep.subr.mxu0 0.0
        %822 = vmatpush1.msra.mxu0 0.0
        %823 = vmatprep.subr.mxu0 0.0
        %824 = vmatpush1.msra.mxu0 0.0
        %825 = vmatprep.subr.mxu0 0.0
        %826 = vmatpush1.msra.mxu0 0.0
        %827 = vmatprep.subr.mxu0 0.0
        %828 = vmatpush1.msra.mxu0 0.0
        %829 = vmatprep.mubr.f32.mxu0 0.0
        %v830 = vand.u32 %v501, 4294901760
        %v831 = vsub.f32 %v501, %v830
        %v832 = vand.u32 %v831, 4294901760
        %833 = vmatmul.mubr.f32.gmra.mrb[0].mxu0 %v832
        %v834 = vpop.f32.mrb[0].mxu0
        %v835 = vadd.f32 %v753, %v834
        %v836 = vpop.f32.mrb[0].mxu0
        %837 = vmatprep.mubr.f32.mxu0 0.0
        %v838 = vand.u32 %v504, 4294901760
        %v839 = vsub.f32 %v504, %v838
        %v840 = vand.u32 %v839, 4294901760
        %841 = vmatmul.mubr.f32.gmra.mrb[0].mxu0 %v840
        %v842 = vpop.f32.mrb[0].mxu0
        %v843 = vadd.f32 %v760, %v842
        %v844 = vpop.f32.mrb[0].mxu0
        %845 = vdwg.mxu0
        %846 = vmatprep.subr.mxu0 0.0
        %v847 = vand.u32 %v497, 4294901760
        %v848 = vsub.f32 %v497, %v847
        %v849 = vand.u32 %v848, 4294901760
        %850 = vmatpush1.msra.mxu0 %v849
        %851 = vmatprep.subr.mxu0 0.0
        %v852 = vand.u32 %v498, 4294901760
        %v853 = vsub.f32 %v498, %v852
        %v854 = vand.u32 %v853, 4294901760
        %855 = vmatpush1.msra.mxu0 %v854
        %856 = vmatprep.subr.mxu0 0.0
        %857 = vmatpush1.msra.mxu0 0.0
        %858 = vmatprep.subr.mxu0 0.0
        %859 = vmatpush1.msra.mxu0 0.0
        %860 = vmatprep.subr.mxu0 0.0
        %861 = vmatpush1.msra.mxu0 0.0
        %862 = vmatprep.subr.mxu0 0.0
        %863 = vmatpush1.msra.mxu0 0.0
        %864 = vmatprep.subr.mxu0 0.0
        %865 = vmatpush1.msra.mxu0 0.0
        %866 = vmatprep.subr.mxu0 0.0
        %867 = vmatpush1.msra.mxu0 0.0
        %868 = vmatprep.subr.mxu0 0.0
        %869 = vmatpush1.msra.mxu0 0.0
        %870 = vmatprep.subr.mxu0 0.0
        %871 = vmatpush1.msra.mxu0 0.0
        %872 = vmatprep.subr.mxu0 0.0
        %873 = vmatpush1.msra.mxu0 0.0
        %874 = vmatprep.subr.mxu0 0.0
        %875 = vmatpush1.msra.mxu0 0.0
        %876 = vmatprep.subr.mxu0 0.0
        %877 = vmatpush1.msra.mxu0 0.0
        %878 = vmatprep.subr.mxu0 0.0
        %879 = vmatpush1.msra.mxu0 0.0
        %880 = vmatprep.subr.mxu0 0.0
        %881 = vmatpush1.msra.mxu0 0.0
        %882 = vmatprep.subr.mxu0 0.0
        %883 = vmatpush1.msra.mxu0 0.0
        %884 = vmatprep.subr.mxu0 0.0
        %885 = vmatpush1.msra.mxu0 0.0
        %886 = vmatprep.subr.mxu0 0.0
        %887 = vmatpush1.msra.mxu0 0.0
        %888 = vmatprep.subr.mxu0 0.0
        %889 = vmatpush1.msra.mxu0 0.0
        %890 = vmatprep.subr.mxu0 0.0
        %891 = vmatpush1.msra.mxu0 0.0
        %892 = vmatprep.subr.mxu0 0.0
        %893 = vmatpush1.msra.mxu0 0.0
        %894 = vmatprep.subr.mxu0 0.0
        %895 = vmatpush1.msra.mxu0 0.0
        %896 = vmatprep.subr.mxu0 0.0
        %897 = vmatpush1.msra.mxu0 0.0
        %898 = vmatprep.subr.mxu0 0.0
        %899 = vmatpush1.msra.mxu0 0.0
        %900 = vmatprep.subr.mxu0 0.0
        %901 = vmatpush1.msra.mxu0 0.0
        %902 = vmatprep.subr.mxu0 0.0
        %903 = vmatpush1.msra.mxu0 0.0
        %904 = vmatprep.subr.mxu0 0.0
        %905 = vmatpush1.msra.mxu0 0.0
        %906 = vmatprep.subr.mxu0 0.0
        %907 = vmatpush1.msra.mxu0 0.0
        %908 = vmatprep.subr.mxu0 0.0
        %909 = vmatpush1.msra.mxu0 0.0
        %910 = vmatprep.subr.mxu0 0.0
        %911 = vmatpush1.msra.mxu0 0.0
        %912 = vmatprep.subr.mxu0 0.0
        %913 = vmatpush1.msra.mxu0 0.0
        %914 = vmatprep.subr.mxu0 0.0
        %915 = vmatpush1.msra.mxu0 0.0
        %916 = vmatprep.mubr.f32.mxu0 0.0
        %v917 = vand.u32 %v501, 4294901760
        %918 = vmatmul.mubr.f32.gmra.mrb[0].mxu0 %v917
        %v919 = vpop.f32.mrb[0].mxu0
        %v920 = vadd.f32 %v835, %v919
        %v921 = vpop.f32.mrb[0].mxu0
        %922 = vmatprep.mubr.f32.mxu0 0.0
        %v923 = vand.u32 %v504, 4294901760
        %924 = vmatmul.mubr.f32.gmra.mrb[0].mxu0 %v923
        %v925 = vpop.f32.mrb[0].mxu0
        %v926 = vadd.f32 %v843, %v925
        %v927 = vpop.f32.mrb[0].mxu0
        %928 = vdwg.mxu0
        %929 = vmatprep.subr.mxu0 0.0
        %v930 = vand.u32 %v497, 4294901760
        %931 = vmatpush1.msra.mxu0 %v930
        %932 = vmatprep.subr.mxu0 0.0
        %v933 = vand.u32 %v498, 4294901760
        %934 = vmatpush1.msra.mxu0 %v933
        %935 = vmatprep.subr.mxu0 0.0
        %936 = vmatpush1.msra.mxu0 0.0
        %937 = vmatprep.subr.mxu0 0.0
        %938 = vmatpush1.msra.mxu0 0.0
        %939 = vmatprep.subr.mxu0 0.0
        %940 = vmatpush1.msra.mxu0 0.0
        %941 = vmatprep.subr.mxu0 0.0
        %942 = vmatpush1.msra.mxu0 0.0
        %943 = vmatprep.subr.mxu0 0.0
        %944 = vmatpush1.msra.mxu0 0.0
        %945 = vmatprep.subr.mxu0 0.0
        %946 = vmatpush1.msra.mxu0 0.0
        %947 = vmatprep.subr.mxu0 0.0
        %948 = vmatpush1.msra.mxu0 0.0
        %949 = vmatprep.subr.mxu0 0.0
        %950 = vmatpush1.msra.mxu0 0.0
        %951 = vmatprep.subr.mxu0 0.0
        %952 = vmatpush1.msra.mxu0 0.0
        %953 = vmatprep.subr.mxu0 0.0
        %954 = vmatpush1.msra.mxu0 0.0
        %955 = vmatprep.subr.mxu0 0.0
        %956 = vmatpush1.msra.mxu0 0.0
        %957 = vmatprep.subr.mxu0 0.0
        %958 = vmatpush1.msra.mxu0 0.0
        %959 = vmatprep.subr.mxu0 0.0
        %960 = vmatpush1.msra.mxu0 0.0
        %961 = vmatprep.subr.mxu0 0.0
        %962 = vmatpush1.msra.mxu0 0.0
        %963 = vmatprep.subr.mxu0 0.0
        %964 = vmatpush1.msra.mxu0 0.0
        %965 = vmatprep.subr.mxu0 0.0
        %966 = vmatpush1.msra.mxu0 0.0
        %967 = vmatprep.subr.mxu0 0.0
        %968 = vmatpush1.msra.mxu0 0.0
        %969 = vmatprep.subr.mxu0 0.0
        %970 = vmatpush1.msra.mxu0 0.0
        %971 = vmatprep.subr.mxu0 0.0
        %972 = vmatpush1.msra.mxu0 0.0
        %973 = vmatprep.subr.mxu0 0.0
        %974 = vmatpush1.msra.mxu0 0.0
        %975 = vmatprep.subr.mxu0 0.0
        %976 = vmatpush1.msra.mxu0 0.0
        %977 = vmatprep.subr.mxu0 0.0
        %978 = vmatpush1.msra.mxu0 0.0
        %979 = vmatprep.subr.mxu0 0.0
        %980 = vmatpush1.msra.mxu0 0.0
        %981 = vmatprep.subr.mxu0 0.0
        %982 = vmatpush1.msra.mxu0 0.0
        %983 = vmatprep.subr.mxu0 0.0
        %984 = vmatpush1.msra.mxu0 0.0
        %985 = vmatprep.subr.mxu0 0.0
        %986 = vmatpush1.msra.mxu0 0.0
        %987 = vmatprep.subr.mxu0 0.0
        %988 = vmatpush1.msra.mxu0 0.0
        %989 = vmatprep.subr.mxu0 0.0
        %990 = vmatpush1.msra.mxu0 0.0
        %991 = vmatprep.subr.mxu0 0.0
        %992 = vmatpush1.msra.mxu0 0.0
        %993 = vmatprep.subr.mxu0 0.0
        %994 = vmatpush1.msra.mxu0 0.0
        %995 = vmatprep.mubr.f32.mxu0 0.0
        %v996 = vand.u32 %v501, 4294901760
        %997 = vmatmul.mubr.f32.gmra.mrb[0].mxu0 %v996
        %v998 = vpop.f32.mrb[0].mxu0
        %v999 = vadd.f32 %v920, %v998
        %v1000 = vpop.f32.mrb[0].mxu0
        %1001 = vmatprep.mubr.f32.mxu0 0.0
        %v1002 = vand.u32 %v504, 4294901760
        %1003 = vmatmul.mubr.f32.gmra.mrb[0].mxu0 %v1002
        %v1004 = vpop.f32.mrb[0].mxu0
        %v1005 = vadd.f32 %v926, %v1004
        %v1006 = vpop.f32.mrb[0].mxu0
        %1007 = vdwg.mxu0
        %v1009 = vsel %vm499, %v999, 0
        %v1012 = vsel %vm499, %v1005, 0
        %1014 = vmatprep.subr.mxu0 0.0
        %v1015 = vand.u32 %v490, 4294901760
        %1016 = vmatpush1.msra.mxu0 %v1015
        %1017 = vmatprep.subr.mxu0 0.0
        %v1018 = vand.u32 %v491, 4294901760
        %1019 = vmatpush1.msra.mxu0 %v1018
        %1020 = vmatprep.subr.mxu0 0.0
        %1021 = vmatpush1.msra.mxu0 0.0
        %1022 = vmatprep.subr.mxu0 0.0
        %1023 = vmatpush1.msra.mxu0 0.0
        %1024 = vmatprep.subr.mxu0 0.0
        %1025 = vmatpush1.msra.mxu0 0.0
        %1026 = vmatprep.subr.mxu0 0.0
        %1027 = vmatpush1.msra.mxu0 0.0
        %1028 = vmatprep.subr.mxu0 0.0
        %1029 = vmatpush1.msra.mxu0 0.0
        %1030 = vmatprep.subr.mxu0 0.0
        %1031 = vmatpush1.msra.mxu0 0.0
        %1032 = vmatprep.subr.mxu0 0.0
        %1033 = vmatpush1.msra.mxu0 0.0
        %1034 = vmatprep.subr.mxu0 0.0
        %1035 = vmatpush1.msra.mxu0 0.0
        %1036 = vmatprep.subr.mxu0 0.0
        %1037 = vmatpush1.msra.mxu0 0.0
        %1038 = vmatprep.subr.mxu0 0.0
        %1039 = vmatpush1.msra.mxu0 0.0
        %1040 = vmatprep.subr.mxu0 0.0
        %1041 = vmatpush1.msra.mxu0 0.0
        %1042 = vmatprep.subr.mxu0 0.0
        %1043 = vmatpush1.msra.mxu0 0.0
        %1044 = vmatprep.subr.mxu0 0.0
        %1045 = vmatpush1.msra.mxu0 0.0
        %1046 = vmatprep.subr.mxu0 0.0
        %1047 = vmatpush1.msra.mxu0 0.0
        %1048 = vmatprep.subr.mxu0 0.0
        %1049 = vmatpush1.msra.mxu0 0.0
        %1050 = vmatprep.subr.mxu0 0.0
        %1051 = vmatpush1.msra.mxu0 0.0
        %1052 = vmatprep.subr.mxu0 0.0
        %1053 = vmatpush1.msra.mxu0 0.0
        %1054 = vmatprep.subr.mxu0 0.0
        %1055 = vmatpush1.msra.mxu0 0.0
        %1056 = vmatprep.subr.mxu0 0.0
        %1057 = vmatpush1.msra.mxu0 0.0
        %1058 = vmatprep.subr.mxu0 0.0
        %1059 = vmatpush1.msra.mxu0 0.0
        %1060 = vmatprep.subr.mxu0 0.0
        %1061 = vmatpush1.msra.mxu0 0.0
        %1062 = vmatprep.subr.mxu0 0.0
        %1063 = vmatpush1.msra.mxu0 0.0
        %1064 = vmatprep.subr.mxu0 0.0
        %1065 = vmatpush1.msra.mxu0 0.0
        %1066 = vmatprep.subr.mxu0 0.0
        %1067 = vmatpush1.msra.mxu0 0.0
        %1068 = vmatprep.subr.mxu0 0.0
        %1069 = vmatpush1.msra.mxu0 0.0
        %1070 = vmatprep.subr.mxu0 0.0
        %1071 = vmatpush1.msra.mxu0 0.0
        %1072 = vmatprep.subr.mxu0 0.0
        %1073 = vmatpush1.msra.mxu0 0.0
        %1074 = vmatprep.subr.mxu0 0.0
        %1075 = vmatpush1.msra.mxu0 0.0
        %1076 = vmatprep.subr.mxu0 0.0
        %1077 = vmatpush1.msra.mxu0 0.0
        %1078 = vmatprep.subr.mxu0 0.0
        %1079 = vmatpush1.msra.mxu0 0.0
        %1080 = vmatprep.mubr.f32.mxu0 0.0
        %v1081 = vand.u32 %v1009, 4294901760
        %v1082 = vsub.f32 %v1009, %v1081
        %v1083 = vand.u32 %v1082, 4294901760
        %v1084 = vsub.f32 %v1082, %v1083
        %v1085 = vand.u32 %v1084, 4294901760
        %1086 = vmatmul.mubr.f32.gmra.mrb[0].mxu0 %v1085
        %v1087 = vpop.f32.mrb[0].mxu0
        %v1088 = vadd.f32 0.0, %v1087
        %v1089 = vpop.f32.mrb[0].mxu0
        %1090 = vmatprep.mubr.f32.mxu0 0.0
        %v1091 = vand.u32 %v1012, 4294901760
        %v1092 = vsub.f32 %v1012, %v1091
        %v1093 = vand.u32 %v1092, 4294901760
        %v1094 = vsub.f32 %v1092, %v1093
        %v1095 = vand.u32 %v1094, 4294901760
        %1096 = vmatmul.mubr.f32.gmra.mrb[0].mxu0 %v1095
        %v1097 = vpop.f32.mrb[0].mxu0
        %v1098 = vadd.f32 0.0, %v1097
        %v1099 = vpop.f32.mrb[0].mxu0
        %1100 = vdwg.mxu0
        %1101 = vmatprep.subr.mxu0 0.0
        %v1102 = vand.u32 %v490, 4294901760
        %v1103 = vsub.f32 %v490, %v1102
        %v1104 = vand.u32 %v1103, 4294901760
        %v1105 = vsub.f32 %v1103, %v1104
        %v1106 = vand.u32 %v1105, 4294901760
        %1107 = vmatpush1.msra.mxu0 %v1106
        %1108 = vmatprep.subr.mxu0 0.0
        %v1109 = vand.u32 %v491, 4294901760
        %v1110 = vsub.f32 %v491, %v1109
        %v1111 = vand.u32 %v1110, 4294901760
        %v1112 = vsub.f32 %v1110, %v1111
        %v1113 = vand.u32 %v1112, 4294901760
        %1114 = vmatpush1.msra.mxu0 %v1113
        %1115 = vmatprep.subr.mxu0 0.0
        %1116 = vmatpush1.msra.mxu0 0.0
        %1117 = vmatprep.subr.mxu0 0.0
        %1118 = vmatpush1.msra.mxu0 0.0
        %1119 = vmatprep.subr.mxu0 0.0
        %1120 = vmatpush1.msra.mxu0 0.0
        %1121 = vmatprep.subr.mxu0 0.0
        %1122 = vmatpush1.msra.mxu0 0.0
        %1123 = vmatprep.subr.mxu0 0.0
        %1124 = vmatpush1.msra.mxu0 0.0
        %1125 = vmatprep.subr.mxu0 0.0
        %1126 = vmatpush1.msra.mxu0 0.0
        %1127 = vmatprep.subr.mxu0 0.0
        %1128 = vmatpush1.msra.mxu0 0.0
        %1129 = vmatprep.subr.mxu0 0.0
        %1130 = vmatpush1.msra.mxu0 0.0
        %1131 = vmatprep.subr.mxu0 0.0
        %1132 = vmatpush1.msra.mxu0 0.0
        %1133 = vmatprep.subr.mxu0 0.0
        %1134 = vmatpush1.msra.mxu0 0.0
        %1135 = vmatprep.subr.mxu0 0.0
        %1136 = vmatpush1.msra.mxu0 0.0
        %1137 = vmatprep.subr.mxu0 0.0
        %1138 = vmatpush1.msra.mxu0 0.0
        %1139 = vmatprep.subr.mxu0 0.0
        %1140 = vmatpush1.msra.mxu0 0.0
        %1141 = vmatprep.subr.mxu0 0.0
        %1142 = vmatpush1.msra.mxu0 0.0
        %1143 = vmatprep.subr.mxu0 0.0
        %1144 = vmatpush1.msra.mxu0 0.0
        %1145 = vmatprep.subr.mxu0 0.0
        %1146 = vmatpush1.msra.mxu0 0.0
        %1147 = vmatprep.subr.mxu0 0.0
        %1148 = vmatpush1.msra.mxu0 0.0
        %1149 = vmatprep.subr.mxu0 0.0
        %1150 = vmatpush1.msra.mxu0 0.0
        %1151 = vmatprep.subr.mxu0 0.0
        %1152 = vmatpush1.msra.mxu0 0.0
        %1153 = vmatprep.subr.mxu0 0.0
        %1154 = vmatpush1.msra.mxu0 0.0
        %1155 = vmatprep.subr.mxu0 0.0
        %1156 = vmatpush1.msra.mxu0 0.0
        %1157 = vmatprep.subr.mxu0 0.0
        %1158 = vmatpush1.msra.mxu0 0.0
        %1159 = vmatprep.subr.mxu0 0.0
        %1160 = vmatpush1.msra.mxu0 0.0
        %1161 = vmatprep.subr.mxu0 0.0
        %1162 = vmatpush1.msra.mxu0 0.0
        %1163 = vmatprep.subr.mxu0 0.0
        %1164 = vmatpush1.msra.mxu0 0.0
        %1165 = vmatprep.subr.mxu0 0.0
        %1166 = vmatpush1.msra.mxu0 0.0
        %1167 = vmatprep.subr.mxu0 0.0
        %1168 = vmatpush1.msra.mxu0 0.0
        %1169 = vmatprep.subr.mxu0 0.0
        %1170 = vmatpush1.msra.mxu0 0.0
        %1171 = vmatprep.subr.mxu0 0.0
        %1172 = vmatpush1.msra.mxu0 0.0
        %1173 = vmatprep.subr.mxu0 0.0
        %1174 = vmatpush1.msra.mxu0 0.0
        %1175 = vmatprep.mubr.f32.mxu0 0.0
        %v1176 = vand.u32 %v1009, 4294901760
        %1177 = vmatmul.mubr.f32.gmra.mrb[0].mxu0 %v1176
        %v1178 = vpop.f32.mrb[0].mxu0
        %v1179 = vadd.f32 %v1088, %v1178
        %v1180 = vpop.f32.mrb[0].mxu0
        %1181 = vmatprep.mubr.f32.mxu0 0.0
        %v1182 = vand.u32 %v1012, 4294901760
        %1183 = vmatmul.mubr.f32.gmra.mrb[0].mxu0 %v1182
        %v1184 = vpop.f32.mrb[0].mxu0
        %v1185 = vadd.f32 %v1098, %v1184
        %v1186 = vpop.f32.mrb[0].mxu0
        %1187 = vdwg.mxu0
        %1188 = vmatprep.subr.mxu0 0.0
        %v1189 = vand.u32 %v490, 4294901760
        %v1190 = vsub.f32 %v490, %v1189
        %1191 = vmatpush1.msra.mxu0 %v1190
        %1192 = vmatprep.subr.mxu0 0.0
        %v1193 = vand.u32 %v491, 4294901760
        %v1194 = vsub.f32 %v491, %v1193
        %1195 = vmatpush1.msra.mxu0 %v1194
        %1196 = vmatprep.subr.mxu0 0.0
        %1197 = vmatpush1.msra.mxu0 0.0
        %1198 = vmatprep.subr.mxu0 0.0
        %1199 = vmatpush1.msra.mxu0 0.0
        %1200 = vmatprep.subr.mxu0 0.0
        %1201 = vmatpush1.msra.mxu0 0.0
        %1202 = vmatprep.subr.mxu0 0.0
        %1203 = vmatpush1.msra.mxu0 0.0
        %1204 = vmatprep.subr.mxu0 0.0
        %1205 = vmatpush1.msra.mxu0 0.0
        %1206 = vmatprep.subr.mxu0 0.0
        %1207 = vmatpush1.msra.mxu0 0.0
        %1208 = vmatprep.subr.mxu0 0.0
        %1209 = vmatpush1.msra.mxu0 0.0
        %1210 = vmatprep.subr.mxu0 0.0
        %1211 = vmatpush1.msra.mxu0 0.0
        %1212 = vmatprep.subr.mxu0 0.0
        %1213 = vmatpush1.msra.mxu0 0.0
        %1214 = vmatprep.subr.mxu0 0.0
        %1215 = vmatpush1.msra.mxu0 0.0
        %1216 = vmatprep.subr.mxu0 0.0
        %1217 = vmatpush1.msra.mxu0 0.0
        %1218 = vmatprep.subr.mxu0 0.0
        %1219 = vmatpush1.msra.mxu0 0.0
        %1220 = vmatprep.subr.mxu0 0.0
        %1221 = vmatpush1.msra.mxu0 0.0
        %1222 = vmatprep.subr.mxu0 0.0
        %1223 = vmatpush1.msra.mxu0 0.0
        %1224 = vmatprep.subr.mxu0 0.0
        %1225 = vmatpush1.msra.mxu0 0.0
        %1226 = vmatprep.subr.mxu0 0.0
        %1227 = vmatpush1.msra.mxu0 0.0
        %1228 = vmatprep.subr.mxu0 0.0
        %1229 = vmatpush1.msra.mxu0 0.0
        %1230 = vmatprep.subr.mxu0 0.0
        %1231 = vmatpush1.msra.mxu0 0.0
        %1232 = vmatprep.subr.mxu0 0.0
        %1233 = vmatpush1.msra.mxu0 0.0
        %1234 = vmatprep.subr.mxu0 0.0
        %1235 = vmatpush1.msra.mxu0 0.0
        %1236 = vmatprep.subr.mxu0 0.0
        %1237 = vmatpush1.msra.mxu0 0.0
        %1238 = vmatprep.subr.mxu0 0.0
        %1239 = vmatpush1.msra.mxu0 0.0
        %1240 = vmatprep.subr.mxu0 0.0
        %1241 = vmatpush1.msra.mxu0 0.0
        %1242 = vmatprep.subr.mxu0 0.0
        %1243 = vmatpush1.msra.mxu0 0.0
        %1244 = vmatprep.subr.mxu0 0.0
        %1245 = vmatpush1.msra.mxu0 0.0
        %1246 = vmatprep.subr.mxu0 0.0
        %1247 = vmatpush1.msra.mxu0 0.0
        %1248 = vmatprep.subr.mxu0 0.0
        %1249 = vmatpush1.msra.mxu0 0.0
        %1250 = vmatprep.subr.mxu0 0.0
        %1251 = vmatpush1.msra.mxu0 0.0
        %1252 = vmatprep.subr.mxu0 0.0
        %1253 = vmatpush1.msra.mxu0 0.0
        %1254 = vmatprep.subr.mxu0 0.0
        %1255 = vmatpush1.msra.mxu0 0.0
        %1256 = vmatprep.mubr.f32.mxu0 0.0
        %v1257 = vand.u32 %v1009, 4294901760
        %v1258 = vsub.f32 %v1009, %v1257
        %1259 = vmatmul.mubr.f32.gmra.mrb[0].mxu0 %v1258
        %v1260 = vpop.f32.mrb[0].mxu0
        %v1261 = vadd.f32 %v1179, %v1260
        %v1262 = vpop.f32.mrb[0].mxu0
        %1263 = vmatprep.mubr.f32.mxu0 0.0
        %v1264 = vand.u32 %v1012, 4294901760
        %v1265 = vsub.f32 %v1012, %v1264
        %1266 = vmatmul.mubr.f32.gmra.mrb[0].mxu0 %v1265
        %v1267 = vpop.f32.mrb[0].mxu0
        %v1268 = vadd.f32 %v1185, %v1267
        %v1269 = vpop.f32.mrb[0].mxu0
        %1270 = vdwg.mxu0
        %1271 = vmatprep.subr.mxu0 0.0
        %v1272 = vand.u32 %v490, 4294901760
        %1273 = vmatpush1.msra.mxu0 %v1272
        %1274 = vmatprep.subr.mxu0 0.0
        %v1275 = vand.u32 %v491, 4294901760
        %1276 = vmatpush1.msra.mxu0 %v1275
        %1277 = vmatprep.subr.mxu0 0.0
        %1278 = vmatpush1.msra.mxu0 0.0
        %1279 = vmatprep.subr.mxu0 0.0
        %1280 = vmatpush1.msra.mxu0 0.0
        %1281 = vmatprep.subr.mxu0 0.0
        %1282 = vmatpush1.msra.mxu0 0.0
        %1283 = vmatprep.subr.mxu0 0.0
        %1284 = vmatpush1.msra.mxu0 0.0
        %1285 = vmatprep.subr.mxu0 0.0
        %1286 = vmatpush1.msra.mxu0 0.0
        %1287 = vmatprep.subr.mxu0 0.0
        %1288 = vmatpush1.msra.mxu0 0.0
        %1289 = vmatprep.subr.mxu0 0.0
        %1290 = vmatpush1.msra.mxu0 0.0
        %1291 = vmatprep.subr.mxu0 0.0
        %1292 = vmatpush1.msra.mxu0 0.0
        %1293 = vmatprep.subr.mxu0 0.0
        %1294 = vmatpush1.msra.mxu0 0.0
        %1295 = vmatprep.subr.mxu0 0.0
        %1296 = vmatpush1.msra.mxu0 0.0
        %1297 = vmatprep.subr.mxu0 0.0
        %1298 = vmatpush1.msra.mxu0 0.0
        %1299 = vmatprep.subr.mxu0 0.0
        %1300 = vmatpush1.msra.mxu0 0.0
        %1301 = vmatprep.subr.mxu0 0.0
        %1302 = vmatpush1.msra.mxu0 0.0
        %1303 = vmatprep.subr.mxu0 0.0
        %1304 = vmatpush1.msra.mxu0 0.0
        %1305 = vmatprep.subr.mxu0 0.0
        %1306 = vmatpush1.msra.mxu0 0.0
        %1307 = vmatprep.subr.mxu0 0.0
        %1308 = vmatpush1.msra.mxu0 0.0
        %1309 = vmatprep.subr.mxu0 0.0
        %1310 = vmatpush1.msra.mxu0 0.0
        %1311 = vmatprep.subr.mxu0 0.0
        %1312 = vmatpush1.msra.mxu0 0.0
        %1313 = vmatprep.subr.mxu0 0.0
        %1314 = vmatpush1.msra.mxu0 0.0
        %1315 = vmatprep.subr.mxu0 0.0
        %1316 = vmatpush1.msra.mxu0 0.0
        %1317 = vmatprep.subr.mxu0 0.0
        %1318 = vmatpush1.msra.mxu0 0.0
        %1319 = vmatprep.subr.mxu0 0.0
        %1320 = vmatpush1.msra.mxu0 0.0
        %1321 = vmatprep.subr.mxu0 0.0
        %1322 = vmatpush1.msra.mxu0 0.0
        %1323 = vmatprep.subr.mxu0 0.0
        %1324 = vmatpush1.msra.mxu0 0.0
        %1325 = vmatprep.subr.mxu0 0.0
        %1326 = vmatpush1.msra.mxu0 0.0
        %1327 = vmatprep.subr.mxu0 0.0
        %1328 = vmatpush1.msra.mxu0 0.0
        %1329 = vmatprep.subr.mxu0 0.0
        %1330 = vmatpush1.msra.mxu0 0.0
        %1331 = vmatprep.subr.mxu0 0.0
        %1332 = vmatpush1.msra.mxu0 0.0
        %1333 = vmatprep.subr.mxu0 0.0
        %1334 = vmatpush1.msra.mxu0 0.0
        %1335 = vmatprep.subr.mxu0 0.0
        %1336 = vmatpush1.msra.mxu0 0.0
        %1337 = vmatprep.mubr.f32.mxu0 0.0
        %v1338 = vand.u32 %v1009, 4294901760
        %v1339 = vsub.f32 %v1009, %v1338
        %v1340 = vand.u32 %v1339, 4294901760
        %1341 = vmatmul.mubr.f32.gmra.mrb[0].mxu0 %v1340
        %v1342 = vpop.f32.mrb[0].mxu0
        %v1343 = vadd.f32 %v1261, %v1342
        %v1344 = vpop.f32.mrb[0].mxu0
        %1345 = vmatprep.mubr.f32.mxu0 0.0
        %v1346 = vand.u32 %v1012, 4294901760
        %v1347 = vsub.f32 %v1012, %v1346
        %v1348 = vand.u32 %v1347, 4294901760
        %1349 = vmatmul.mubr.f32.gmra.mrb[0].mxu0 %v1348
        %v1350 = vpop.f32.mrb[0].mxu0
        %v1351 = vadd.f32 %v1268, %v1350
        %v1352 = vpop.f32.mrb[0].mxu0
        %1353 = vdwg.mxu0
        %1354 = vmatprep.subr.mxu0 0.0
        %v1355 = vand.u32 %v490, 4294901760
        %v1356 = vsub.f32 %v490, %v1355
        %v1357 = vand.u32 %v1356, 4294901760
        %1358 = vmatpush1.msra.mxu0 %v1357
        %1359 = vmatprep.subr.mxu0 0.0
        %v1360 = vand.u32 %v491, 4294901760
        %v1361 = vsub.f32 %v491, %v1360
        %v1362 = vand.u32 %v1361, 4294901760
        %1363 = vmatpush1.msra.mxu0 %v1362
        %1364 = vmatprep.subr.mxu0 0.0
        %1365 = vmatpush1.msra.mxu0 0.0
        %1366 = vmatprep.subr.mxu0 0.0
        %1367 = vmatpush1.msra.mxu0 0.0
        %1368 = vmatprep.subr.mxu0 0.0
        %1369 = vmatpush1.msra.mxu0 0.0
        %1370 = vmatprep.subr.mxu0 0.0
        %1371 = vmatpush1.msra.mxu0 0.0
        %1372 = vmatprep.subr.mxu0 0.0
        %1373 = vmatpush1.msra.mxu0 0.0
        %1374 = vmatprep.subr.mxu0 0.0
        %1375 = vmatpush1.msra.mxu0 0.0
        %1376 = vmatprep.subr.mxu0 0.0
        %1377 = vmatpush1.msra.mxu0 0.0
        %1378 = vmatprep.subr.mxu0 0.0
        %1379 = vmatpush1.msra.mxu0 0.0
        %1380 = vmatprep.subr.mxu0 0.0
        %1381 = vmatpush1.msra.mxu0 0.0
        %1382 = vmatprep.subr.mxu0 0.0
        %1383 = vmatpush1.msra.mxu0 0.0
        %1384 = vmatprep.subr.mxu0 0.0
        %1385 = vmatpush1.msra.mxu0 0.0
        %1386 = vmatprep.subr.mxu0 0.0
        %1387 = vmatpush1.msra.mxu0 0.0
        %1388 = vmatprep.subr.mxu0 0.0
        %1389 = vmatpush1.msra.mxu0 0.0
        %1390 = vmatprep.subr.mxu0 0.0
        %1391 = vmatpush1.msra.mxu0 0.0
        %1392 = vmatprep.subr.mxu0 0.0
        %1393 = vmatpush1.msra.mxu0 0.0
        %1394 = vmatprep.subr.mxu0 0.0
        %1395 = vmatpush1.msra.mxu0 0.0
        %1396 = vmatprep.subr.mxu0 0.0
        %1397 = vmatpush1.msra.mxu0 0.0
        %1398 = vmatprep.subr.mxu0 0.0
        %1399 = vmatpush1.msra.mxu0 0.0
        %1400 = vmatprep.subr.mxu0 0.0
        %1401 = vmatpush1.msra.mxu0 0.0
        %1402 = vmatprep.subr.mxu0 0.0
        %1403 = vmatpush1.msra.mxu0 0.0
        %1404 = vmatprep.subr.mxu0 0.0
        %1405 = vmatpush1.msra.mxu0 0.0
        %1406 = vmatprep.subr.mxu0 0.0
        %1407 = vmatpush1.msra.mxu0 0.0
        %1408 = vmatprep.subr.mxu0 0.0
        %1409 = vmatpush1.msra.mxu0 0.0
        %1410 = vmatprep.subr.mxu0 0.0
        %1411 = vmatpush1.msra.mxu0 0.0
        %1412 = vmatprep.subr.mxu0 0.0
        %1413 = vmatpush1.msra.mxu0 0.0
        %1414 = vmatprep.subr.mxu0 0.0
        %1415 = vmatpush1.msra.mxu0 0.0
        %1416 = vmatprep.subr.mxu0 0.0
        %1417 = vmatpush1.msra.mxu0 0.0
        %1418 = vmatprep.subr.mxu0 0.0
        %1419 = vmatpush1.msra.mxu0 0.0
        %1420 = vmatprep.subr.mxu0 0.0
        %1421 = vmatpush1.msra.mxu0 0.0
        %1422 = vmatprep.subr.mxu0 0.0
        %1423 = vmatpush1.msra.mxu0 0.0
        %1424 = vmatprep.mubr.f32.mxu0 0.0
        %v1425 = vand.u32 %v1009, 4294901760
        %1426 = vmatmul.mubr.f32.gmra.mrb[0].mxu0 %v1425
        %v1427 = vpop.f32.mrb[0].mxu0
        %v1428 = vadd.f32 %v1343, %v1427
        %v1429 = vpop.f32.mrb[0].mxu0
        %1430 = vmatprep.mubr.f32.mxu0 0.0
        %v1431 = vand.u32 %v1012, 4294901760
        %1432 = vmatmul.mubr.f32.gmra.mrb[0].mxu0 %v1431
        %v1433 = vpop.f32.mrb[0].mxu0
        %v1434 = vadd.f32 %v1351, %v1433
        %v1435 = vpop.f32.mrb[0].mxu0
        %1436 = vdwg.mxu0
        %1437 = vmatprep.subr.mxu0 0.0
        %v1438 = vand.u32 %v490, 4294901760
        %1439 = vmatpush1.msra.mxu0 %v1438
        %1440 = vmatprep.subr.mxu0 0.0
        %v1441 = vand.u32 %v491, 4294901760
        %1442 = vmatpush1.msra.mxu0 %v1441
        %1443 = vmatprep.subr.mxu0 0.0
        %1444 = vmatpush1.msra.mxu0 0.0
        %1445 = vmatprep.subr.mxu0 0.0
        %1446 = vmatpush1.msra.mxu0 0.0
        %1447 = vmatprep.subr.mxu0 0.0
        %1448 = vmatpush1.msra.mxu0 0.0
        %1449 = vmatprep.subr.mxu0 0.0
        %1450 = vmatpush1.msra.mxu0 0.0
        %1451 = vmatprep.subr.mxu0 0.0
        %1452 = vmatpush1.msra.mxu0 0.0
        %1453 = vmatprep.subr.mxu0 0.0
        %1454 = vmatpush1.msra.mxu0 0.0
        %1455 = vmatprep.subr.mxu0 0.0
        %1456 = vmatpush1.msra.mxu0 0.0
        %1457 = vmatprep.subr.mxu0 0.0
        %1458 = vmatpush1.msra.mxu0 0.0
        %1459 = vmatprep.subr.mxu0 0.0
        %1460 = vmatpush1.msra.mxu0 0.0
        %1461 = vmatprep.subr.mxu0 0.0
        %1462 = vmatpush1.msra.mxu0 0.0
        %1463 = vmatprep.subr.mxu0 0.0
        %1464 = vmatpush1.msra.mxu0 0.0
        %1465 = vmatprep.subr.mxu0 0.0
        %1466 = vmatpush1.msra.mxu0 0.0
        %1467 = vmatprep.subr.mxu0 0.0
        %1468 = vmatpush1.msra.mxu0 0.0
        %1469 = vmatprep.subr.mxu0 0.0
        %1470 = vmatpush1.msra.mxu0 0.0
        %1471 = vmatprep.subr.mxu0 0.0
        %1472 = vmatpush1.msra.mxu0 0.0
        %1473 = vmatprep.subr.mxu0 0.0
        %1474 = vmatpush1.msra.mxu0 0.0
        %1475 = vmatprep.subr.mxu0 0.0
        %1476 = vmatpush1.msra.mxu0 0.0
        %1477 = vmatprep.subr.mxu0 0.0
        %1478 = vmatpush1.msra.mxu0 0.0
        %1479 = vmatprep.subr.mxu0 0.0
        %1480 = vmatpush1.msra.mxu0 0.0
        %1481 = vmatprep.subr.mxu0 0.0
        %1482 = vmatpush1.msra.mxu0 0.0
        %1483 = vmatprep.subr.mxu0 0.0
        %1484 = vmatpush1.msra.mxu0 0.0
        %1485 = vmatprep.subr.mxu0 0.0
        %1486 = vmatpush1.msra.mxu0 0.0
        %1487 = vmatprep.subr.mxu0 0.0
        %1488 = vmatpush1.msra.mxu0 0.0
        %1489 = vmatprep.subr.mxu0 0.0
        %1490 = vmatpush1.msra.mxu0 0.0
        %1491 = vmatprep.subr.mxu0 0.0
        %1492 = vmatpush1.msra.mxu0 0.0
        %1493 = vmatprep.subr.mxu0 0.0
        %1494 = vmatpush1.msra.mxu0 0.0
        %1495 = vmatprep.subr.mxu0 0.0
        %1496 = vmatpush1.msra.mxu0 0.0
        %1497 = vmatprep.subr.mxu0 0.0
        %1498 = vmatpush1.msra.mxu0 0.0
        %1499 = vmatprep.subr.mxu0 0.0
        %1500 = vmatpush1.msra.mxu0 0.0
        %1501 = vmatprep.subr.mxu0 0.0
        %1502 = vmatpush1.msra.mxu0 0.0
        %1503 = vmatprep.mubr.f32.mxu0 0.0
        %v1504 = vand.u32 %v1009, 4294901760
        %1505 = vmatmul.mubr.f32.gmra.mrb[0].mxu0 %v1504
        %v1506 = vpop.f32.mrb[0].mxu0
        %v1507 = vadd.f32 %v1428, %v1506
        %v1508 = vpop.f32.mrb[0].mxu0
        %1509 = vmatprep.mubr.f32.mxu0 0.0
        %v1510 = vand.u32 %v1012, 4294901760
        %1511 = vmatmul.mubr.f32.gmra.mrb[0].mxu0 %v1510
        %v1512 = vpop.f32.mrb[0].mxu0
        %v1513 = vadd.f32 %v1434, %v1512
        %v1514 = vpop.f32.mrb[0].mxu0
        %1515 = vdwg.mxu0
        %v1516 = vstv %s483
        %v1517 = vmul.f32 %v1507, %v1516
        %v1518 = vmul.f32 %v1513, %v1516
        %v1519 = vround.ne.pseudo %v1517
        %v1520 = vround.ne.pseudo %v1518
        %v1522 = vsel %vm499, %v486, 0
        %v1525 = vsel %vm499, %v487, 0
        %1527 = vmatprep.subr.mxu0 0.0
        %v1528 = vand.u32 %v1519, 4294901760
        %1529 = vmatpush1.msra.mxu0 %v1528
        %1530 = vmatprep.subr.mxu0 0.0
        %v1531 = vand.u32 %v1520, 4294901760
        %1532 = vmatpush1.msra.mxu0 %v1531
        %1533 = vmatprep.subr.mxu0 0.0
        %1534 = vmatpush1.msra.mxu0 0.0
        %1535 = vmatprep.subr.mxu0 0.0
        %1536 = vmatpush1.msra.mxu0 0.0
        %1537 = vmatprep.subr.mxu0 0.0
        %1538 = vmatpush1.msra.mxu0 0.0
        %1539 = vmatprep.subr.mxu0 0.0
        %1540 = vmatpush1.msra.mxu0 0.0
        %1541 = vmatprep.subr.mxu0 0.0
        %1542 = vmatpush1.msra.mxu0 0.0
        %1543 = vmatprep.subr.mxu0 0.0
        %1544 = vmatpush1.msra.mxu0 0.0
        %1545 = vmatprep.subr.mxu0 0.0
        %1546 = vmatpush1.msra.mxu0 0.0
        %1547 = vmatprep.subr.mxu0 0.0
        %1548 = vmatpush1.msra.mxu0 0.0
        %1549 = vmatprep.subr.mxu0 0.0
        %1550 = vmatpush1.msra.mxu0 0.0
        %1551 = vmatprep.subr.mxu0 0.0
        %1552 = vmatpush1.msra.mxu0 0.0
        %1553 = vmatprep.subr.mxu0 0.0
        %1554 = vmatpush1.msra.mxu0 0.0
        %1555 = vmatprep.subr.mxu0 0.0
        %1556 = vmatpush1.msra.mxu0 0.0
        %1557 = vmatprep.subr.mxu0 0.0
        %1558 = vmatpush1.msra.mxu0 0.0
        %1559 = vmatprep.subr.mxu0 0.0
        %1560 = vmatpush1.msra.mxu0 0.0
        %1561 = vmatprep.subr.mxu0 0.0
        %1562 = vmatpush1.msra.mxu0 0.0
        %1563 = vmatprep.subr.mxu0 0.0
        %1564 = vmatpush1.msra.mxu0 0.0
        %1565 = vmatprep.subr.mxu0 0.0
        %1566 = vmatpush1.msra.mxu0 0.0
        %1567 = vmatprep.subr.mxu0 0.0
        %1568 = vmatpush1.msra.mxu0 0.0
        %1569 = vmatprep.subr.mxu0 0.0
        %1570 = vmatpush1.msra.mxu0 0.0
        %1571 = vmatprep.subr.mxu0 0.0
        %1572 = vmatpush1.msra.mxu0 0.0
        %1573 = vmatprep.subr.mxu0 0.0
        %1574 = vmatpush1.msra.mxu0 0.0
        %1575 = vmatprep.subr.mxu0 0.0
        %1576 = vmatpush1.msra.mxu0 0.0
        %1577 = vmatprep.subr.mxu0 0.0
        %1578 = vmatpush1.msra.mxu0 0.0
        %1579 = vmatprep.subr.mxu0 0.0
        %1580 = vmatpush1.msra.mxu0 0.0
        %1581 = vmatprep.subr.mxu0 0.0
        %1582 = vmatpush1.msra.mxu0 0.0
        %1583 = vmatprep.subr.mxu0 0.0
        %1584 = vmatpush1.msra.mxu0 0.0
        %1585 = vmatprep.subr.mxu0 0.0
        %1586 = vmatpush1.msra.mxu0 0.0
        %1587 = vmatprep.subr.mxu0 0.0
        %1588 = vmatpush1.msra.mxu0 0.0
        %1589 = vmatprep.subr.mxu0 0.0
        %1590 = vmatpush1.msra.mxu0 0.0
        %1591 = vmatprep.subr.mxu0 0.0
        %1592 = vmatpush1.msra.mxu0 0.0
        %1593 = vmatprep.mubr.f32.mxu0 0.0
        %v1594 = vand.u32 %v1522, 4294901760
        %v1595 = vsub.f32 %v1522, %v1594
        %v1596 = vand.u32 %v1595, 4294901760
        %v1597 = vsub.f32 %v1595, %v1596
        %v1598 = vand.u32 %v1597, 4294901760
        %1599 = vmatmul.mubr.f32.gmra.mrb[0].mxu0 %v1598
        %v1600 = vpop.f32.mrb[0].mxu0
        %v1601 = vadd.f32 0.0, %v1600
        %v1602 = vpop.f32.mrb[0].mxu0
        %1603 = vmatprep.mubr.f32.mxu0 0.0
        %v1604 = vand.u32 %v1525, 4294901760
        %v1605 = vsub.f32 %v1525, %v1604
        %v1606 = vand.u32 %v1605, 4294901760
        %v1607 = vsub.f32 %v1605, %v1606
        %v1608 = vand.u32 %v1607, 4294901760
        %1609 = vmatmul.mubr.f32.gmra.mrb[0].mxu0 %v1608
        %v1610 = vpop.f32.mrb[0].mxu0
        %v1611 = vadd.f32 0.0, %v1610
        %v1612 = vpop.f32.mrb[0].mxu0
        %1613 = vdwg.mxu0
        %1614 = vmatprep.subr.mxu0 0.0
        %v1615 = vand.u32 %v1519, 4294901760
        %v1616 = vsub.f32 %v1519, %v1615
        %v1617 = vand.u32 %v1616, 4294901760
        %v1618 = vsub.f32 %v1616, %v1617
        %v1619 = vand.u32 %v1618, 4294901760
        %1620 = vmatpush1.msra.mxu0 %v1619
        %1621 = vmatprep.subr.mxu0 0.0
        %v1622 = vand.u32 %v1520, 4294901760
        %v1623 = vsub.f32 %v1520, %v1622
        %v1624 = vand.u32 %v1623, 4294901760
        %v1625 = vsub.f32 %v1623, %v1624
        %v1626 = vand.u32 %v1625, 4294901760
        %1627 = vmatpush1.msra.mxu0 %v1626
        %1628 = vmatprep.subr.mxu0 0.0
        %1629 = vmatpush1.msra.mxu0 0.0
        %1630 = vmatprep.subr.mxu0 0.0
        %1631 = vmatpush1.msra.mxu0 0.0
        %1632 = vmatprep.subr.mxu0 0.0
        %1633 = vmatpush1.msra.mxu0 0.0
        %1634 = vmatprep.subr.mxu0 0.0
        %1635 = vmatpush1.msra.mxu0 0.0
        %1636 = vmatprep.subr.mxu0 0.0
        %1637 = vmatpush1.msra.mxu0 0.0
        %1638 = vmatprep.subr.mxu0 0.0
        %1639 = vmatpush1.msra.mxu0 0.0
        %1640 = vmatprep.subr.mxu0 0.0
        %1641 = vmatpush1.msra.mxu0 0.0
        %1642 = vmatprep.subr.mxu0 0.0
        %1643 = vmatpush1.msra.mxu0 0.0
        %1644 = vmatprep.subr.mxu0 0.0
        %1645 = vmatpush1.msra.mxu0 0.0
        %1646 = vmatprep.subr.mxu0 0.0
        %1647 = vmatpush1.msra.mxu0 0.0
        %1648 = vmatprep.subr.mxu0 0.0
        %1649 = vmatpush1.msra.mxu0 0.0
        %1650 = vmatprep.subr.mxu0 0.0
        %1651 = vmatpush1.msra.mxu0 0.0
        %1652 = vmatprep.subr.mxu0 0.0
        %1653 = vmatpush1.msra.mxu0 0.0
        %1654 = vmatprep.subr.mxu0 0.0
        %1655 = vmatpush1.msra.mxu0 0.0
        %1656 = vmatprep.subr.mxu0 0.0
        %1657 = vmatpush1.msra.mxu0 0.0
        %1658 = vmatprep.subr.mxu0 0.0
        %1659 = vmatpush1.msra.mxu0 0.0
        %1660 = vmatprep.subr.mxu0 0.0
        %1661 = vmatpush1.msra.mxu0 0.0
        %1662 = vmatprep.subr.mxu0 0.0
        %1663 = vmatpush1.msra.mxu0 0.0
        %1664 = vmatprep.subr.mxu0 0.0
        %1665 = vmatpush1.msra.mxu0 0.0
        %1666 = vmatprep.subr.mxu0 0.0
        %1667 = vmatpush1.msra.mxu0 0.0
        %1668 = vmatprep.subr.mxu0 0.0
        %1669 = vmatpush1.msra.mxu0 0.0
        %1670 = vmatprep.subr.mxu0 0.0
        %1671 = vmatpush1.msra.mxu0 0.0
        %1672 = vmatprep.subr.mxu0 0.0
        %1673 = vmatpush1.msra.mxu0 0.0
        %1674 = vmatprep.subr.mxu0 0.0
        %1675 = vmatpush1.msra.mxu0 0.0
        %1676 = vmatprep.subr.mxu0 0.0
        %1677 = vmatpush1.msra.mxu0 0.0
        %1678 = vmatprep.subr.mxu0 0.0
        %1679 = vmatpush1.msra.mxu0 0.0
        %1680 = vmatprep.subr.mxu0 0.0
        %1681 = vmatpush1.msra.mxu0 0.0
        %1682 = vmatprep.subr.mxu0 0.0
        %1683 = vmatpush1.msra.mxu0 0.0
        %1684 = vmatprep.subr.mxu0 0.0
        %1685 = vmatpush1.msra.mxu0 0.0
        %1686 = vmatprep.subr.mxu0 0.0
        %1687 = vmatpush1.msra.mxu0 0.0
        %1688 = vmatprep.mubr.f32.mxu0 0.0
        %v1689 = vand.u32 %v1522, 4294901760
        %1690 = vmatmul.mubr.f32.gmra.mrb[0].mxu0 %v1689
        %v1691 = vpop.f32.mrb[0].mxu0
        %v1692 = vadd.f32 %v1601, %v1691
        %v1693 = vpop.f32.mrb[0].mxu0
        %1694 = vmatprep.mubr.f32.mxu0 0.0
        %v1695 = vand.u32 %v1525, 4294901760
        %1696 = vmatmul.mubr.f32.gmra.mrb[0].mxu0 %v1695
        %v1697 = vpop.f32.mrb[0].mxu0
        %v1698 = vadd.f32 %v1611, %v1697
        %v1699 = vpop.f32.mrb[0].mxu0
        %1700 = vdwg.mxu0
        %1701 = vmatprep.subr.mxu0 0.0
        %v1702 = vand.u32 %v1519, 4294901760
        %v1703 = vsub.f32 %v1519, %v1702
        %1704 = vmatpush1.msra.mxu0 %v1703
        %1705 = vmatprep.subr.mxu0 0.0
        %v1706 = vand.u32 %v1520, 4294901760
        %v1707 = vsub.f32 %v1520, %v1706
        %1708 = vmatpush1.msra.mxu0 %v1707
        %1709 = vmatprep.subr.mxu0 0.0
        %1710 = vmatpush1.msra.mxu0 0.0
        %1711 = vmatprep.subr.mxu0 0.0
        %1712 = vmatpush1.msra.mxu0 0.0
        %1713 = vmatprep.subr.mxu0 0.0
        %1714 = vmatpush1.msra.mxu0 0.0
        %1715 = vmatprep.subr.mxu0 0.0
        %1716 = vmatpush1.msra.mxu0 0.0
        %1717 = vmatprep.subr.mxu0 0.0
        %1718 = vmatpush1.msra.mxu0 0.0
        %1719 = vmatprep.subr.mxu0 0.0
        %1720 = vmatpush1.msra.mxu0 0.0
        %1721 = vmatprep.subr.mxu0 0.0
        %1722 = vmatpush1.msra.mxu0 0.0
        %1723 = vmatprep.subr.mxu0 0.0
        %1724 = vmatpush1.msra.mxu0 0.0
        %1725 = vmatprep.subr.mxu0 0.0
        %1726 = vmatpush1.msra.mxu0 0.0
        %1727 = vmatprep.subr.mxu0 0.0
        %1728 = vmatpush1.msra.mxu0 0.0
        %1729 = vmatprep.subr.mxu0 0.0
        %1730 = vmatpush1.msra.mxu0 0.0
        %1731 = vmatprep.subr.mxu0 0.0
        %1732 = vmatpush1.msra.mxu0 0.0
        %1733 = vmatprep.subr.mxu0 0.0
        %1734 = vmatpush1.msra.mxu0 0.0
        %1735 = vmatprep.subr.mxu0 0.0
        %1736 = vmatpush1.msra.mxu0 0.0
        %1737 = vmatprep.subr.mxu0 0.0
        %1738 = vmatpush1.msra.mxu0 0.0
        %1739 = vmatprep.subr.mxu0 0.0
        %1740 = vmatpush1.msra.mxu0 0.0
        %1741 = vmatprep.subr.mxu0 0.0
        %1742 = vmatpush1.msra.mxu0 0.0
        %1743 = vmatprep.subr.mxu0 0.0
        %1744 = vmatpush1.msra.mxu0 0.0
        %1745 = vmatprep.subr.mxu0 0.0
        %1746 = vmatpush1.msra.mxu0 0.0
        %1747 = vmatprep.subr.mxu0 0.0
        %1748 = vmatpush1.msra.mxu0 0.0
        %1749 = vmatprep.subr.mxu0 0.0
        %1750 = vmatpush1.msra.mxu0 0.0
        %1751 = vmatprep.subr.mxu0 0.0
        %1752 = vmatpush1.msra.mxu0 0.0
        %1753 = vmatprep.subr.mxu0 0.0
        %1754 = vmatpush1.msra.mxu0 0.0
        %1755 = vmatprep.subr.mxu0 0.0
        %1756 = vmatpush1.msra.mxu0 0.0
        %1757 = vmatprep.subr.mxu0 0.0
        %1758 = vmatpush1.msra.mxu0 0.0
        %1759 = vmatprep.subr.mxu0 0.0
        %1760 = vmatpush1.msra.mxu0 0.0
        %1761 = vmatprep.subr.mxu0 0.0
        %1762 = vmatpush1.msra.mxu0 0.0
        %1763 = vmatprep.subr.mxu0 0.0
        %1764 = vmatpush1.msra.mxu0 0.0
        %1765 = vmatprep.subr.mxu0 0.0
        %1766 = vmatpush1.msra.mxu0 0.0
        %1767 = vmatprep.subr.mxu0 0.0
        %1768 = vmatpush1.msra.mxu0 0.0
        %1769 = vmatprep.mubr.f32.mxu0 0.0
        %v1770 = vand.u32 %v1522, 4294901760
        %v1771 = vsub.f32 %v1522, %v1770
        %1772 = vmatmul.mubr.f32.gmra.mrb[0].mxu0 %v1771
        %v1773 = vpop.f32.mrb[0].mxu0
        %v1774 = vadd.f32 %v1692, %v1773
        %v1775 = vpop.f32.mrb[0].mxu0
        %1776 = vmatprep.mubr.f32.mxu0 0.0
        %v1777 = vand.u32 %v1525, 4294901760
        %v1778 = vsub.f32 %v1525, %v1777
        %1779 = vmatmul.mubr.f32.gmra.mrb[0].mxu0 %v1778
        %v1780 = vpop.f32.mrb[0].mxu0
        %v1781 = vadd.f32 %v1698, %v1780
        %v1782 = vpop.f32.mrb[0].mxu0
        %1783 = vdwg.mxu0
        %1784 = vmatprep.subr.mxu0 0.0
        %v1785 = vand.u32 %v1519, 4294901760
        %1786 = vmatpush1.msra.mxu0 %v1785
        %1787 = vmatprep.subr.mxu0 0.0
        %v1788 = vand.u32 %v1520, 4294901760
        %1789 = vmatpush1.msra.mxu0 %v1788
        %1790 = vmatprep.subr.mxu0 0.0
        %1791 = vmatpush1.msra.mxu0 0.0
        %1792 = vmatprep.subr.mxu0 0.0
        %1793 = vmatpush1.msra.mxu0 0.0
        %1794 = vmatprep.subr.mxu0 0.0
        %1795 = vmatpush1.msra.mxu0 0.0
        %1796 = vmatprep.subr.mxu0 0.0
        %1797 = vmatpush1.msra.mxu0 0.0
        %1798 = vmatprep.subr.mxu0 0.0
        %1799 = vmatpush1.msra.mxu0 0.0
        %1800 = vmatprep.subr.mxu0 0.0
        %1801 = vmatpush1.msra.mxu0 0.0
        %1802 = vmatprep.subr.mxu0 0.0
        %1803 = vmatpush1.msra.mxu0 0.0
        %1804 = vmatprep.subr.mxu0 0.0
        %1805 = vmatpush1.msra.mxu0 0.0
        %1806 = vmatprep.subr.mxu0 0.0
        %1807 = vmatpush1.msra.mxu0 0.0
        %1808 = vmatprep.subr.mxu0 0.0
        %1809 = vmatpush1.msra.mxu0 0.0
        %1810 = vmatprep.subr.mxu0 0.0
        %1811 = vmatpush1.msra.mxu0 0.0
        %1812 = vmatprep.subr.mxu0 0.0
        %1813 = vmatpush1.msra.mxu0 0.0
        %1814 = vmatprep.subr.mxu0 0.0
        %1815 = vmatpush1.msra.mxu0 0.0
        %1816 = vmatprep.subr.mxu0 0.0
        %1817 = vmatpush1.msra.mxu0 0.0
        %1818 = vmatprep.subr.mxu0 0.0
        %1819 = vmatpush1.msra.mxu0 0.0
        %1820 = vmatprep.subr.mxu0 0.0
        %1821 = vmatpush1.msra.mxu0 0.0
        %1822 = vmatprep.subr.mxu0 0.0
        %1823 = vmatpush1.msra.mxu0 0.0
        %1824 = vmatprep.subr.mxu0 0.0
        %1825 = vmatpush1.msra.mxu0 0.0
        %1826 = vmatprep.subr.mxu0 0.0
        %1827 = vmatpush1.msra.mxu0 0.0
        %1828 = vmatprep.subr.mxu0 0.0
        %1829 = vmatpush1.msra.mxu0 0.0
        %1830 = vmatprep.subr.mxu0 0.0
        %1831 = vmatpush1.msra.mxu0 0.0
        %1832 = vmatprep.subr.mxu0 0.0
        %1833 = vmatpush1.msra.mxu0 0.0
        %1834 = vmatprep.subr.mxu0 0.0
        %1835 = vmatpush1.msra.mxu0 0.0
        %1836 = vmatprep.subr.mxu0 0.0
        %1837 = vmatpush1.msra.mxu0 0.0
        %1838 = vmatprep.subr.mxu0 0.0
        %1839 = vmatpush1.msra.mxu0 0.0
        %1840 = vmatprep.subr.mxu0 0.0
        %1841 = vmatpush1.msra.mxu0 0.0
        %1842 = vmatprep.subr.mxu0 0.0
        %1843 = vmatpush1.msra.mxu0 0.0
        %1844 = vmatprep.subr.mxu0 0.0
        %1845 = vmatpush1.msra.mxu0 0.0
        %1846 = vmatprep.subr.mxu0 0.0
        %1847 = vmatpush1.msra.mxu0 0.0
        %1848 = vmatprep.subr.mxu0 0.0
        %1849 = vmatpush1.msra.mxu0 0.0
        %1850 = vmatprep.mubr.f32.mxu0 0.0
        %v1851 = vand.u32 %v1522, 4294901760
        %v1852 = vsub.f32 %v1522, %v1851
        %v1853 = vand.u32 %v1852, 4294901760
        %1854 = vmatmul.mubr.f32.gmra.mrb[0].mxu0 %v1853
        %v1855 = vpop.f32.mrb[0].mxu0
        %v1856 = vadd.f32 %v1774, %v1855
        %v1857 = vpop.f32.mrb[0].mxu0
        %1858 = vmatprep.mubr.f32.mxu0 0.0
        %v1859 = vand.u32 %v1525, 4294901760
        %v1860 = vsub.f32 %v1525, %v1859
        %v1861 = vand.u32 %v1860, 4294901760
        %1862 = vmatmul.mubr.f32.gmra.mrb[0].mxu0 %v1861
        %v1863 = vpop.f32.mrb[0].mxu0
        %v1864 = vadd.f32 %v1781, %v1863
        %v1865 = vpop.f32.mrb[0].mxu0
        %1866 = vdwg.mxu0
        %1867 = vmatprep.subr.mxu0 0.0
        %v1868 = vand.u32 %v1519, 4294901760
        %v1869 = vsub.f32 %v1519, %v1868
        %v1870 = vand.u32 %v1869, 4294901760
        %1871 = vmatpush1.msra.mxu0 %v1870
        %1872 = vmatprep.subr.mxu0 0.0
        %v1873 = vand.u32 %v1520, 4294901760
        %v1874 = vsub.f32 %v1520, %v1873
        %v1875 = vand.u32 %v1874, 4294901760
        %1876 = vmatpush1.msra.mxu0 %v1875
        %1877 = vmatprep.subr.mxu0 0.0
        %1878 = vmatpush1.msra.mxu0 0.0
        %1879 = vmatprep.subr.mxu0 0.0
        %1880 = vmatpush1.msra.mxu0 0.0
        %1881 = vmatprep.subr.mxu0 0.0
        %1882 = vmatpush1.msra.mxu0 0.0
        %1883 = vmatprep.subr.mxu0 0.0
        %1884 = vmatpush1.msra.mxu0 0.0
        %1885 = vmatprep.subr.mxu0 0.0
        %1886 = vmatpush1.msra.mxu0 0.0
        %1887 = vmatprep.subr.mxu0 0.0
        %1888 = vmatpush1.msra.mxu0 0.0
        %1889 = vmatprep.subr.mxu0 0.0
        %1890 = vmatpush1.msra.mxu0 0.0
        %1891 = vmatprep.subr.mxu0 0.0
        %1892 = vmatpush1.msra.mxu0 0.0
        %1893 = vmatprep.subr.mxu0 0.0
        %1894 = vmatpush1.msra.mxu0 0.0
        %1895 = vmatprep.subr.mxu0 0.0
        %1896 = vmatpush1.msra.mxu0 0.0
        %1897 = vmatprep.subr.mxu0 0.0
        %1898 = vmatpush1.msra.mxu0 0.0
        %1899 = vmatprep.subr.mxu0 0.0
        %1900 = vmatpush1.msra.mxu0 0.0
        %1901 = vmatprep.subr.mxu0 0.0
        %1902 = vmatpush1.msra.mxu0 0.0
        %1903 = vmatprep.subr.mxu0 0.0
        %1904 = vmatpush1.msra.mxu0 0.0
        %1905 = vmatprep.subr.mxu0 0.0
        %1906 = vmatpush1.msra.mxu0 0.0
        %1907 = vmatprep.subr.mxu0 0.0
        %1908 = vmatpush1.msra.mxu0 0.0
        %1909 = vmatprep.subr.mxu0 0.0
        %1910 = vmatpush1.msra.mxu0 0.0
        %1911 = vmatprep.subr.mxu0 0.0
        %1912 = vmatpush1.msra.mxu0 0.0
        %1913 = vmatprep.subr.mxu0 0.0
        %1914 = vmatpush1.msra.mxu0 0.0
        %1915 = vmatprep.subr.mxu0 0.0
        %1916 = vmatpush1.msra.mxu0 0.0
        %1917 = vmatprep.subr.mxu0 0.0
        %1918 = vmatpush1.msra.mxu0 0.0
        %1919 = vmatprep.subr.mxu0 0.0
        %1920 = vmatpush1.msra.mxu0 0.0
        %1921 = vmatprep.subr.mxu0 0.0
        %1922 = vmatpush1.msra.mxu0 0.0
        %1923 = vmatprep.subr.mxu0 0.0
        %1924 = vmatpush1.msra.mxu0 0.0
        %1925 = vmatprep.subr.mxu0 0.0
        %1926 = vmatpush1.msra.mxu0 0.0
        %1927 = vmatprep.subr.mxu0 0.0
        %1928 = vmatpush1.msra.mxu0 0.0
        %1929 = vmatprep.subr.mxu0 0.0
        %1930 = vmatpush1.msra.mxu0 0.0
        %1931 = vmatprep.subr.mxu0 0.0
        %1932 = vmatpush1.msra.mxu0 0.0
        %1933 = vmatprep.subr.mxu0 0.0
        %1934 = vmatpush1.msra.mxu0 0.0
        %1935 = vmatprep.subr.mxu0 0.0
        %1936 = vmatpush1.msra.mxu0 0.0
        %1937 = vmatprep.mubr.f32.mxu0 0.0
        %v1938 = vand.u32 %v1522, 4294901760
        %1939 = vmatmul.mubr.f32.gmra.mrb[0].mxu0 %v1938
        %v1940 = vpop.f32.mrb[0].mxu0
        %v1941 = vadd.f32 %v1856, %v1940
        %v1942 = vpop.f32.mrb[0].mxu0
        %1943 = vmatprep.mubr.f32.mxu0 0.0
        %v1944 = vand.u32 %v1525, 4294901760
        %1945 = vmatmul.mubr.f32.gmra.mrb[0].mxu0 %v1944
        %v1946 = vpop.f32.mrb[0].mxu0
        %v1947 = vadd.f32 %v1864, %v1946
        %v1948 = vpop.f32.mrb[0].mxu0
        %1949 = vdwg.mxu0
        %1950 = vmatprep.subr.mxu0 0.0
        %v1951 = vand.u32 %v1519, 4294901760
        %1952 = vmatpush1.msra.mxu0 %v1951
        %1953 = vmatprep.subr.mxu0 0.0
        %v1954 = vand.u32 %v1520, 4294901760
        %1955 = vmatpush1.msra.mxu0 %v1954
        %1956 = vmatprep.subr.mxu0 0.0
        %1957 = vmatpush1.msra.mxu0 0.0
        %1958 = vmatprep.subr.mxu0 0.0
        %1959 = vmatpush1.msra.mxu0 0.0
        %1960 = vmatprep.subr.mxu0 0.0
        %1961 = vmatpush1.msra.mxu0 0.0
        %1962 = vmatprep.subr.mxu0 0.0
        %1963 = vmatpush1.msra.mxu0 0.0
        %1964 = vmatprep.subr.mxu0 0.0
        %1965 = vmatpush1.msra.mxu0 0.0
        %1966 = vmatprep.subr.mxu0 0.0
        %1967 = vmatpush1.msra.mxu0 0.0
        %1968 = vmatprep.subr.mxu0 0.0
        %1969 = vmatpush1.msra.mxu0 0.0
        %1970 = vmatprep.subr.mxu0 0.0
        %1971 = vmatpush1.msra.mxu0 0.0
        %1972 = vmatprep.subr.mxu0 0.0
        %1973 = vmatpush1.msra.mxu0 0.0
        %1974 = vmatprep.subr.mxu0 0.0
        %1975 = vmatpush1.msra.mxu0 0.0
        %1976 = vmatprep.subr.mxu0 0.0
        %1977 = vmatpush1.msra.mxu0 0.0
        %1978 = vmatprep.subr.mxu0 0.0
        %1979 = vmatpush1.msra.mxu0 0.0
        %1980 = vmatprep.subr.mxu0 0.0
        %1981 = vmatpush1.msra.mxu0 0.0
        %1982 = vmatprep.subr.mxu0 0.0
        %1983 = vmatpush1.msra.mxu0 0.0
        %1984 = vmatprep.subr.mxu0 0.0
        %1985 = vmatpush1.msra.mxu0 0.0
        %1986 = vmatprep.subr.mxu0 0.0
        %1987 = vmatpush1.msra.mxu0 0.0
        %1988 = vmatprep.subr.mxu0 0.0
        %1989 = vmatpush1.msra.mxu0 0.0
        %1990 = vmatprep.subr.mxu0 0.0
        %1991 = vmatpush1.msra.mxu0 0.0
        %1992 = vmatprep.subr.mxu0 0.0
        %1993 = vmatpush1.msra.mxu0 0.0
        %1994 = vmatprep.subr.mxu0 0.0
        %1995 = vmatpush1.msra.mxu0 0.0
        %1996 = vmatprep.subr.mxu0 0.0
        %1997 = vmatpush1.msra.mxu0 0.0
        %1998 = vmatprep.subr.mxu0 0.0
        %1999 = vmatpush1.msra.mxu0 0.0
        %2000 = vmatprep.subr.mxu0 0.0
        %2001 = vmatpush1.msra.mxu0 0.0
        %2002 = vmatprep.subr.mxu0 0.0
        %2003 = vmatpush1.msra.mxu0 0.0
        %2004 = vmatprep.subr.mxu0 0.0
        %2005 = vmatpush1.msra.mxu0 0.0
        %2006 = vmatprep.subr.mxu0 0.0
        %2007 = vmatpush1.msra.mxu0 0.0
        %2008 = vmatprep.subr.mxu0 0.0
        %2009 = vmatpush1.msra.mxu0 0.0
        %2010 = vmatprep.subr.mxu0 0.0
        %2011 = vmatpush1.msra.mxu0 0.0
        %2012 = vmatprep.subr.mxu0 0.0
        %2013 = vmatpush1.msra.mxu0 0.0
        %2014 = vmatprep.subr.mxu0 0.0
        %2015 = vmatpush1.msra.mxu0 0.0
        %2016 = vmatprep.mubr.f32.mxu0 0.0
        %v2017 = vand.u32 %v1522, 4294901760
        %2018 = vmatmul.mubr.f32.gmra.mrb[0].mxu0 %v2017
        %v2019 = vpop.f32.mrb[0].mxu0
        %v2020 = vadd.f32 %v1941, %v2019
        %v2021 = vpop.f32.mrb[0].mxu0
        %2022 = vmatprep.mubr.f32.mxu0 0.0
        %v2023 = vand.u32 %v1525, 4294901760
        %2024 = vmatmul.mubr.f32.gmra.mrb[0].mxu0 %v2023
        %v2025 = vpop.f32.mrb[0].mxu0
        %v2026 = vadd.f32 %v1947, %v2025
        %v2027 = vpop.f32.mrb[0].mxu0
        %2028 = vdwg.mxu0
        %v2030 = vsel %vm499, %v2020, 0
        %v2033 = vsel %vm499, %v2026, 0
        %2035 = vmatprep.subr.mxu0 0.0
        %v2036 = vand.u32 %v488, 4294901760
        %2037 = vmatpush1.msra.mxu0 %v2036
        %2038 = vmatprep.subr.mxu0 0.0
        %v2039 = vand.u32 %v489, 4294901760
        %2040 = vmatpush1.msra.mxu0 %v2039
        %2041 = vmatprep.subr.mxu0 0.0
        %2042 = vmatpush1.msra.mxu0 0.0
        %2043 = vmatprep.subr.mxu0 0.0
        %2044 = vmatpush1.msra.mxu0 0.0
        %2045 = vmatprep.subr.mxu0 0.0
        %2046 = vmatpush1.msra.mxu0 0.0
        %2047 = vmatprep.subr.mxu0 0.0
        %2048 = vmatpush1.msra.mxu0 0.0
        %2049 = vmatprep.subr.mxu0 0.0
        %2050 = vmatpush1.msra.mxu0 0.0
        %2051 = vmatprep.subr.mxu0 0.0
        %2052 = vmatpush1.msra.mxu0 0.0
        %2053 = vmatprep.subr.mxu0 0.0
        %2054 = vmatpush1.msra.mxu0 0.0
        %2055 = vmatprep.subr.mxu0 0.0
        %2056 = vmatpush1.msra.mxu0 0.0
        %2057 = vmatprep.subr.mxu0 0.0
        %2058 = vmatpush1.msra.mxu0 0.0
        %2059 = vmatprep.subr.mxu0 0.0
        %2060 = vmatpush1.msra.mxu0 0.0
        %2061 = vmatprep.subr.mxu0 0.0
        %2062 = vmatpush1.msra.mxu0 0.0
        %2063 = vmatprep.subr.mxu0 0.0
        %2064 = vmatpush1.msra.mxu0 0.0
        %2065 = vmatprep.subr.mxu0 0.0
        %2066 = vmatpush1.msra.mxu0 0.0
        %2067 = vmatprep.subr.mxu0 0.0
        %2068 = vmatpush1.msra.mxu0 0.0
        %2069 = vmatprep.subr.mxu0 0.0
        %2070 = vmatpush1.msra.mxu0 0.0
        %2071 = vmatprep.subr.mxu0 0.0
        %2072 = vmatpush1.msra.mxu0 0.0
        %2073 = vmatprep.subr.mxu0 0.0
        %2074 = vmatpush1.msra.mxu0 0.0
        %2075 = vmatprep.subr.mxu0 0.0
        %2076 = vmatpush1.msra.mxu0 0.0
        %2077 = vmatprep.subr.mxu0 0.0
        %2078 = vmatpush1.msra.mxu0 0.0
        %2079 = vmatprep.subr.mxu0 0.0
        %2080 = vmatpush1.msra.mxu0 0.0
        %2081 = vmatprep.subr.mxu0 0.0
        %2082 = vmatpush1.msra.mxu0 0.0
        %2083 = vmatprep.subr.mxu0 0.0
        %2084 = vmatpush1.msra.mxu0 0.0
        %2085 = vmatprep.subr.mxu0 0.0
        %2086 = vmatpush1.msra.mxu0 0.0
        %2087 = vmatprep.subr.mxu0 0.0
        %2088 = vmatpush1.msra.mxu0 0.0
        %2089 = vmatprep.subr.mxu0 0.0
        %2090 = vmatpush1.msra.mxu0 0.0
        %2091 = vmatprep.subr.mxu0 0.0
        %2092 = vmatpush1.msra.mxu0 0.0
        %2093 = vmatprep.subr.mxu0 0.0
        %2094 = vmatpush1.msra.mxu0 0.0
        %2095 = vmatprep.subr.mxu0 0.0
        %2096 = vmatpush1.msra.mxu0 0.0
        %2097 = vmatprep.subr.mxu0 0.0
        %2098 = vmatpush1.msra.mxu0 0.0
        %2099 = vmatprep.subr.mxu0 0.0
        %2100 = vmatpush1.msra.mxu0 0.0
        %2101 = vmatprep.mubr.f32.mxu0 0.0
        %v2102 = vand.u32 %v2030, 4294901760
        %v2103 = vsub.f32 %v2030, %v2102
        %v2104 = vand.u32 %v2103, 4294901760
        %v2105 = vsub.f32 %v2103, %v2104
        %v2106 = vand.u32 %v2105, 4294901760
        %2107 = vmatmul.mubr.f32.gmra.mrb[0].mxu0 %v2106
        %v2108 = vpop.f32.mrb[0].mxu0
        %v2109 = vadd.f32 0.0, %v2108
        %v2110 = vpop.f32.mrb[0].mxu0
        %2111 = vmatprep.mubr.f32.mxu0 0.0
        %v2112 = vand.u32 %v2033, 4294901760
        %v2113 = vsub.f32 %v2033, %v2112
        %v2114 = vand.u32 %v2113, 4294901760
        %v2115 = vsub.f32 %v2113, %v2114
        %v2116 = vand.u32 %v2115, 4294901760
        %2117 = vmatmul.mubr.f32.gmra.mrb[0].mxu0 %v2116
        %v2118 = vpop.f32.mrb[0].mxu0
        %v2119 = vadd.f32 0.0, %v2118
        %v2120 = vpop.f32.mrb[0].mxu0
        %2121 = vdwg.mxu0
        %2122 = vmatprep.subr.mxu0 0.0
        %v2123 = vand.u32 %v488, 4294901760
        %v2124 = vsub.f32 %v488, %v2123
        %v2125 = vand.u32 %v2124, 4294901760
        %v2126 = vsub.f32 %v2124, %v2125
        %v2127 = vand.u32 %v2126, 4294901760
        %2128 = vmatpush1.msra.mxu0 %v2127
        %2129 = vmatprep.subr.mxu0 0.0
        %v2130 = vand.u32 %v489, 4294901760
        %v2131 = vsub.f32 %v489, %v2130
        %v2132 = vand.u32 %v2131, 4294901760
        %v2133 = vsub.f32 %v2131, %v2132
        %v2134 = vand.u32 %v2133, 4294901760
        %2135 = vmatpush1.msra.mxu0 %v2134
        %2136 = vmatprep.subr.mxu0 0.0
        %2137 = vmatpush1.msra.mxu0 0.0
        %2138 = vmatprep.subr.mxu0 0.0
        %2139 = vmatpush1.msra.mxu0 0.0
        %2140 = vmatprep.subr.mxu0 0.0
        %2141 = vmatpush1.msra.mxu0 0.0
        %2142 = vmatprep.subr.mxu0 0.0
        %2143 = vmatpush1.msra.mxu0 0.0
        %2144 = vmatprep.subr.mxu0 0.0
        %2145 = vmatpush1.msra.mxu0 0.0
        %2146 = vmatprep.subr.mxu0 0.0
        %2147 = vmatpush1.msra.mxu0 0.0
        %2148 = vmatprep.subr.mxu0 0.0
        %2149 = vmatpush1.msra.mxu0 0.0
        %2150 = vmatprep.subr.mxu0 0.0
        %2151 = vmatpush1.msra.mxu0 0.0
        %2152 = vmatprep.subr.mxu0 0.0
        %2153 = vmatpush1.msra.mxu0 0.0
        %2154 = vmatprep.subr.mxu0 0.0
        %2155 = vmatpush1.msra.mxu0 0.0
        %2156 = vmatprep.subr.mxu0 0.0
        %2157 = vmatpush1.msra.mxu0 0.0
        %2158 = vmatprep.subr.mxu0 0.0
        %2159 = vmatpush1.msra.mxu0 0.0
        %2160 = vmatprep.subr.mxu0 0.0
        %2161 = vmatpush1.msra.mxu0 0.0
        %2162 = vmatprep.subr.mxu0 0.0
        %2163 = vmatpush1.msra.mxu0 0.0
        %2164 = vmatprep.subr.mxu0 0.0
        %2165 = vmatpush1.msra.mxu0 0.0
        %2166 = vmatprep.subr.mxu0 0.0
        %2167 = vmatpush1.msra.mxu0 0.0
        %2168 = vmatprep.subr.mxu0 0.0
        %2169 = vmatpush1.msra.mxu0 0.0
        %2170 = vmatprep.subr.mxu0 0.0
        %2171 = vmatpush1.msra.mxu0 0.0
        %2172 = vmatprep.subr.mxu0 0.0
        %2173 = vmatpush1.msra.mxu0 0.0
        %2174 = vmatprep.subr.mxu0 0.0
        %2175 = vmatpush1.msra.mxu0 0.0
        %2176 = vmatprep.subr.mxu0 0.0
        %2177 = vmatpush1.msra.mxu0 0.0
        %2178 = vmatprep.subr.mxu0 0.0
        %2179 = vmatpush1.msra.mxu0 0.0
        %2180 = vmatprep.subr.mxu0 0.0
        %2181 = vmatpush1.msra.mxu0 0.0
        %2182 = vmatprep.subr.mxu0 0.0
        %2183 = vmatpush1.msra.mxu0 0.0
        %2184 = vmatprep.subr.mxu0 0.0
        %2185 = vmatpush1.msra.mxu0 0.0
        %2186 = vmatprep.subr.mxu0 0.0
        %2187 = vmatpush1.msra.mxu0 0.0
        %2188 = vmatprep.subr.mxu0 0.0
        %2189 = vmatpush1.msra.mxu0 0.0
        %2190 = vmatprep.subr.mxu0 0.0
        %2191 = vmatpush1.msra.mxu0 0.0
        %2192 = vmatprep.subr.mxu0 0.0
        %2193 = vmatpush1.msra.mxu0 0.0
        %2194 = vmatprep.subr.mxu0 0.0
        %2195 = vmatpush1.msra.mxu0 0.0
        %2196 = vmatprep.mubr.f32.mxu0 0.0
        %v2197 = vand.u32 %v2030, 4294901760
        %2198 = vmatmul.mubr.f32.gmra.mrb[0].mxu0 %v2197
        %v2199 = vpop.f32.mrb[0].mxu0
        %v2200 = vadd.f32 %v2109, %v2199
        %v2201 = vpop.f32.mrb[0].mxu0
        %2202 = vmatprep.mubr.f32.mxu0 0.0
        %v2203 = vand.u32 %v2033, 4294901760
        %2204 = vmatmul.mubr.f32.gmra.mrb[0].mxu0 %v2203
        %v2205 = vpop.f32.mrb[0].mxu0
        %v2206 = vadd.f32 %v2119, %v2205
        %v2207 = vpop.f32.mrb[0].mxu0
        %2208 = vdwg.mxu0
        %2209 = vmatprep.subr.mxu0 0.0
        %v2210 = vand.u32 %v488, 4294901760
        %v2211 = vsub.f32 %v488, %v2210
        %2212 = vmatpush1.msra.mxu0 %v2211
        %2213 = vmatprep.subr.mxu0 0.0
        %v2214 = vand.u32 %v489, 4294901760
        %v2215 = vsub.f32 %v489, %v2214
        %2216 = vmatpush1.msra.mxu0 %v2215
        %2217 = vmatprep.subr.mxu0 0.0
        %2218 = vmatpush1.msra.mxu0 0.0
        %2219 = vmatprep.subr.mxu0 0.0
        %2220 = vmatpush1.msra.mxu0 0.0
        %2221 = vmatprep.subr.mxu0 0.0
        %2222 = vmatpush1.msra.mxu0 0.0
        %2223 = vmatprep.subr.mxu0 0.0
        %2224 = vmatpush1.msra.mxu0 0.0
        %2225 = vmatprep.subr.mxu0 0.0
        %2226 = vmatpush1.msra.mxu0 0.0
        %2227 = vmatprep.subr.mxu0 0.0
        %2228 = vmatpush1.msra.mxu0 0.0
        %2229 = vmatprep.subr.mxu0 0.0
        %2230 = vmatpush1.msra.mxu0 0.0
        %2231 = vmatprep.subr.mxu0 0.0
        %2232 = vmatpush1.msra.mxu0 0.0
        %2233 = vmatprep.subr.mxu0 0.0
        %2234 = vmatpush1.msra.mxu0 0.0
        %2235 = vmatprep.subr.mxu0 0.0
        %2236 = vmatpush1.msra.mxu0 0.0
        %2237 = vmatprep.subr.mxu0 0.0
        %2238 = vmatpush1.msra.mxu0 0.0
        %2239 = vmatprep.subr.mxu0 0.0
        %2240 = vmatpush1.msra.mxu0 0.0
        %2241 = vmatprep.subr.mxu0 0.0
        %2242 = vmatpush1.msra.mxu0 0.0
        %2243 = vmatprep.subr.mxu0 0.0
        %2244 = vmatpush1.msra.mxu0 0.0
        %2245 = vmatprep.subr.mxu0 0.0
        %2246 = vmatpush1.msra.mxu0 0.0
        %2247 = vmatprep.subr.mxu0 0.0
        %2248 = vmatpush1.msra.mxu0 0.0
        %2249 = vmatprep.subr.mxu0 0.0
        %2250 = vmatpush1.msra.mxu0 0.0
        %2251 = vmatprep.subr.mxu0 0.0
        %2252 = vmatpush1.msra.mxu0 0.0
        %2253 = vmatprep.subr.mxu0 0.0
        %2254 = vmatpush1.msra.mxu0 0.0
        %2255 = vmatprep.subr.mxu0 0.0
        %2256 = vmatpush1.msra.mxu0 0.0
        %2257 = vmatprep.subr.mxu0 0.0
        %2258 = vmatpush1.msra.mxu0 0.0
        %2259 = vmatprep.subr.mxu0 0.0
        %2260 = vmatpush1.msra.mxu0 0.0
        %2261 = vmatprep.subr.mxu0 0.0
        %2262 = vmatpush1.msra.mxu0 0.0
        %2263 = vmatprep.subr.mxu0 0.0
        %2264 = vmatpush1.msra.mxu0 0.0
        %2265 = vmatprep.subr.mxu0 0.0
        %2266 = vmatpush1.msra.mxu0 0.0
        %2267 = vmatprep.subr.mxu0 0.0
        %2268 = vmatpush1.msra.mxu0 0.0
        %2269 = vmatprep.subr.mxu0 0.0
        %2270 = vmatpush1.msra.mxu0 0.0
        %2271 = vmatprep.subr.mxu0 0.0
        %2272 = vmatpush1.msra.mxu0 0.0
        %2273 = vmatprep.subr.mxu0 0.0
        %2274 = vmatpush1.msra.mxu0 0.0
        %2275 = vmatprep.subr.mxu0 0.0
        %2276 = vmatpush1.msra.mxu0 0.0
        %2277 = vmatprep.mubr.f32.mxu0 0.0
        %v2278 = vand.u32 %v2030, 4294901760
        %v2279 = vsub.f32 %v2030, %v2278
        %2280 = vmatmul.mubr.f32.gmra.mrb[0].mxu0 %v2279
        %v2281 = vpop.f32.mrb[0].mxu0
        %v2282 = vadd.f32 %v2200, %v2281
        %v2283 = vpop.f32.mrb[0].mxu0
        %2284 = vmatprep.mubr.f32.mxu0 0.0
        %v2285 = vand.u32 %v2033, 4294901760
        %v2286 = vsub.f32 %v2033, %v2285
        %2287 = vmatmul.mubr.f32.gmra.mrb[0].mxu0 %v2286
        %v2288 = vpop.f32.mrb[0].mxu0
        %v2289 = vadd.f32 %v2206, %v2288
        %v2290 = vpop.f32.mrb[0].mxu0
        %2291 = vdwg.mxu0
        %2292 = vmatprep.subr.mxu0 0.0
        %v2293 = vand.u32 %v488, 4294901760
        %2294 = vmatpush1.msra.mxu0 %v2293
        %2295 = vmatprep.subr.mxu0 0.0
        %v2296 = vand.u32 %v489, 4294901760
        %2297 = vmatpush1.msra.mxu0 %v2296
        %2298 = vmatprep.subr.mxu0 0.0
        %2299 = vmatpush1.msra.mxu0 0.0
        %2300 = vmatprep.subr.mxu0 0.0
        %2301 = vmatpush1.msra.mxu0 0.0
        %2302 = vmatprep.subr.mxu0 0.0
        %2303 = vmatpush1.msra.mxu0 0.0
        %2304 = vmatprep.subr.mxu0 0.0
        %2305 = vmatpush1.msra.mxu0 0.0
        %2306 = vmatprep.subr.mxu0 0.0
        %2307 = vmatpush1.msra.mxu0 0.0
        %2308 = vmatprep.subr.mxu0 0.0
        %2309 = vmatpush1.msra.mxu0 0.0
        %2310 = vmatprep.subr.mxu0 0.0
        %2311 = vmatpush1.msra.mxu0 0.0
        %2312 = vmatprep.subr.mxu0 0.0
        %2313 = vmatpush1.msra.mxu0 0.0
        %2314 = vmatprep.subr.mxu0 0.0
        %2315 = vmatpush1.msra.mxu0 0.0
        %2316 = vmatprep.subr.mxu0 0.0
        %2317 = vmatpush1.msra.mxu0 0.0
        %2318 = vmatprep.subr.mxu0 0.0
        %2319 = vmatpush1.msra.mxu0 0.0
        %2320 = vmatprep.subr.mxu0 0.0
        %2321 = vmatpush1.msra.mxu0 0.0
        %2322 = vmatprep.subr.mxu0 0.0
        %2323 = vmatpush1.msra.mxu0 0.0
        %2324 = vmatprep.subr.mxu0 0.0
        %2325 = vmatpush1.msra.mxu0 0.0
        %2326 = vmatprep.subr.mxu0 0.0
        %2327 = vmatpush1.msra.mxu0 0.0
        %2328 = vmatprep.subr.mxu0 0.0
        %2329 = vmatpush1.msra.mxu0 0.0
        %2330 = vmatprep.subr.mxu0 0.0
        %2331 = vmatpush1.msra.mxu0 0.0
        %2332 = vmatprep.subr.mxu0 0.0
        %2333 = vmatpush1.msra.mxu0 0.0
        %2334 = vmatprep.subr.mxu0 0.0
        %2335 = vmatpush1.msra.mxu0 0.0
        %2336 = vmatprep.subr.mxu0 0.0
        %2337 = vmatpush1.msra.mxu0 0.0
        %2338 = vmatprep.subr.mxu0 0.0
        %2339 = vmatpush1.msra.mxu0 0.0
        %2340 = vmatprep.subr.mxu0 0.0
        %2341 = vmatpush1.msra.mxu0 0.0
        %2342 = vmatprep.subr.mxu0 0.0
        %2343 = vmatpush1.msra.mxu0 0.0
        %2344 = vmatprep.subr.mxu0 0.0
        %2345 = vmatpush1.msra.mxu0 0.0
        %2346 = vmatprep.subr.mxu0 0.0
        %2347 = vmatpush1.msra.mxu0 0.0
        %2348 = vmatprep.subr.mxu0 0.0
        %2349 = vmatpush1.msra.mxu0 0.0
        %2350 = vmatprep.subr.mxu0 0.0
        %2351 = vmatpush1.msra.mxu0 0.0
        %2352 = vmatprep.subr.mxu0 0.0
        %2353 = vmatpush1.msra.mxu0 0.0
        %2354 = vmatprep.subr.mxu0 0.0
        %2355 = vmatpush1.msra.mxu0 0.0
        %2356 = vmatprep.subr.mxu0 0.0
        %2357 = vmatpush1.msra.mxu0 0.0
        %2358 = vmatprep.mubr.f32.mxu0 0.0
        %v2359 = vand.u32 %v2030, 4294901760
        %v2360 = vsub.f32 %v2030, %v2359
        %v2361 = vand.u32 %v2360, 4294901760
        %2362 = vmatmul.mubr.f32.gmra.mrb[0].mxu0 %v2361
        %v2363 = vpop.f32.mrb[0].mxu0
        %v2364 = vadd.f32 %v2282, %v2363
        %v2365 = vpop.f32.mrb[0].mxu0
        %2366 = vmatprep.mubr.f32.mxu0 0.0
        %v2367 = vand.u32 %v2033, 4294901760
        %v2368 = vsub.f32 %v2033, %v2367
        %v2369 = vand.u32 %v2368, 4294901760
        %2370 = vmatmul.mubr.f32.gmra.mrb[0].mxu0 %v2369
        %v2371 = vpop.f32.mrb[0].mxu0
        %v2372 = vadd.f32 %v2289, %v2371
        %v2373 = vpop.f32.mrb[0].mxu0
        %2374 = vdwg.mxu0
        %2375 = vmatprep.subr.mxu0 0.0
        %v2376 = vand.u32 %v488, 4294901760
        %v2377 = vsub.f32 %v488, %v2376
        %v2378 = vand.u32 %v2377, 4294901760
        %2379 = vmatpush1.msra.mxu0 %v2378
        %2380 = vmatprep.subr.mxu0 0.0
        %v2381 = vand.u32 %v489, 4294901760
        %v2382 = vsub.f32 %v489, %v2381
        %v2383 = vand.u32 %v2382, 4294901760
        %2384 = vmatpush1.msra.mxu0 %v2383
        %2385 = vmatprep.subr.mxu0 0.0
        %2386 = vmatpush1.msra.mxu0 0.0
        %2387 = vmatprep.subr.mxu0 0.0
        %2388 = vmatpush1.msra.mxu0 0.0
        %2389 = vmatprep.subr.mxu0 0.0
        %2390 = vmatpush1.msra.mxu0 0.0
        %2391 = vmatprep.subr.mxu0 0.0
        %2392 = vmatpush1.msra.mxu0 0.0
        %2393 = vmatprep.subr.mxu0 0.0
        %2394 = vmatpush1.msra.mxu0 0.0
        %2395 = vmatprep.subr.mxu0 0.0
        %2396 = vmatpush1.msra.mxu0 0.0
        %2397 = vmatprep.subr.mxu0 0.0
        %2398 = vmatpush1.msra.mxu0 0.0
        %2399 = vmatprep.subr.mxu0 0.0
        %2400 = vmatpush1.msra.mxu0 0.0
        %2401 = vmatprep.subr.mxu0 0.0
        %2402 = vmatpush1.msra.mxu0 0.0
        %2403 = vmatprep.subr.mxu0 0.0
        %2404 = vmatpush1.msra.mxu0 0.0
        %2405 = vmatprep.subr.mxu0 0.0
        %2406 = vmatpush1.msra.mxu0 0.0
        %2407 = vmatprep.subr.mxu0 0.0
        %2408 = vmatpush1.msra.mxu0 0.0
        %2409 = vmatprep.subr.mxu0 0.0
        %2410 = vmatpush1.msra.mxu0 0.0
        %2411 = vmatprep.subr.mxu0 0.0
        %2412 = vmatpush1.msra.mxu0 0.0
        %2413 = vmatprep.subr.mxu0 0.0
        %2414 = vmatpush1.msra.mxu0 0.0
        %2415 = vmatprep.subr.mxu0 0.0
        %2416 = vmatpush1.msra.mxu0 0.0
        %2417 = vmatprep.subr.mxu0 0.0
        %2418 = vmatpush1.msra.mxu0 0.0
        %2419 = vmatprep.subr.mxu0 0.0
        %2420 = vmatpush1.msra.mxu0 0.0
        %2421 = vmatprep.subr.mxu0 0.0
        %2422 = vmatpush1.msra.mxu0 0.0
        %2423 = vmatprep.subr.mxu0 0.0
        %2424 = vmatpush1.msra.mxu0 0.0
        %2425 = vmatprep.subr.mxu0 0.0
        %2426 = vmatpush1.msra.mxu0 0.0
        %2427 = vmatprep.subr.mxu0 0.0
        %2428 = vmatpush1.msra.mxu0 0.0
        %2429 = vmatprep.subr.mxu0 0.0
        %2430 = vmatpush1.msra.mxu0 0.0
        %2431 = vmatprep.subr.mxu0 0.0
        %2432 = vmatpush1.msra.mxu0 0.0
        %2433 = vmatprep.subr.mxu0 0.0
        %2434 = vmatpush1.msra.mxu0 0.0
        %2435 = vmatprep.subr.mxu0 0.0
        %2436 = vmatpush1.msra.mxu0 0.0
        %2437 = vmatprep.subr.mxu0 0.0
        %2438 = vmatpush1.msra.mxu0 0.0
        %2439 = vmatprep.subr.mxu0 0.0
        %2440 = vmatpush1.msra.mxu0 0.0
        %2441 = vmatprep.subr.mxu0 0.0
        %2442 = vmatpush1.msra.mxu0 0.0
        %2443 = vmatprep.subr.mxu0 0.0
        %2444 = vmatpush1.msra.mxu0 0.0
        %2445 = vmatprep.mubr.f32.mxu0 0.0
        %v2446 = vand.u32 %v2030, 4294901760
        %2447 = vmatmul.mubr.f32.gmra.mrb[0].mxu0 %v2446
        %v2448 = vpop.f32.mrb[0].mxu0
        %v2449 = vadd.f32 %v2364, %v2448
        %v2450 = vpop.f32.mrb[0].mxu0
        %2451 = vmatprep.mubr.f32.mxu0 0.0
        %v2452 = vand.u32 %v2033, 4294901760
        %2453 = vmatmul.mubr.f32.gmra.mrb[0].mxu0 %v2452
        %v2454 = vpop.f32.mrb[0].mxu0
        %v2455 = vadd.f32 %v2372, %v2454
        %v2456 = vpop.f32.mrb[0].mxu0
        %2457 = vdwg.mxu0
        %2458 = vmatprep.subr.mxu0 0.0
        %v2459 = vand.u32 %v488, 4294901760
        %2460 = vmatpush1.msra.mxu0 %v2459
        %2461 = vmatprep.subr.mxu0 0.0
        %v2462 = vand.u32 %v489, 4294901760
        %2463 = vmatpush1.msra.mxu0 %v2462
        %2464 = vmatprep.subr.mxu0 0.0
        %2465 = vmatpush1.msra.mxu0 0.0
        %2466 = vmatprep.subr.mxu0 0.0
        %2467 = vmatpush1.msra.mxu0 0.0
        %2468 = vmatprep.subr.mxu0 0.0
        %2469 = vmatpush1.msra.mxu0 0.0
        %2470 = vmatprep.subr.mxu0 0.0
        %2471 = vmatpush1.msra.mxu0 0.0
        %2472 = vmatprep.subr.mxu0 0.0
        %2473 = vmatpush1.msra.mxu0 0.0
        %2474 = vmatprep.subr.mxu0 0.0
        %2475 = vmatpush1.msra.mxu0 0.0
        %2476 = vmatprep.subr.mxu0 0.0
        %2477 = vmatpush1.msra.mxu0 0.0
        %2478 = vmatprep.subr.mxu0 0.0
        %2479 = vmatpush1.msra.mxu0 0.0
        %2480 = vmatprep.subr.mxu0 0.0
        %2481 = vmatpush1.msra.mxu0 0.0
        %2482 = vmatprep.subr.mxu0 0.0
        %2483 = vmatpush1.msra.mxu0 0.0
        %2484 = vmatprep.subr.mxu0 0.0
        %2485 = vmatpush1.msra.mxu0 0.0
        %2486 = vmatprep.subr.mxu0 0.0
        %2487 = vmatpush1.msra.mxu0 0.0
        %2488 = vmatprep.subr.mxu0 0.0
        %2489 = vmatpush1.msra.mxu0 0.0
        %2490 = vmatprep.subr.mxu0 0.0
        %2491 = vmatpush1.msra.mxu0 0.0
        %2492 = vmatprep.subr.mxu0 0.0
        %2493 = vmatpush1.msra.mxu0 0.0
        %2494 = vmatprep.subr.mxu0 0.0
        %2495 = vmatpush1.msra.mxu0 0.0
        %2496 = vmatprep.subr.mxu0 0.0
        %2497 = vmatpush1.msra.mxu0 0.0
        %2498 = vmatprep.subr.mxu0 0.0
        %2499 = vmatpush1.msra.mxu0 0.0
        %2500 = vmatprep.subr.mxu0 0.0
        %2501 = vmatpush1.msra.mxu0 0.0
        %2502 = vmatprep.subr.mxu0 0.0
        %2503 = vmatpush1.msra.mxu0 0.0
        %2504 = vmatprep.subr.mxu0 0.0
        %2505 = vmatpush1.msra.mxu0 0.0
        %2506 = vmatprep.subr.mxu0 0.0
        %2507 = vmatpush1.msra.mxu0 0.0
        %2508 = vmatprep.subr.mxu0 0.0
        %2509 = vmatpush1.msra.mxu0 0.0
        %2510 = vmatprep.subr.mxu0 0.0
        %2511 = vmatpush1.msra.mxu0 0.0
        %2512 = vmatprep.subr.mxu0 0.0
        %2513 = vmatpush1.msra.mxu0 0.0
        %2514 = vmatprep.subr.mxu0 0.0
        %2515 = vmatpush1.msra.mxu0 0.0
        %2516 = vmatprep.subr.mxu0 0.0
        %2517 = vmatpush1.msra.mxu0 0.0
        %2518 = vmatprep.subr.mxu0 0.0
        %2519 = vmatpush1.msra.mxu0 0.0
        %2520 = vmatprep.subr.mxu0 0.0
        %2521 = vmatpush1.msra.mxu0 0.0
        %2522 = vmatprep.subr.mxu0 0.0
        %2523 = vmatpush1.msra.mxu0 0.0
        %2524 = vmatprep.mubr.f32.mxu0 0.0
        %v2525 = vand.u32 %v2030, 4294901760
        %2526 = vmatmul.mubr.f32.gmra.mrb[0].mxu0 %v2525
        %v2527 = vpop.f32.mrb[0].mxu0
        %v2528 = vadd.f32 %v2449, %v2527
        %v2529 = vpop.f32.mrb[0].mxu0
        %2530 = vmatprep.mubr.f32.mxu0 0.0
        %v2531 = vand.u32 %v2033, 4294901760
        %2532 = vmatmul.mubr.f32.gmra.mrb[0].mxu0 %v2531
        %v2533 = vpop.f32.mrb[0].mxu0
        %v2534 = vadd.f32 %v2455, %v2533
        %v2535 = vpop.f32.mrb[0].mxu0
        %2536 = vdwg.mxu0
        %v2537 = vmax.f32 %v2528, 0.0
        %v2538 = vmax.f32 %v2534, 0.0
        %v2539 = vmin.f32 %v2537, 255.0
        %v2540 = vmin.f32 %v2538, 255.0
        %2541 = vst.msk [vmem:[%s462] sm:$0xff] %vm499, %v2539
        %2542 = vst.msk [vmem:[%s462 + $0x8] sm:$0xff] %vm499, %v2540
        %v2544 = vsel %vm499, %v492, 0
        %2546 = vmatprep.subr.mxu0 0.0
        %v2547 = vand.u32 %v1519, 4294901760
        %2548 = vmatpush1.msra.mxu0 %v2547
        %2549 = vmatprep.subr.mxu0 0.0
        %v2550 = vand.u32 %v1520, 4294901760
        %2551 = vmatpush1.msra.mxu0 %v2550
        %2552 = vmatprep.subr.mxu0 0.0
        %2553 = vmatpush1.msra.mxu0 0.0
        %2554 = vmatprep.subr.mxu0 0.0
        %2555 = vmatpush1.msra.mxu0 0.0
        %2556 = vmatprep.subr.mxu0 0.0
        %2557 = vmatpush1.msra.mxu0 0.0
        %2558 = vmatprep.subr.mxu0 0.0
        %2559 = vmatpush1.msra.mxu0 0.0
        %2560 = vmatprep.subr.mxu0 0.0
        %2561 = vmatpush1.msra.mxu0 0.0
        %2562 = vmatprep.subr.mxu0 0.0
        %2563 = vmatpush1.msra.mxu0 0.0
        %2564 = vmatprep.subr.mxu0 0.0
        %2565 = vmatpush1.msra.mxu0 0.0
        %2566 = vmatprep.subr.mxu0 0.0
        %2567 = vmatpush1.msra.mxu0 0.0
        %2568 = vmatprep.subr.mxu0 0.0
        %2569 = vmatpush1.msra.mxu0 0.0
        %2570 = vmatprep.subr.mxu0 0.0
        %2571 = vmatpush1.msra.mxu0 0.0
        %2572 = vmatprep.subr.mxu0 0.0
        %2573 = vmatpush1.msra.mxu0 0.0
        %2574 = vmatprep.subr.mxu0 0.0
        %2575 = vmatpush1.msra.mxu0 0.0
        %2576 = vmatprep.subr.mxu0 0.0
        %2577 = vmatpush1.msra.mxu0 0.0
        %2578 = vmatprep.subr.mxu0 0.0
        %2579 = vmatpush1.msra.mxu0 0.0
        %2580 = vmatprep.subr.mxu0 0.0
        %2581 = vmatpush1.msra.mxu0 0.0
        %2582 = vmatprep.subr.mxu0 0.0
        %2583 = vmatpush1.msra.mxu0 0.0
        %2584 = vmatprep.subr.mxu0 0.0
        %2585 = vmatpush1.msra.mxu0 0.0
        %2586 = vmatprep.subr.mxu0 0.0
        %2587 = vmatpush1.msra.mxu0 0.0
        %2588 = vmatprep.subr.mxu0 0.0
        %2589 = vmatpush1.msra.mxu0 0.0
        %2590 = vmatprep.subr.mxu0 0.0
        %2591 = vmatpush1.msra.mxu0 0.0
        %2592 = vmatprep.subr.mxu0 0.0
        %2593 = vmatpush1.msra.mxu0 0.0
        %2594 = vmatprep.subr.mxu0 0.0
        %2595 = vmatpush1.msra.mxu0 0.0
        %2596 = vmatprep.subr.mxu0 0.0
        %2597 = vmatpush1.msra.mxu0 0.0
        %2598 = vmatprep.subr.mxu0 0.0
        %2599 = vmatpush1.msra.mxu0 0.0
        %2600 = vmatprep.subr.mxu0 0.0
        %2601 = vmatpush1.msra.mxu0 0.0
        %2602 = vmatprep.subr.mxu0 0.0
        %2603 = vmatpush1.msra.mxu0 0.0
        %2604 = vmatprep.subr.mxu0 0.0
        %2605 = vmatpush1.msra.mxu0 0.0
        %2606 = vmatprep.subr.mxu0 0.0
        %2607 = vmatpush1.msra.mxu0 0.0
        %2608 = vmatprep.subr.mxu0 0.0
        %2609 = vmatpush1.msra.mxu0 0.0
        %2610 = vmatprep.subr.mxu0 0.0
        %2611 = vmatpush1.msra.mxu0 0.0
        %2612 = vmatprep.mubr.f32.mxu0 0.0
        %v2613 = vand.u32 %v2544, 4294901760
        %v2614 = vsub.f32 %v2544, %v2613
        %v2615 = vand.u32 %v2614, 4294901760
        %v2616 = vsub.f32 %v2614, %v2615
        %v2617 = vand.u32 %v2616, 4294901760
        %2618 = vmatmul.mubr.f32.gmra.mrb[0].mxu0 %v2617
        %v2619 = vpop.f32.mrb[0].mxu0
        %v2620 = vadd.f32 0.0, %v2619
        %v2621 = vpop.f32.mrb[0].mxu0
        %2622 = vdwg.mxu0
        %2623 = vmatprep.subr.mxu0 0.0
        %v2624 = vand.u32 %v1519, 4294901760
        %v2625 = vsub.f32 %v1519, %v2624
        %v2626 = vand.u32 %v2625, 4294901760
        %v2627 = vsub.f32 %v2625, %v2626
        %v2628 = vand.u32 %v2627, 4294901760
        %2629 = vmatpush1.msra.mxu0 %v2628
        %2630 = vmatprep.subr.mxu0 0.0
        %v2631 = vand.u32 %v1520, 4294901760
        %v2632 = vsub.f32 %v1520, %v2631
        %v2633 = vand.u32 %v2632, 4294901760
        %v2634 = vsub.f32 %v2632, %v2633
        %v2635 = vand.u32 %v2634, 4294901760
        %2636 = vmatpush1.msra.mxu0 %v2635
        %2637 = vmatprep.subr.mxu0 0.0
        %2638 = vmatpush1.msra.mxu0 0.0
        %2639 = vmatprep.subr.mxu0 0.0
        %2640 = vmatpush1.msra.mxu0 0.0
        %2641 = vmatprep.subr.mxu0 0.0
        %2642 = vmatpush1.msra.mxu0 0.0
        %2643 = vmatprep.subr.mxu0 0.0
        %2644 = vmatpush1.msra.mxu0 0.0
        %2645 = vmatprep.subr.mxu0 0.0
        %2646 = vmatpush1.msra.mxu0 0.0
        %2647 = vmatprep.subr.mxu0 0.0
        %2648 = vmatpush1.msra.mxu0 0.0
        %2649 = vmatprep.subr.mxu0 0.0
        %2650 = vmatpush1.msra.mxu0 0.0
        %2651 = vmatprep.subr.mxu0 0.0
        %2652 = vmatpush1.msra.mxu0 0.0
        %2653 = vmatprep.subr.mxu0 0.0
        %2654 = vmatpush1.msra.mxu0 0.0
        %2655 = vmatprep.subr.mxu0 0.0
        %2656 = vmatpush1.msra.mxu0 0.0
        %2657 = vmatprep.subr.mxu0 0.0
        %2658 = vmatpush1.msra.mxu0 0.0
        %2659 = vmatprep.subr.mxu0 0.0
        %2660 = vmatpush1.msra.mxu0 0.0
        %2661 = vmatprep.subr.mxu0 0.0
        %2662 = vmatpush1.msra.mxu0 0.0
        %2663 = vmatprep.subr.mxu0 0.0
        %2664 = vmatpush1.msra.mxu0 0.0
        %2665 = vmatprep.subr.mxu0 0.0
        %2666 = vmatpush1.msra.mxu0 0.0
        %2667 = vmatprep.subr.mxu0 0.0
        %2668 = vmatpush1.msra.mxu0 0.0
        %2669 = vmatprep.subr.mxu0 0.0
        %2670 = vmatpush1.msra.mxu0 0.0
        %2671 = vmatprep.subr.mxu0 0.0
        %2672 = vmatpush1.msra.mxu0 0.0
        %2673 = vmatprep.subr.mxu0 0.0
        %2674 = vmatpush1.msra.mxu0 0.0
        %2675 = vmatprep.subr.mxu0 0.0
        %2676 = vmatpush1.msra.mxu0 0.0
        %2677 = vmatprep.subr.mxu0 0.0
        %2678 = vmatpush1.msra.mxu0 0.0
        %2679 = vmatprep.subr.mxu0 0.0
        %2680 = vmatpush1.msra.mxu0 0.0
        %2681 = vmatprep.subr.mxu0 0.0
        %2682 = vmatpush1.msra.mxu0 0.0
        %2683 = vmatprep.subr.mxu0 0.0
        %2684 = vmatpush1.msra.mxu0 0.0
        %2685 = vmatprep.subr.mxu0 0.0
        %2686 = vmatpush1.msra.mxu0 0.0
        %2687 = vmatprep.subr.mxu0 0.0
        %2688 = vmatpush1.msra.mxu0 0.0
        %2689 = vmatprep.subr.mxu0 0.0
        %2690 = vmatpush1.msra.mxu0 0.0
        %2691 = vmatprep.subr.mxu0 0.0
        %2692 = vmatpush1.msra.mxu0 0.0
        %2693 = vmatprep.subr.mxu0 0.0
        %2694 = vmatpush1.msra.mxu0 0.0
        %2695 = vmatprep.subr.mxu0 0.0
        %2696 = vmatpush1.msra.mxu0 0.0
        %2697 = vmatprep.mubr.f32.mxu0 0.0
        %v2698 = vand.u32 %v2544, 4294901760
        %2699 = vmatmul.mubr.f32.gmra.mrb[0].mxu0 %v2698
        %v2700 = vpop.f32.mrb[0].mxu0
        %v2701 = vadd.f32 %v2620, %v2700
        %v2702 = vpop.f32.mrb[0].mxu0
        %2703 = vdwg.mxu0
        %2704 = vmatprep.subr.mxu0 0.0
        %v2705 = vand.u32 %v1519, 4294901760
        %v2706 = vsub.f32 %v1519, %v2705
        %2707 = vmatpush1.msra.mxu0 %v2706
        %2708 = vmatprep.subr.mxu0 0.0
        %v2709 = vand.u32 %v1520, 4294901760
        %v2710 = vsub.f32 %v1520, %v2709
        %2711 = vmatpush1.msra.mxu0 %v2710
        %2712 = vmatprep.subr.mxu0 0.0
        %2713 = vmatpush1.msra.mxu0 0.0
        %2714 = vmatprep.subr.mxu0 0.0
        %2715 = vmatpush1.msra.mxu0 0.0
        %2716 = vmatprep.subr.mxu0 0.0
        %2717 = vmatpush1.msra.mxu0 0.0
        %2718 = vmatprep.subr.mxu0 0.0
        %2719 = vmatpush1.msra.mxu0 0.0
        %2720 = vmatprep.subr.mxu0 0.0
        %2721 = vmatpush1.msra.mxu0 0.0
        %2722 = vmatprep.subr.mxu0 0.0
        %2723 = vmatpush1.msra.mxu0 0.0
        %2724 = vmatprep.subr.mxu0 0.0
        %2725 = vmatpush1.msra.mxu0 0.0
        %2726 = vmatprep.subr.mxu0 0.0
        %2727 = vmatpush1.msra.mxu0 0.0
        %2728 = vmatprep.subr.mxu0 0.0
        %2729 = vmatpush1.msra.mxu0 0.0
        %2730 = vmatprep.subr.mxu0 0.0
        %2731 = vmatpush1.msra.mxu0 0.0
        %2732 = vmatprep.subr.mxu0 0.0
        %2733 = vmatpush1.msra.mxu0 0.0
        %2734 = vmatprep.subr.mxu0 0.0
        %2735 = vmatpush1.msra.mxu0 0.0
        %2736 = vmatprep.subr.mxu0 0.0
        %2737 = vmatpush1.msra.mxu0 0.0
        %2738 = vmatprep.subr.mxu0 0.0
        %2739 = vmatpush1.msra.mxu0 0.0
        %2740 = vmatprep.subr.mxu0 0.0
        %2741 = vmatpush1.msra.mxu0 0.0
        %2742 = vmatprep.subr.mxu0 0.0
        %2743 = vmatpush1.msra.mxu0 0.0
        %2744 = vmatprep.subr.mxu0 0.0
        %2745 = vmatpush1.msra.mxu0 0.0
        %2746 = vmatprep.subr.mxu0 0.0
        %2747 = vmatpush1.msra.mxu0 0.0
        %2748 = vmatprep.subr.mxu0 0.0
        %2749 = vmatpush1.msra.mxu0 0.0
        %2750 = vmatprep.subr.mxu0 0.0
        %2751 = vmatpush1.msra.mxu0 0.0
        %2752 = vmatprep.subr.mxu0 0.0
        %2753 = vmatpush1.msra.mxu0 0.0
        %2754 = vmatprep.subr.mxu0 0.0
        %2755 = vmatpush1.msra.mxu0 0.0
        %2756 = vmatprep.subr.mxu0 0.0
        %2757 = vmatpush1.msra.mxu0 0.0
        %2758 = vmatprep.subr.mxu0 0.0
        %2759 = vmatpush1.msra.mxu0 0.0
        %2760 = vmatprep.subr.mxu0 0.0
        %2761 = vmatpush1.msra.mxu0 0.0
        %2762 = vmatprep.subr.mxu0 0.0
        %2763 = vmatpush1.msra.mxu0 0.0
        %2764 = vmatprep.subr.mxu0 0.0
        %2765 = vmatpush1.msra.mxu0 0.0
        %2766 = vmatprep.subr.mxu0 0.0
        %2767 = vmatpush1.msra.mxu0 0.0
        %2768 = vmatprep.subr.mxu0 0.0
        %2769 = vmatpush1.msra.mxu0 0.0
        %2770 = vmatprep.subr.mxu0 0.0
        %2771 = vmatpush1.msra.mxu0 0.0
        %2772 = vmatprep.mubr.f32.mxu0 0.0
        %v2773 = vand.u32 %v2544, 4294901760
        %v2774 = vsub.f32 %v2544, %v2773
        %2775 = vmatmul.mubr.f32.gmra.mrb[0].mxu0 %v2774
        %v2776 = vpop.f32.mrb[0].mxu0
        %v2777 = vadd.f32 %v2701, %v2776
        %v2778 = vpop.f32.mrb[0].mxu0
        %2779 = vdwg.mxu0
        %2780 = vmatprep.subr.mxu0 0.0
        %v2781 = vand.u32 %v1519, 4294901760
        %2782 = vmatpush1.msra.mxu0 %v2781
        %2783 = vmatprep.subr.mxu0 0.0
        %v2784 = vand.u32 %v1520, 4294901760
        %2785 = vmatpush1.msra.mxu0 %v2784
        %2786 = vmatprep.subr.mxu0 0.0
        %2787 = vmatpush1.msra.mxu0 0.0
        %2788 = vmatprep.subr.mxu0 0.0
        %2789 = vmatpush1.msra.mxu0 0.0
        %2790 = vmatprep.subr.mxu0 0.0
        %2791 = vmatpush1.msra.mxu0 0.0
        %2792 = vmatprep.subr.mxu0 0.0
        %2793 = vmatpush1.msra.mxu0 0.0
        %2794 = vmatprep.subr.mxu0 0.0
        %2795 = vmatpush1.msra.mxu0 0.0
        %2796 = vmatprep.subr.mxu0 0.0
        %2797 = vmatpush1.msra.mxu0 0.0
        %2798 = vmatprep.subr.mxu0 0.0
        %2799 = vmatpush1.msra.mxu0 0.0
        %2800 = vmatprep.subr.mxu0 0.0
        %2801 = vmatpush1.msra.mxu0 0.0
        %2802 = vmatprep.subr.mxu0 0.0
        %2803 = vmatpush1.msra.mxu0 0.0
        %2804 = vmatprep.subr.mxu0 0.0
        %2805 = vmatpush1.msra.mxu0 0.0
        %2806 = vmatprep.subr.mxu0 0.0
        %2807 = vmatpush1.msra.mxu0 0.0
        %2808 = vmatprep.subr.mxu0 0.0
        %2809 = vmatpush1.msra.mxu0 0.0
        %2810 = vmatprep.subr.mxu0 0.0
        %2811 = vmatpush1.msra.mxu0 0.0
        %2812 = vmatprep.subr.mxu0 0.0
        %2813 = vmatpush1.msra.mxu0 0.0
        %2814 = vmatprep.subr.mxu0 0.0
        %2815 = vmatpush1.msra.mxu0 0.0
        %2816 = vmatprep.subr.mxu0 0.0
        %2817 = vmatpush1.msra.mxu0 0.0
        %2818 = vmatprep.subr.mxu0 0.0
        %2819 = vmatpush1.msra.mxu0 0.0
        %2820 = vmatprep.subr.mxu0 0.0
        %2821 = vmatpush1.msra.mxu0 0.0
        %2822 = vmatprep.subr.mxu0 0.0
        %2823 = vmatpush1.msra.mxu0 0.0
        %2824 = vmatprep.subr.mxu0 0.0
        %2825 = vmatpush1.msra.mxu0 0.0
        %2826 = vmatprep.subr.mxu0 0.0
        %2827 = vmatpush1.msra.mxu0 0.0
        %2828 = vmatprep.subr.mxu0 0.0
        %2829 = vmatpush1.msra.mxu0 0.0
        %2830 = vmatprep.subr.mxu0 0.0
        %2831 = vmatpush1.msra.mxu0 0.0
        %2832 = vmatprep.subr.mxu0 0.0
        %2833 = vmatpush1.msra.mxu0 0.0
        %2834 = vmatprep.subr.mxu0 0.0
        %2835 = vmatpush1.msra.mxu0 0.0
        %2836 = vmatprep.subr.mxu0 0.0
        %2837 = vmatpush1.msra.mxu0 0.0
        %2838 = vmatprep.subr.mxu0 0.0
        %2839 = vmatpush1.msra.mxu0 0.0
        %2840 = vmatprep.subr.mxu0 0.0
        %2841 = vmatpush1.msra.mxu0 0.0
        %2842 = vmatprep.subr.mxu0 0.0
        %2843 = vmatpush1.msra.mxu0 0.0
        %2844 = vmatprep.subr.mxu0 0.0
        %2845 = vmatpush1.msra.mxu0 0.0
        %2846 = vmatprep.mubr.f32.mxu0 0.0
        %v2847 = vand.u32 %v2544, 4294901760
        %v2848 = vsub.f32 %v2544, %v2847
        %v2849 = vand.u32 %v2848, 4294901760
        %2850 = vmatmul.mubr.f32.gmra.mrb[0].mxu0 %v2849
        %v2851 = vpop.f32.mrb[0].mxu0
        %v2852 = vadd.f32 %v2777, %v2851
        %v2853 = vpop.f32.mrb[0].mxu0
        %2854 = vdwg.mxu0
        %2855 = vmatprep.subr.mxu0 0.0
        %v2856 = vand.u32 %v1519, 4294901760
        %v2857 = vsub.f32 %v1519, %v2856
        %v2858 = vand.u32 %v2857, 4294901760
        %2859 = vmatpush1.msra.mxu0 %v2858
        %2860 = vmatprep.subr.mxu0 0.0
        %v2861 = vand.u32 %v1520, 4294901760
        %v2862 = vsub.f32 %v1520, %v2861
        %v2863 = vand.u32 %v2862, 4294901760
        %2864 = vmatpush1.msra.mxu0 %v2863
        %2865 = vmatprep.subr.mxu0 0.0
        %2866 = vmatpush1.msra.mxu0 0.0
        %2867 = vmatprep.subr.mxu0 0.0
        %2868 = vmatpush1.msra.mxu0 0.0
        %2869 = vmatprep.subr.mxu0 0.0
        %2870 = vmatpush1.msra.mxu0 0.0
        %2871 = vmatprep.subr.mxu0 0.0
        %2872 = vmatpush1.msra.mxu0 0.0
        %2873 = vmatprep.subr.mxu0 0.0
        %2874 = vmatpush1.msra.mxu0 0.0
        %2875 = vmatprep.subr.mxu0 0.0
        %2876 = vmatpush1.msra.mxu0 0.0
        %2877 = vmatprep.subr.mxu0 0.0
        %2878 = vmatpush1.msra.mxu0 0.0
        %2879 = vmatprep.subr.mxu0 0.0
        %2880 = vmatpush1.msra.mxu0 0.0
        %2881 = vmatprep.subr.mxu0 0.0
        %2882 = vmatpush1.msra.mxu0 0.0
        %2883 = vmatprep.subr.mxu0 0.0
        %2884 = vmatpush1.msra.mxu0 0.0
        %2885 = vmatprep.subr.mxu0 0.0
        %2886 = vmatpush1.msra.mxu0 0.0
        %2887 = vmatprep.subr.mxu0 0.0
        %2888 = vmatpush1.msra.mxu0 0.0
        %2889 = vmatprep.subr.mxu0 0.0
        %2890 = vmatpush1.msra.mxu0 0.0
        %2891 = vmatprep.subr.mxu0 0.0
        %2892 = vmatpush1.msra.mxu0 0.0
        %2893 = vmatprep.subr.mxu0 0.0
        %2894 = vmatpush1.msra.mxu0 0.0
        %2895 = vmatprep.subr.mxu0 0.0
        %2896 = vmatpush1.msra.mxu0 0.0
        %2897 = vmatprep.subr.mxu0 0.0
        %2898 = vmatpush1.msra.mxu0 0.0
        %2899 = vmatprep.subr.mxu0 0.0
        %2900 = vmatpush1.msra.mxu0 0.0
        %2901 = vmatprep.subr.mxu0 0.0
        %2902 = vmatpush1.msra.mxu0 0.0
        %2903 = vmatprep.subr.mxu0 0.0
        %2904 = vmatpush1.msra.mxu0 0.0
        %2905 = vmatprep.subr.mxu0 0.0
        %2906 = vmatpush1.msra.mxu0 0.0
        %2907 = vmatprep.subr.mxu0 0.0
        %2908 = vmatpush1.msra.mxu0 0.0
        %2909 = vmatprep.subr.mxu0 0.0
        %2910 = vmatpush1.msra.mxu0 0.0
        %2911 = vmatprep.subr.mxu0 0.0
        %2912 = vmatpush1.msra.mxu0 0.0
        %2913 = vmatprep.subr.mxu0 0.0
        %2914 = vmatpush1.msra.mxu0 0.0
        %2915 = vmatprep.subr.mxu0 0.0
        %2916 = vmatpush1.msra.mxu0 0.0
        %2917 = vmatprep.subr.mxu0 0.0
        %2918 = vmatpush1.msra.mxu0 0.0
        %2919 = vmatprep.subr.mxu0 0.0
        %2920 = vmatpush1.msra.mxu0 0.0
        %2921 = vmatprep.subr.mxu0 0.0
        %2922 = vmatpush1.msra.mxu0 0.0
        %2923 = vmatprep.subr.mxu0 0.0
        %2924 = vmatpush1.msra.mxu0 0.0
        %2925 = vmatprep.mubr.f32.mxu0 0.0
        %v2926 = vand.u32 %v2544, 4294901760
        %2927 = vmatmul.mubr.f32.gmra.mrb[0].mxu0 %v2926
        %v2928 = vpop.f32.mrb[0].mxu0
        %v2929 = vadd.f32 %v2852, %v2928
        %v2930 = vpop.f32.mrb[0].mxu0
        %2931 = vdwg.mxu0
        %2932 = vmatprep.subr.mxu0 0.0
        %v2933 = vand.u32 %v1519, 4294901760
        %2934 = vmatpush1.msra.mxu0 %v2933
        %2935 = vmatprep.subr.mxu0 0.0
        %v2936 = vand.u32 %v1520, 4294901760
        %2937 = vmatpush1.msra.mxu0 %v2936
        %2938 = vmatprep.subr.mxu0 0.0
        %2939 = vmatpush1.msra.mxu0 0.0
        %2940 = vmatprep.subr.mxu0 0.0
        %2941 = vmatpush1.msra.mxu0 0.0
        %2942 = vmatprep.subr.mxu0 0.0
        %2943 = vmatpush1.msra.mxu0 0.0
        %2944 = vmatprep.subr.mxu0 0.0
        %2945 = vmatpush1.msra.mxu0 0.0
        %2946 = vmatprep.subr.mxu0 0.0
        %2947 = vmatpush1.msra.mxu0 0.0
        %2948 = vmatprep.subr.mxu0 0.0
        %2949 = vmatpush1.msra.mxu0 0.0
        %2950 = vmatprep.subr.mxu0 0.0
        %2951 = vmatpush1.msra.mxu0 0.0
        %2952 = vmatprep.subr.mxu0 0.0
        %2953 = vmatpush1.msra.mxu0 0.0
        %2954 = vmatprep.subr.mxu0 0.0
        %2955 = vmatpush1.msra.mxu0 0.0
        %2956 = vmatprep.subr.mxu0 0.0
        %2957 = vmatpush1.msra.mxu0 0.0
        %2958 = vmatprep.subr.mxu0 0.0
        %2959 = vmatpush1.msra.mxu0 0.0
        %2960 = vmatprep.subr.mxu0 0.0
        %2961 = vmatpush1.msra.mxu0 0.0
        %2962 = vmatprep.subr.mxu0 0.0
        %2963 = vmatpush1.msra.mxu0 0.0
        %2964 = vmatprep.subr.mxu0 0.0
        %2965 = vmatpush1.msra.mxu0 0.0
        %2966 = vmatprep.subr.mxu0 0.0
        %2967 = vmatpush1.msra.mxu0 0.0
        %2968 = vmatprep.subr.mxu0 0.0
        %2969 = vmatpush1.msra.mxu0 0.0
        %2970 = vmatprep.subr.mxu0 0.0
        %2971 = vmatpush1.msra.mxu0 0.0
        %2972 = vmatprep.subr.mxu0 0.0
        %2973 = vmatpush1.msra.mxu0 0.0
        %2974 = vmatprep.subr.mxu0 0.0
        %2975 = vmatpush1.msra.mxu0 0.0
        %2976 = vmatprep.subr.mxu0 0.0
        %2977 = vmatpush1.msra.mxu0 0.0
        %2978 = vmatprep.subr.mxu0 0.0
        %2979 = vmatpush1.msra.mxu0 0.0
        %2980 = vmatprep.subr.mxu0 0.0
        %2981 = vmatpush1.msra.mxu0 0.0
        %2982 = vmatprep.subr.mxu0 0.0
        %2983 = vmatpush1.msra.mxu0 0.0
        %2984 = vmatprep.subr.mxu0 0.0
        %2985 = vmatpush1.msra.mxu0 0.0
        %2986 = vmatprep.subr.mxu0 0.0
        %2987 = vmatpush1.msra.mxu0 0.0
        %2988 = vmatprep.subr.mxu0 0.0
        %2989 = vmatpush1.msra.mxu0 0.0
        %2990 = vmatprep.subr.mxu0 0.0
        %2991 = vmatpush1.msra.mxu0 0.0
        %2992 = vmatprep.subr.mxu0 0.0
        %2993 = vmatpush1.msra.mxu0 0.0
        %2994 = vmatprep.subr.mxu0 0.0
        %2995 = vmatpush1.msra.mxu0 0.0
        %2996 = vmatprep.subr.mxu0 0.0
        %2997 = vmatpush1.msra.mxu0 0.0
        %2998 = vmatprep.mubr.f32.mxu0 0.0
        %v2999 = vand.u32 %v2544, 4294901760
        %3000 = vmatmul.mubr.f32.gmra.mrb[0].mxu0 %v2999
        %v3001 = vpop.f32.mrb[0].mxu0
        %v3002 = vadd.f32 %v2929, %v3001
        %v3003 = vpop.f32.mrb[0].mxu0
        %3004 = vdwg.mxu0
        %v3006 = vsel %vm499, %v3002, 0
        %3008 = vmatprep.subr.mxu0 0.0
        %v3009 = vand.u32 %v493, 4294901760
        %3010 = vmatpush1.msra.mxu0 %v3009
        %3011 = vmatprep.subr.mxu0 0.0
        %v3012 = vand.u32 %v494, 4294901760
        %3013 = vmatpush1.msra.mxu0 %v3012
        %3014 = vmatprep.subr.mxu0 0.0
        %3015 = vmatpush1.msra.mxu0 0.0
        %3016 = vmatprep.subr.mxu0 0.0
        %3017 = vmatpush1.msra.mxu0 0.0
        %3018 = vmatprep.subr.mxu0 0.0
        %3019 = vmatpush1.msra.mxu0 0.0
        %3020 = vmatprep.subr.mxu0 0.0
        %3021 = vmatpush1.msra.mxu0 0.0
        %3022 = vmatprep.subr.mxu0 0.0
        %3023 = vmatpush1.msra.mxu0 0.0
        %3024 = vmatprep.subr.mxu0 0.0
        %3025 = vmatpush1.msra.mxu0 0.0
        %3026 = vmatprep.subr.mxu0 0.0
        %3027 = vmatpush1.msra.mxu0 0.0
        %3028 = vmatprep.subr.mxu0 0.0
        %3029 = vmatpush1.msra.mxu0 0.0
        %3030 = vmatprep.subr.mxu0 0.0
        %3031 = vmatpush1.msra.mxu0 0.0
        %3032 = vmatprep.subr.mxu0 0.0
        %3033 = vmatpush1.msra.mxu0 0.0
        %3034 = vmatprep.subr.mxu0 0.0
        %3035 = vmatpush1.msra.mxu0 0.0
        %3036 = vmatprep.subr.mxu0 0.0
        %3037 = vmatpush1.msra.mxu0 0.0
        %3038 = vmatprep.subr.mxu0 0.0
        %3039 = vmatpush1.msra.mxu0 0.0
        %3040 = vmatprep.subr.mxu0 0.0
        %3041 = vmatpush1.msra.mxu0 0.0
        %3042 = vmatprep.subr.mxu0 0.0
        %3043 = vmatpush1.msra.mxu0 0.0
        %3044 = vmatprep.subr.mxu0 0.0
        %3045 = vmatpush1.msra.mxu0 0.0
        %3046 = vmatprep.subr.mxu0 0.0
        %3047 = vmatpush1.msra.mxu0 0.0
        %3048 = vmatprep.subr.mxu0 0.0
        %3049 = vmatpush1.msra.mxu0 0.0
        %3050 = vmatprep.subr.mxu0 0.0
        %3051 = vmatpush1.msra.mxu0 0.0
        %3052 = vmatprep.subr.mxu0 0.0
        %3053 = vmatpush1.msra.mxu0 0.0
        %3054 = vmatprep.subr.mxu0 0.0
        %3055 = vmatpush1.msra.mxu0 0.0
        %3056 = vmatprep.subr.mxu0 0.0
        %3057 = vmatpush1.msra.mxu0 0.0
        %3058 = vmatprep.subr.mxu0 0.0
        %3059 = vmatpush1.msra.mxu0 0.0
        %3060 = vmatprep.subr.mxu0 0.0
        %3061 = vmatpush1.msra.mxu0 0.0
        %3062 = vmatprep.subr.mxu0 0.0
        %3063 = vmatpush1.msra.mxu0 0.0
        %3064 = vmatprep.subr.mxu0 0.0
        %3065 = vmatpush1.msra.mxu0 0.0
        %3066 = vmatprep.subr.mxu0 0.0
        %3067 = vmatpush1.msra.mxu0 0.0
        %3068 = vmatprep.subr.mxu0 0.0
        %3069 = vmatpush1.msra.mxu0 0.0
        %3070 = vmatprep.subr.mxu0 0.0
        %3071 = vmatpush1.msra.mxu0 0.0
        %3072 = vmatprep.subr.mxu0 0.0
        %3073 = vmatpush1.msra.mxu0 0.0
        %3074 = vmatprep.mubr.f32.mxu0 0.0
        %v3075 = vand.u32 %v3006, 4294901760
        %v3076 = vsub.f32 %v3006, %v3075
        %v3077 = vand.u32 %v3076, 4294901760
        %v3078 = vsub.f32 %v3076, %v3077
        %v3079 = vand.u32 %v3078, 4294901760
        %3080 = vmatmul.mubr.f32.gmra.mrb[0].mxu0 %v3079
        %v3081 = vpop.f32.mrb[0].mxu0
        %v3082 = vadd.f32 0.0, %v3081
        %v3083 = vpop.f32.mrb[0].mxu0
        %3084 = vdwg.mxu0
        %3085 = vmatprep.subr.mxu0 0.0
        %v3086 = vand.u32 %v493, 4294901760
        %v3087 = vsub.f32 %v493, %v3086
        %v3088 = vand.u32 %v3087, 4294901760
        %v3089 = vsub.f32 %v3087, %v3088
        %v3090 = vand.u32 %v3089, 4294901760
        %3091 = vmatpush1.msra.mxu0 %v3090
        %3092 = vmatprep.subr.mxu0 0.0
        %v3093 = vand.u32 %v494, 4294901760
        %v3094 = vsub.f32 %v494, %v3093
        %v3095 = vand.u32 %v3094, 4294901760
        %v3096 = vsub.f32 %v3094, %v3095
        %v3097 = vand.u32 %v3096, 4294901760
        %3098 = vmatpush1.msra.mxu0 %v3097
        %3099 = vmatprep.subr.mxu0 0.0
        %3100 = vmatpush1.msra.mxu0 0.0
        %3101 = vmatprep.subr.mxu0 0.0
        %3102 = vmatpush1.msra.mxu0 0.0
        %3103 = vmatprep.subr.mxu0 0.0
        %3104 = vmatpush1.msra.mxu0 0.0
        %3105 = vmatprep.subr.mxu0 0.0
        %3106 = vmatpush1.msra.mxu0 0.0
        %3107 = vmatprep.subr.mxu0 0.0
        %3108 = vmatpush1.msra.mxu0 0.0
        %3109 = vmatprep.subr.mxu0 0.0
        %3110 = vmatpush1.msra.mxu0 0.0
        %3111 = vmatprep.subr.mxu0 0.0
        %3112 = vmatpush1.msra.mxu0 0.0
        %3113 = vmatprep.subr.mxu0 0.0
        %3114 = vmatpush1.msra.mxu0 0.0
        %3115 = vmatprep.subr.mxu0 0.0
        %3116 = vmatpush1.msra.mxu0 0.0
        %3117 = vmatprep.subr.mxu0 0.0
        %3118 = vmatpush1.msra.mxu0 0.0
        %3119 = vmatprep.subr.mxu0 0.0
        %3120 = vmatpush1.msra.mxu0 0.0
        %3121 = vmatprep.subr.mxu0 0.0
        %3122 = vmatpush1.msra.mxu0 0.0
        %3123 = vmatprep.subr.mxu0 0.0
        %3124 = vmatpush1.msra.mxu0 0.0
        %3125 = vmatprep.subr.mxu0 0.0
        %3126 = vmatpush1.msra.mxu0 0.0
        %3127 = vmatprep.subr.mxu0 0.0
        %3128 = vmatpush1.msra.mxu0 0.0
        %3129 = vmatprep.subr.mxu0 0.0
        %3130 = vmatpush1.msra.mxu0 0.0
        %3131 = vmatprep.subr.mxu0 0.0
        %3132 = vmatpush1.msra.mxu0 0.0
        %3133 = vmatprep.subr.mxu0 0.0
        %3134 = vmatpush1.msra.mxu0 0.0
        %3135 = vmatprep.subr.mxu0 0.0
        %3136 = vmatpush1.msra.mxu0 0.0
        %3137 = vmatprep.subr.mxu0 0.0
        %3138 = vmatpush1.msra.mxu0 0.0
        %3139 = vmatprep.subr.mxu0 0.0
        %3140 = vmatpush1.msra.mxu0 0.0
        %3141 = vmatprep.subr.mxu0 0.0
        %3142 = vmatpush1.msra.mxu0 0.0
        %3143 = vmatprep.subr.mxu0 0.0
        %3144 = vmatpush1.msra.mxu0 0.0
        %3145 = vmatprep.subr.mxu0 0.0
        %3146 = vmatpush1.msra.mxu0 0.0
        %3147 = vmatprep.subr.mxu0 0.0
        %3148 = vmatpush1.msra.mxu0 0.0
        %3149 = vmatprep.subr.mxu0 0.0
        %3150 = vmatpush1.msra.mxu0 0.0
        %3151 = vmatprep.subr.mxu0 0.0
        %3152 = vmatpush1.msra.mxu0 0.0
        %3153 = vmatprep.subr.mxu0 0.0
        %3154 = vmatpush1.msra.mxu0 0.0
        %3155 = vmatprep.subr.mxu0 0.0
        %3156 = vmatpush1.msra.mxu0 0.0
        %3157 = vmatprep.subr.mxu0 0.0
        %3158 = vmatpush1.msra.mxu0 0.0
        %3159 = vmatprep.mubr.f32.mxu0 0.0
        %v3160 = vand.u32 %v3006, 4294901760
        %3161 = vmatmul.mubr.f32.gmra.mrb[0].mxu0 %v3160
        %v3162 = vpop.f32.mrb[0].mxu0
        %v3163 = vadd.f32 %v3082, %v3162
        %v3164 = vpop.f32.mrb[0].mxu0
        %3165 = vdwg.mxu0
        %3166 = vmatprep.subr.mxu0 0.0
        %v3167 = vand.u32 %v493, 4294901760
        %v3168 = vsub.f32 %v493, %v3167
        %3169 = vmatpush1.msra.mxu0 %v3168
        %3170 = vmatprep.subr.mxu0 0.0
        %v3171 = vand.u32 %v494, 4294901760
        %v3172 = vsub.f32 %v494, %v3171
        %3173 = vmatpush1.msra.mxu0 %v3172
        %3174 = vmatprep.subr.mxu0 0.0
        %3175 = vmatpush1.msra.mxu0 0.0
        %3176 = vmatprep.subr.mxu0 0.0
        %3177 = vmatpush1.msra.mxu0 0.0
        %3178 = vmatprep.subr.mxu0 0.0
        %3179 = vmatpush1.msra.mxu0 0.0
        %3180 = vmatprep.subr.mxu0 0.0
        %3181 = vmatpush1.msra.mxu0 0.0
        %3182 = vmatprep.subr.mxu0 0.0
        %3183 = vmatpush1.msra.mxu0 0.0
        %3184 = vmatprep.subr.mxu0 0.0
        %3185 = vmatpush1.msra.mxu0 0.0
        %3186 = vmatprep.subr.mxu0 0.0
        %3187 = vmatpush1.msra.mxu0 0.0
        %3188 = vmatprep.subr.mxu0 0.0
        %3189 = vmatpush1.msra.mxu0 0.0
        %3190 = vmatprep.subr.mxu0 0.0
        %3191 = vmatpush1.msra.mxu0 0.0
        %3192 = vmatprep.subr.mxu0 0.0
        %3193 = vmatpush1.msra.mxu0 0.0
        %3194 = vmatprep.subr.mxu0 0.0
        %3195 = vmatpush1.msra.mxu0 0.0
        %3196 = vmatprep.subr.mxu0 0.0
        %3197 = vmatpush1.msra.mxu0 0.0
        %3198 = vmatprep.subr.mxu0 0.0
        %3199 = vmatpush1.msra.mxu0 0.0
        %3200 = vmatprep.subr.mxu0 0.0
        %3201 = vmatpush1.msra.mxu0 0.0
        %3202 = vmatprep.subr.mxu0 0.0
        %3203 = vmatpush1.msra.mxu0 0.0
        %3204 = vmatprep.subr.mxu0 0.0
        %3205 = vmatpush1.msra.mxu0 0.0
        %3206 = vmatprep.subr.mxu0 0.0
        %3207 = vmatpush1.msra.mxu0 0.0
        %3208 = vmatprep.subr.mxu0 0.0
        %3209 = vmatpush1.msra.mxu0 0.0
        %3210 = vmatprep.subr.mxu0 0.0
        %3211 = vmatpush1.msra.mxu0 0.0
        %3212 = vmatprep.subr.mxu0 0.0
        %3213 = vmatpush1.msra.mxu0 0.0
        %3214 = vmatprep.subr.mxu0 0.0
        %3215 = vmatpush1.msra.mxu0 0.0
        %3216 = vmatprep.subr.mxu0 0.0
        %3217 = vmatpush1.msra.mxu0 0.0
        %3218 = vmatprep.subr.mxu0 0.0
        %3219 = vmatpush1.msra.mxu0 0.0
        %3220 = vmatprep.subr.mxu0 0.0
        %3221 = vmatpush1.msra.mxu0 0.0
        %3222 = vmatprep.subr.mxu0 0.0
        %3223 = vmatpush1.msra.mxu0 0.0
        %3224 = vmatprep.subr.mxu0 0.0
        %3225 = vmatpush1.msra.mxu0 0.0
        %3226 = vmatprep.subr.mxu0 0.0
        %3227 = vmatpush1.msra.mxu0 0.0
        %3228 = vmatprep.subr.mxu0 0.0
        %3229 = vmatpush1.msra.mxu0 0.0
        %3230 = vmatprep.subr.mxu0 0.0
        %3231 = vmatpush1.msra.mxu0 0.0
        %3232 = vmatprep.subr.mxu0 0.0
        %3233 = vmatpush1.msra.mxu0 0.0
        %3234 = vmatprep.mubr.f32.mxu0 0.0
        %v3235 = vand.u32 %v3006, 4294901760
        %v3236 = vsub.f32 %v3006, %v3235
        %3237 = vmatmul.mubr.f32.gmra.mrb[0].mxu0 %v3236
        %v3238 = vpop.f32.mrb[0].mxu0
        %v3239 = vadd.f32 %v3163, %v3238
        %v3240 = vpop.f32.mrb[0].mxu0
        %3241 = vdwg.mxu0
        %3242 = vmatprep.subr.mxu0 0.0
        %v3243 = vand.u32 %v493, 4294901760
        %3244 = vmatpush1.msra.mxu0 %v3243
        %3245 = vmatprep.subr.mxu0 0.0
        %v3246 = vand.u32 %v494, 4294901760
        %3247 = vmatpush1.msra.mxu0 %v3246
        %3248 = vmatprep.subr.mxu0 0.0
        %3249 = vmatpush1.msra.mxu0 0.0
        %3250 = vmatprep.subr.mxu0 0.0
        %3251 = vmatpush1.msra.mxu0 0.0
        %3252 = vmatprep.subr.mxu0 0.0
        %3253 = vmatpush1.msra.mxu0 0.0
        %3254 = vmatprep.subr.mxu0 0.0
        %3255 = vmatpush1.msra.mxu0 0.0
        %3256 = vmatprep.subr.mxu0 0.0
        %3257 = vmatpush1.msra.mxu0 0.0
        %3258 = vmatprep.subr.mxu0 0.0
        %3259 = vmatpush1.msra.mxu0 0.0
        %3260 = vmatprep.subr.mxu0 0.0
        %3261 = vmatpush1.msra.mxu0 0.0
        %3262 = vmatprep.subr.mxu0 0.0
        %3263 = vmatpush1.msra.mxu0 0.0
        %3264 = vmatprep.subr.mxu0 0.0
        %3265 = vmatpush1.msra.mxu0 0.0
        %3266 = vmatprep.subr.mxu0 0.0
        %3267 = vmatpush1.msra.mxu0 0.0
        %3268 = vmatprep.subr.mxu0 0.0
        %3269 = vmatpush1.msra.mxu0 0.0
        %3270 = vmatprep.subr.mxu0 0.0
        %3271 = vmatpush1.msra.mxu0 0.0
        %3272 = vmatprep.subr.mxu0 0.0
        %3273 = vmatpush1.msra.mxu0 0.0
        %3274 = vmatprep.subr.mxu0 0.0
        %3275 = vmatpush1.msra.mxu0 0.0
        %3276 = vmatprep.subr.mxu0 0.0
        %3277 = vmatpush1.msra.mxu0 0.0
        %3278 = vmatprep.subr.mxu0 0.0
        %3279 = vmatpush1.msra.mxu0 0.0
        %3280 = vmatprep.subr.mxu0 0.0
        %3281 = vmatpush1.msra.mxu0 0.0
        %3282 = vmatprep.subr.mxu0 0.0
        %3283 = vmatpush1.msra.mxu0 0.0
        %3284 = vmatprep.subr.mxu0 0.0
        %3285 = vmatpush1.msra.mxu0 0.0
        %3286 = vmatprep.subr.mxu0 0.0
        %3287 = vmatpush1.msra.mxu0 0.0
        %3288 = vmatprep.subr.mxu0 0.0
        %3289 = vmatpush1.msra.mxu0 0.0
        %3290 = vmatprep.subr.mxu0 0.0
        %3291 = vmatpush1.msra.mxu0 0.0
        %3292 = vmatprep.subr.mxu0 0.0
        %3293 = vmatpush1.msra.mxu0 0.0
        %3294 = vmatprep.subr.mxu0 0.0
        %3295 = vmatpush1.msra.mxu0 0.0
        %3296 = vmatprep.subr.mxu0 0.0
        %3297 = vmatpush1.msra.mxu0 0.0
        %3298 = vmatprep.subr.mxu0 0.0
        %3299 = vmatpush1.msra.mxu0 0.0
        %3300 = vmatprep.subr.mxu0 0.0
        %3301 = vmatpush1.msra.mxu0 0.0
        %3302 = vmatprep.subr.mxu0 0.0
        %3303 = vmatpush1.msra.mxu0 0.0
        %3304 = vmatprep.subr.mxu0 0.0
        %3305 = vmatpush1.msra.mxu0 0.0
        %3306 = vmatprep.subr.mxu0 0.0
        %3307 = vmatpush1.msra.mxu0 0.0
        %3308 = vmatprep.mubr.f32.mxu0 0.0
        %v3309 = vand.u32 %v3006, 4294901760
        %v3310 = vsub.f32 %v3006, %v3309
        %v3311 = vand.u32 %v3310, 4294901760
        %3312 = vmatmul.mubr.f32.gmra.mrb[0].mxu0 %v3311
        %v3313 = vpop.f32.mrb[0].mxu0
        %v3314 = vadd.f32 %v3239, %v3313
        %v3315 = vpop.f32.mrb[0].mxu0
        %3316 = vdwg.mxu0
        %3317 = vmatprep.subr.mxu0 0.0
        %v3318 = vand.u32 %v493, 4294901760
        %v3319 = vsub.f32 %v493, %v3318
        %v3320 = vand.u32 %v3319, 4294901760
        %3321 = vmatpush1.msra.mxu0 %v3320
        %3322 = vmatprep.subr.mxu0 0.0
        %v3323 = vand.u32 %v494, 4294901760
        %v3324 = vsub.f32 %v494, %v3323
        %v3325 = vand.u32 %v3324, 4294901760
        %3326 = vmatpush1.msra.mxu0 %v3325
        %3327 = vmatprep.subr.mxu0 0.0
        %3328 = vmatpush1.msra.mxu0 0.0
        %3329 = vmatprep.subr.mxu0 0.0
        %3330 = vmatpush1.msra.mxu0 0.0
        %3331 = vmatprep.subr.mxu0 0.0
        %3332 = vmatpush1.msra.mxu0 0.0
        %3333 = vmatprep.subr.mxu0 0.0
        %3334 = vmatpush1.msra.mxu0 0.0
        %3335 = vmatprep.subr.mxu0 0.0
        %3336 = vmatpush1.msra.mxu0 0.0
        %3337 = vmatprep.subr.mxu0 0.0
        %3338 = vmatpush1.msra.mxu0 0.0
        %3339 = vmatprep.subr.mxu0 0.0
        %3340 = vmatpush1.msra.mxu0 0.0
        %3341 = vmatprep.subr.mxu0 0.0
        %3342 = vmatpush1.msra.mxu0 0.0
        %3343 = vmatprep.subr.mxu0 0.0
        %3344 = vmatpush1.msra.mxu0 0.0
        %3345 = vmatprep.subr.mxu0 0.0
        %3346 = vmatpush1.msra.mxu0 0.0
        %3347 = vmatprep.subr.mxu0 0.0
        %3348 = vmatpush1.msra.mxu0 0.0
        %3349 = vmatprep.subr.mxu0 0.0
        %3350 = vmatpush1.msra.mxu0 0.0
        %3351 = vmatprep.subr.mxu0 0.0
        %3352 = vmatpush1.msra.mxu0 0.0
        %3353 = vmatprep.subr.mxu0 0.0
        %3354 = vmatpush1.msra.mxu0 0.0
        %3355 = vmatprep.subr.mxu0 0.0
        %3356 = vmatpush1.msra.mxu0 0.0
        %3357 = vmatprep.subr.mxu0 0.0
        %3358 = vmatpush1.msra.mxu0 0.0
        %3359 = vmatprep.subr.mxu0 0.0
        %3360 = vmatpush1.msra.mxu0 0.0
        %3361 = vmatprep.subr.mxu0 0.0
        %3362 = vmatpush1.msra.mxu0 0.0
        %3363 = vmatprep.subr.mxu0 0.0
        %3364 = vmatpush1.msra.mxu0 0.0
        %3365 = vmatprep.subr.mxu0 0.0
        %3366 = vmatpush1.msra.mxu0 0.0
        %3367 = vmatprep.subr.mxu0 0.0
        %3368 = vmatpush1.msra.mxu0 0.0
        %3369 = vmatprep.subr.mxu0 0.0
        %3370 = vmatpush1.msra.mxu0 0.0
        %3371 = vmatprep.subr.mxu0 0.0
        %3372 = vmatpush1.msra.mxu0 0.0
        %3373 = vmatprep.subr.mxu0 0.0
        %3374 = vmatpush1.msra.mxu0 0.0
        %3375 = vmatprep.subr.mxu0 0.0
        %3376 = vmatpush1.msra.mxu0 0.0
        %3377 = vmatprep.subr.mxu0 0.0
        %3378 = vmatpush1.msra.mxu0 0.0
        %3379 = vmatprep.subr.mxu0 0.0
        %3380 = vmatpush1.msra.mxu0 0.0
        %3381 = vmatprep.subr.mxu0 0.0
        %3382 = vmatpush1.msra.mxu0 0.0
        %3383 = vmatprep.subr.mxu0 0.0
        %3384 = vmatpush1.msra.mxu0 0.0
        %3385 = vmatprep.subr.mxu0 0.0
        %3386 = vmatpush1.msra.mxu0 0.0
        %3387 = vmatprep.mubr.f32.mxu0 0.0
        %v3388 = vand.u32 %v3006, 4294901760
        %3389 = vmatmul.mubr.f32.gmra.mrb[0].mxu0 %v3388
        %v3390 = vpop.f32.mrb[0].mxu0
        %v3391 = vadd.f32 %v3314, %v3390
        %v3392 = vpop.f32.mrb[0].mxu0
        %3393 = vdwg.mxu0
        %3394 = vmatprep.subr.mxu0 0.0
        %v3395 = vand.u32 %v493, 4294901760
        %3396 = vmatpush1.msra.mxu0 %v3395
        %3397 = vmatprep.subr.mxu0 0.0
        %v3398 = vand.u32 %v494, 4294901760
        %3399 = vmatpush1.msra.mxu0 %v3398
        %3400 = vmatprep.subr.mxu0 0.0
        %3401 = vmatpush1.msra.mxu0 0.0
        %3402 = vmatprep.subr.mxu0 0.0
        %3403 = vmatpush1.msra.mxu0 0.0
        %3404 = vmatprep.subr.mxu0 0.0
        %3405 = vmatpush1.msra.mxu0 0.0
        %3406 = vmatprep.subr.mxu0 0.0
        %3407 = vmatpush1.msra.mxu0 0.0
        %3408 = vmatprep.subr.mxu0 0.0
        %3409 = vmatpush1.msra.mxu0 0.0
        %3410 = vmatprep.subr.mxu0 0.0
        %3411 = vmatpush1.msra.mxu0 0.0
        %3412 = vmatprep.subr.mxu0 0.0
        %3413 = vmatpush1.msra.mxu0 0.0
        %3414 = vmatprep.subr.mxu0 0.0
        %3415 = vmatpush1.msra.mxu0 0.0
        %3416 = vmatprep.subr.mxu0 0.0
        %3417 = vmatpush1.msra.mxu0 0.0
        %3418 = vmatprep.subr.mxu0 0.0
        %3419 = vmatpush1.msra.mxu0 0.0
        %3420 = vmatprep.subr.mxu0 0.0
        %3421 = vmatpush1.msra.mxu0 0.0
        %3422 = vmatprep.subr.mxu0 0.0
        %3423 = vmatpush1.msra.mxu0 0.0
        %3424 = vmatprep.subr.mxu0 0.0
        %3425 = vmatpush1.msra.mxu0 0.0
        %3426 = vmatprep.subr.mxu0 0.0
        %3427 = vmatpush1.msra.mxu0 0.0
        %3428 = vmatprep.subr.mxu0 0.0
        %3429 = vmatpush1.msra.mxu0 0.0
        %3430 = vmatprep.subr.mxu0 0.0
        %3431 = vmatpush1.msra.mxu0 0.0
        %3432 = vmatprep.subr.mxu0 0.0
        %3433 = vmatpush1.msra.mxu0 0.0
        %3434 = vmatprep.subr.mxu0 0.0
        %3435 = vmatpush1.msra.mxu0 0.0
        %3436 = vmatprep.subr.mxu0 0.0
        %3437 = vmatpush1.msra.mxu0 0.0
        %3438 = vmatprep.subr.mxu0 0.0
        %3439 = vmatpush1.msra.mxu0 0.0
        %3440 = vmatprep.subr.mxu0 0.0
        %3441 = vmatpush1.msra.mxu0 0.0
        %3442 = vmatprep.subr.mxu0 0.0
        %3443 = vmatpush1.msra.mxu0 0.0
        %3444 = vmatprep.subr.mxu0 0.0
        %3445 = vmatpush1.msra.mxu0 0.0
        %3446 = vmatprep.subr.mxu0 0.0
        %3447 = vmatpush1.msra.mxu0 0.0
        %3448 = vmatprep.subr.mxu0 0.0
        %3449 = vmatpush1.msra.mxu0 0.0
        %3450 = vmatprep.subr.mxu0 0.0
        %3451 = vmatpush1.msra.mxu0 0.0
        %3452 = vmatprep.subr.mxu0 0.0
        %3453 = vmatpush1.msra.mxu0 0.0
        %3454 = vmatprep.subr.mxu0 0.0
        %3455 = vmatpush1.msra.mxu0 0.0
        %3456 = vmatprep.subr.mxu0 0.0
        %3457 = vmatpush1.msra.mxu0 0.0
        %3458 = vmatprep.subr.mxu0 0.0
        %3459 = vmatpush1.msra.mxu0 0.0
        %3460 = vmatprep.mubr.f32.mxu0 0.0
        %v3461 = vand.u32 %v3006, 4294901760
        %3462 = vmatmul.mubr.f32.gmra.mrb[0].mxu0 %v3461
        %v3463 = vpop.f32.mrb[0].mxu0
        %v3464 = vadd.f32 %v3391, %v3463
        %v3465 = vpop.f32.mrb[0].mxu0
        %3466 = vdwg.mxu0
        %v3467 = vmul.f32 %v1519, %v1519
        %v3468 = vmul.f32 %v1520, %v1520
        %3469 = vmatprep.subr.mxu0 0.0
        %v3470 = vand.u32 %v3467, 4294901760
        %3471 = vmatpush1.msra.mxu0 %v3470
        %3472 = vmatprep.subr.mxu0 0.0
        %v3473 = vand.u32 %v3468, 4294901760
        %3474 = vmatpush1.msra.mxu0 %v3473
        %3475 = vmatprep.subr.mxu0 0.0
        %3476 = vmatpush1.msra.mxu0 0.0
        %3477 = vmatprep.subr.mxu0 0.0
        %3478 = vmatpush1.msra.mxu0 0.0
        %3479 = vmatprep.subr.mxu0 0.0
        %3480 = vmatpush1.msra.mxu0 0.0
        %3481 = vmatprep.subr.mxu0 0.0
        %3482 = vmatpush1.msra.mxu0 0.0
        %3483 = vmatprep.subr.mxu0 0.0
        %3484 = vmatpush1.msra.mxu0 0.0
        %3485 = vmatprep.subr.mxu0 0.0
        %3486 = vmatpush1.msra.mxu0 0.0
        %3487 = vmatprep.subr.mxu0 0.0
        %3488 = vmatpush1.msra.mxu0 0.0
        %3489 = vmatprep.subr.mxu0 0.0
        %3490 = vmatpush1.msra.mxu0 0.0
        %3491 = vmatprep.subr.mxu0 0.0
        %3492 = vmatpush1.msra.mxu0 0.0
        %3493 = vmatprep.subr.mxu0 0.0
        %3494 = vmatpush1.msra.mxu0 0.0
        %3495 = vmatprep.subr.mxu0 0.0
        %3496 = vmatpush1.msra.mxu0 0.0
        %3497 = vmatprep.subr.mxu0 0.0
        %3498 = vmatpush1.msra.mxu0 0.0
        %3499 = vmatprep.subr.mxu0 0.0
        %3500 = vmatpush1.msra.mxu0 0.0
        %3501 = vmatprep.subr.mxu0 0.0
        %3502 = vmatpush1.msra.mxu0 0.0
        %3503 = vmatprep.subr.mxu0 0.0
        %3504 = vmatpush1.msra.mxu0 0.0
        %3505 = vmatprep.subr.mxu0 0.0
        %3506 = vmatpush1.msra.mxu0 0.0
        %3507 = vmatprep.subr.mxu0 0.0
        %3508 = vmatpush1.msra.mxu0 0.0
        %3509 = vmatprep.subr.mxu0 0.0
        %3510 = vmatpush1.msra.mxu0 0.0
        %3511 = vmatprep.subr.mxu0 0.0
        %3512 = vmatpush1.msra.mxu0 0.0
        %3513 = vmatprep.subr.mxu0 0.0
        %3514 = vmatpush1.msra.mxu0 0.0
        %3515 = vmatprep.subr.mxu0 0.0
        %3516 = vmatpush1.msra.mxu0 0.0
        %3517 = vmatprep.subr.mxu0 0.0
        %3518 = vmatpush1.msra.mxu0 0.0
        %3519 = vmatprep.subr.mxu0 0.0
        %3520 = vmatpush1.msra.mxu0 0.0
        %3521 = vmatprep.subr.mxu0 0.0
        %3522 = vmatpush1.msra.mxu0 0.0
        %3523 = vmatprep.subr.mxu0 0.0
        %3524 = vmatpush1.msra.mxu0 0.0
        %3525 = vmatprep.subr.mxu0 0.0
        %3526 = vmatpush1.msra.mxu0 0.0
        %3527 = vmatprep.subr.mxu0 0.0
        %3528 = vmatpush1.msra.mxu0 0.0
        %3529 = vmatprep.subr.mxu0 0.0
        %3530 = vmatpush1.msra.mxu0 0.0
        %3531 = vmatprep.subr.mxu0 0.0
        %3532 = vmatpush1.msra.mxu0 0.0
        %3533 = vmatprep.subr.mxu0 0.0
        %3534 = vmatpush1.msra.mxu0 0.0
        %3535 = vmatprep.mubr.f32.mxu0 0.0
        %v3536 = vand.u32 %v2544, 4294901760
        %v3537 = vsub.f32 %v2544, %v3536
        %v3538 = vand.u32 %v3537, 4294901760
        %v3539 = vsub.f32 %v3537, %v3538
        %v3540 = vand.u32 %v3539, 4294901760
        %3541 = vmatmul.mubr.f32.gmra.mrb[0].mxu0 %v3540
        %v3542 = vpop.f32.mrb[0].mxu0
        %v3543 = vadd.f32 0.0, %v3542
        %v3544 = vpop.f32.mrb[0].mxu0
        %3545 = vdwg.mxu0
        %3546 = vmatprep.subr.mxu0 0.0
        %v3547 = vand.u32 %v3467, 4294901760
        %v3548 = vsub.f32 %v3467, %v3547
        %v3549 = vand.u32 %v3548, 4294901760
        %v3550 = vsub.f32 %v3548, %v3549
        %v3551 = vand.u32 %v3550, 4294901760
        %3552 = vmatpush1.msra.mxu0 %v3551
        %3553 = vmatprep.subr.mxu0 0.0
        %v3554 = vand.u32 %v3468, 4294901760
        %v3555 = vsub.f32 %v3468, %v3554
        %v3556 = vand.u32 %v3555, 4294901760
        %v3557 = vsub.f32 %v3555, %v3556
        %v3558 = vand.u32 %v3557, 4294901760
        %3559 = vmatpush1.msra.mxu0 %v3558
        %3560 = vmatprep.subr.mxu0 0.0
        %3561 = vmatpush1.msra.mxu0 0.0
        %3562 = vmatprep.subr.mxu0 0.0
        %3563 = vmatpush1.msra.mxu0 0.0
        %3564 = vmatprep.subr.mxu0 0.0
        %3565 = vmatpush1.msra.mxu0 0.0
        %3566 = vmatprep.subr.mxu0 0.0
        %3567 = vmatpush1.msra.mxu0 0.0
        %3568 = vmatprep.subr.mxu0 0.0
        %3569 = vmatpush1.msra.mxu0 0.0
        %3570 = vmatprep.subr.mxu0 0.0
        %3571 = vmatpush1.msra.mxu0 0.0
        %3572 = vmatprep.subr.mxu0 0.0
        %3573 = vmatpush1.msra.mxu0 0.0
        %3574 = vmatprep.subr.mxu0 0.0
        %3575 = vmatpush1.msra.mxu0 0.0
        %3576 = vmatprep.subr.mxu0 0.0
        %3577 = vmatpush1.msra.mxu0 0.0
        %3578 = vmatprep.subr.mxu0 0.0
        %3579 = vmatpush1.msra.mxu0 0.0
        %3580 = vmatprep.subr.mxu0 0.0
        %3581 = vmatpush1.msra.mxu0 0.0
        %3582 = vmatprep.subr.mxu0 0.0
        %3583 = vmatpush1.msra.mxu0 0.0
        %3584 = vmatprep.subr.mxu0 0.0
        %3585 = vmatpush1.msra.mxu0 0.0
        %3586 = vmatprep.subr.mxu0 0.0
        %3587 = vmatpush1.msra.mxu0 0.0
        %3588 = vmatprep.subr.mxu0 0.0
        %3589 = vmatpush1.msra.mxu0 0.0
        %3590 = vmatprep.subr.mxu0 0.0
        %3591 = vmatpush1.msra.mxu0 0.0
        %3592 = vmatprep.subr.mxu0 0.0
        %3593 = vmatpush1.msra.mxu0 0.0
        %3594 = vmatprep.subr.mxu0 0.0
        %3595 = vmatpush1.msra.mxu0 0.0
        %3596 = vmatprep.subr.mxu0 0.0
        %3597 = vmatpush1.msra.mxu0 0.0
        %3598 = vmatprep.subr.mxu0 0.0
        %3599 = vmatpush1.msra.mxu0 0.0
        %3600 = vmatprep.subr.mxu0 0.0
        %3601 = vmatpush1.msra.mxu0 0.0
        %3602 = vmatprep.subr.mxu0 0.0
        %3603 = vmatpush1.msra.mxu0 0.0
        %3604 = vmatprep.subr.mxu0 0.0
        %3605 = vmatpush1.msra.mxu0 0.0
        %3606 = vmatprep.subr.mxu0 0.0
        %3607 = vmatpush1.msra.mxu0 0.0
        %3608 = vmatprep.subr.mxu0 0.0
        %3609 = vmatpush1.msra.mxu0 0.0
        %3610 = vmatprep.subr.mxu0 0.0
        %3611 = vmatpush1.msra.mxu0 0.0
        %3612 = vmatprep.subr.mxu0 0.0
        %3613 = vmatpush1.msra.mxu0 0.0
        %3614 = vmatprep.subr.mxu0 0.0
        %3615 = vmatpush1.msra.mxu0 0.0
        %3616 = vmatprep.subr.mxu0 0.0
        %3617 = vmatpush1.msra.mxu0 0.0
        %3618 = vmatprep.subr.mxu0 0.0
        %3619 = vmatpush1.msra.mxu0 0.0
        %3620 = vmatprep.mubr.f32.mxu0 0.0
        %v3621 = vand.u32 %v2544, 4294901760
        %3622 = vmatmul.mubr.f32.gmra.mrb[0].mxu0 %v3621
        %v3623 = vpop.f32.mrb[0].mxu0
        %v3624 = vadd.f32 %v3543, %v3623
        %v3625 = vpop.f32.mrb[0].mxu0
        %3626 = vdwg.mxu0
        %3627 = vmatprep.subr.mxu0 0.0
        %v3628 = vand.u32 %v3467, 4294901760
        %v3629 = vsub.f32 %v3467, %v3628
        %3630 = vmatpush1.msra.mxu0 %v3629
        %3631 = vmatprep.subr.mxu0 0.0
        %v3632 = vand.u32 %v3468, 4294901760
        %v3633 = vsub.f32 %v3468, %v3632
        %3634 = vmatpush1.msra.mxu0 %v3633
        %3635 = vmatprep.subr.mxu0 0.0
        %3636 = vmatpush1.msra.mxu0 0.0
        %3637 = vmatprep.subr.mxu0 0.0
        %3638 = vmatpush1.msra.mxu0 0.0
        %3639 = vmatprep.subr.mxu0 0.0
        %3640 = vmatpush1.msra.mxu0 0.0
        %3641 = vmatprep.subr.mxu0 0.0
        %3642 = vmatpush1.msra.mxu0 0.0
        %3643 = vmatprep.subr.mxu0 0.0
        %3644 = vmatpush1.msra.mxu0 0.0
        %3645 = vmatprep.subr.mxu0 0.0
        %3646 = vmatpush1.msra.mxu0 0.0
        %3647 = vmatprep.subr.mxu0 0.0
        %3648 = vmatpush1.msra.mxu0 0.0
        %3649 = vmatprep.subr.mxu0 0.0
        %3650 = vmatpush1.msra.mxu0 0.0
        %3651 = vmatprep.subr.mxu0 0.0
        %3652 = vmatpush1.msra.mxu0 0.0
        %3653 = vmatprep.subr.mxu0 0.0
        %3654 = vmatpush1.msra.mxu0 0.0
        %3655 = vmatprep.subr.mxu0 0.0
        %3656 = vmatpush1.msra.mxu0 0.0
        %3657 = vmatprep.subr.mxu0 0.0
        %3658 = vmatpush1.msra.mxu0 0.0
        %3659 = vmatprep.subr.mxu0 0.0
        %3660 = vmatpush1.msra.mxu0 0.0
        %3661 = vmatprep.subr.mxu0 0.0
        %3662 = vmatpush1.msra.mxu0 0.0
        %3663 = vmatprep.subr.mxu0 0.0
        %3664 = vmatpush1.msra.mxu0 0.0
        %3665 = vmatprep.subr.mxu0 0.0
        %3666 = vmatpush1.msra.mxu0 0.0
        %3667 = vmatprep.subr.mxu0 0.0
        %3668 = vmatpush1.msra.mxu0 0.0
        %3669 = vmatprep.subr.mxu0 0.0
        %3670 = vmatpush1.msra.mxu0 0.0
        %3671 = vmatprep.subr.mxu0 0.0
        %3672 = vmatpush1.msra.mxu0 0.0
        %3673 = vmatprep.subr.mxu0 0.0
        %3674 = vmatpush1.msra.mxu0 0.0
        %3675 = vmatprep.subr.mxu0 0.0
        %3676 = vmatpush1.msra.mxu0 0.0
        %3677 = vmatprep.subr.mxu0 0.0
        %3678 = vmatpush1.msra.mxu0 0.0
        %3679 = vmatprep.subr.mxu0 0.0
        %3680 = vmatpush1.msra.mxu0 0.0
        %3681 = vmatprep.subr.mxu0 0.0
        %3682 = vmatpush1.msra.mxu0 0.0
        %3683 = vmatprep.subr.mxu0 0.0
        %3684 = vmatpush1.msra.mxu0 0.0
        %3685 = vmatprep.subr.mxu0 0.0
        %3686 = vmatpush1.msra.mxu0 0.0
        %3687 = vmatprep.subr.mxu0 0.0
        %3688 = vmatpush1.msra.mxu0 0.0
        %3689 = vmatprep.subr.mxu0 0.0
        %3690 = vmatpush1.msra.mxu0 0.0
        %3691 = vmatprep.subr.mxu0 0.0
        %3692 = vmatpush1.msra.mxu0 0.0
        %3693 = vmatprep.subr.mxu0 0.0
        %3694 = vmatpush1.msra.mxu0 0.0
        %3695 = vmatprep.mubr.f32.mxu0 0.0
        %v3696 = vand.u32 %v2544, 4294901760
        %v3697 = vsub.f32 %v2544, %v3696
        %3698 = vmatmul.mubr.f32.gmra.mrb[0].mxu0 %v3697
        %v3699 = vpop.f32.mrb[0].mxu0
        %v3700 = vadd.f32 %v3624, %v3699
        %v3701 = vpop.f32.mrb[0].mxu0
        %3702 = vdwg.mxu0
        %3703 = vmatprep.subr.mxu0 0.0
        %v3704 = vand.u32 %v3467, 4294901760
        %3705 = vmatpush1.msra.mxu0 %v3704
        %3706 = vmatprep.subr.mxu0 0.0
        %v3707 = vand.u32 %v3468, 4294901760
        %3708 = vmatpush1.msra.mxu0 %v3707
        %3709 = vmatprep.subr.mxu0 0.0
        %3710 = vmatpush1.msra.mxu0 0.0
        %3711 = vmatprep.subr.mxu0 0.0
        %3712 = vmatpush1.msra.mxu0 0.0
        %3713 = vmatprep.subr.mxu0 0.0
        %3714 = vmatpush1.msra.mxu0 0.0
        %3715 = vmatprep.subr.mxu0 0.0
        %3716 = vmatpush1.msra.mxu0 0.0
        %3717 = vmatprep.subr.mxu0 0.0
        %3718 = vmatpush1.msra.mxu0 0.0
        %3719 = vmatprep.subr.mxu0 0.0
        %3720 = vmatpush1.msra.mxu0 0.0
        %3721 = vmatprep.subr.mxu0 0.0
        %3722 = vmatpush1.msra.mxu0 0.0
        %3723 = vmatprep.subr.mxu0 0.0
        %3724 = vmatpush1.msra.mxu0 0.0
        %3725 = vmatprep.subr.mxu0 0.0
        %3726 = vmatpush1.msra.mxu0 0.0
        %3727 = vmatprep.subr.mxu0 0.0
        %3728 = vmatpush1.msra.mxu0 0.0
        %3729 = vmatprep.subr.mxu0 0.0
        %3730 = vmatpush1.msra.mxu0 0.0
        %3731 = vmatprep.subr.mxu0 0.0
        %3732 = vmatpush1.msra.mxu0 0.0
        %3733 = vmatprep.subr.mxu0 0.0
        %3734 = vmatpush1.msra.mxu0 0.0
        %3735 = vmatprep.subr.mxu0 0.0
        %3736 = vmatpush1.msra.mxu0 0.0
        %3737 = vmatprep.subr.mxu0 0.0
        %3738 = vmatpush1.msra.mxu0 0.0
        %3739 = vmatprep.subr.mxu0 0.0
        %3740 = vmatpush1.msra.mxu0 0.0
        %3741 = vmatprep.subr.mxu0 0.0
        %3742 = vmatpush1.msra.mxu0 0.0
        %3743 = vmatprep.subr.mxu0 0.0
        %3744 = vmatpush1.msra.mxu0 0.0
        %3745 = vmatprep.subr.mxu0 0.0
        %3746 = vmatpush1.msra.mxu0 0.0
        %3747 = vmatprep.subr.mxu0 0.0
        %3748 = vmatpush1.msra.mxu0 0.0
        %3749 = vmatprep.subr.mxu0 0.0
        %3750 = vmatpush1.msra.mxu0 0.0
        %3751 = vmatprep.subr.mxu0 0.0
        %3752 = vmatpush1.msra.mxu0 0.0
        %3753 = vmatprep.subr.mxu0 0.0
        %3754 = vmatpush1.msra.mxu0 0.0
        %3755 = vmatprep.subr.mxu0 0.0
        %3756 = vmatpush1.msra.mxu0 0.0
        %3757 = vmatprep.subr.mxu0 0.0
        %3758 = vmatpush1.msra.mxu0 0.0
        %3759 = vmatprep.subr.mxu0 0.0
        %3760 = vmatpush1.msra.mxu0 0.0
        %3761 = vmatprep.subr.mxu0 0.0
        %3762 = vmatpush1.msra.mxu0 0.0
        %3763 = vmatprep.subr.mxu0 0.0
        %3764 = vmatpush1.msra.mxu0 0.0
        %3765 = vmatprep.subr.mxu0 0.0
        %3766 = vmatpush1.msra.mxu0 0.0
        %3767 = vmatprep.subr.mxu0 0.0
        %3768 = vmatpush1.msra.mxu0 0.0
        %3769 = vmatprep.mubr.f32.mxu0 0.0
        %v3770 = vand.u32 %v2544, 4294901760
        %v3771 = vsub.f32 %v2544, %v3770
        %v3772 = vand.u32 %v3771, 4294901760
        %3773 = vmatmul.mubr.f32.gmra.mrb[0].mxu0 %v3772
        %v3774 = vpop.f32.mrb[0].mxu0
        %v3775 = vadd.f32 %v3700, %v3774
        %v3776 = vpop.f32.mrb[0].mxu0
        %3777 = vdwg.mxu0
        %3778 = vmatprep.subr.mxu0 0.0
        %v3779 = vand.u32 %v3467, 4294901760
        %v3780 = vsub.f32 %v3467, %v3779
        %v3781 = vand.u32 %v3780, 4294901760
        %3782 = vmatpush1.msra.mxu0 %v3781
        %3783 = vmatprep.subr.mxu0 0.0
        %v3784 = vand.u32 %v3468, 4294901760
        %v3785 = vsub.f32 %v3468, %v3784
        %v3786 = vand.u32 %v3785, 4294901760
        %3787 = vmatpush1.msra.mxu0 %v3786
        %3788 = vmatprep.subr.mxu0 0.0
        %3789 = vmatpush1.msra.mxu0 0.0
        %3790 = vmatprep.subr.mxu0 0.0
        %3791 = vmatpush1.msra.mxu0 0.0
        %3792 = vmatprep.subr.mxu0 0.0
        %3793 = vmatpush1.msra.mxu0 0.0
        %3794 = vmatprep.subr.mxu0 0.0
        %3795 = vmatpush1.msra.mxu0 0.0
        %3796 = vmatprep.subr.mxu0 0.0
        %3797 = vmatpush1.msra.mxu0 0.0
        %3798 = vmatprep.subr.mxu0 0.0
        %3799 = vmatpush1.msra.mxu0 0.0
        %3800 = vmatprep.subr.mxu0 0.0
        %3801 = vmatpush1.msra.mxu0 0.0
        %3802 = vmatprep.subr.mxu0 0.0
        %3803 = vmatpush1.msra.mxu0 0.0
        %3804 = vmatprep.subr.mxu0 0.0
        %3805 = vmatpush1.msra.mxu0 0.0
        %3806 = vmatprep.subr.mxu0 0.0
        %3807 = vmatpush1.msra.mxu0 0.0
        %3808 = vmatprep.subr.mxu0 0.0
        %3809 = vmatpush1.msra.mxu0 0.0
        %3810 = vmatprep.subr.mxu0 0.0
        %3811 = vmatpush1.msra.mxu0 0.0
        %3812 = vmatprep.subr.mxu0 0.0
        %3813 = vmatpush1.msra.mxu0 0.0
        %3814 = vmatprep.subr.mxu0 0.0
        %3815 = vmatpush1.msra.mxu0 0.0
        %3816 = vmatprep.subr.mxu0 0.0
        %3817 = vmatpush1.msra.mxu0 0.0
        %3818 = vmatprep.subr.mxu0 0.0
        %3819 = vmatpush1.msra.mxu0 0.0
        %3820 = vmatprep.subr.mxu0 0.0
        %3821 = vmatpush1.msra.mxu0 0.0
        %3822 = vmatprep.subr.mxu0 0.0
        %3823 = vmatpush1.msra.mxu0 0.0
        %3824 = vmatprep.subr.mxu0 0.0
        %3825 = vmatpush1.msra.mxu0 0.0
        %3826 = vmatprep.subr.mxu0 0.0
        %3827 = vmatpush1.msra.mxu0 0.0
        %3828 = vmatprep.subr.mxu0 0.0
        %3829 = vmatpush1.msra.mxu0 0.0
        %3830 = vmatprep.subr.mxu0 0.0
        %3831 = vmatpush1.msra.mxu0 0.0
        %3832 = vmatprep.subr.mxu0 0.0
        %3833 = vmatpush1.msra.mxu0 0.0
        %3834 = vmatprep.subr.mxu0 0.0
        %3835 = vmatpush1.msra.mxu0 0.0
        %3836 = vmatprep.subr.mxu0 0.0
        %3837 = vmatpush1.msra.mxu0 0.0
        %3838 = vmatprep.subr.mxu0 0.0
        %3839 = vmatpush1.msra.mxu0 0.0
        %3840 = vmatprep.subr.mxu0 0.0
        %3841 = vmatpush1.msra.mxu0 0.0
        %3842 = vmatprep.subr.mxu0 0.0
        %3843 = vmatpush1.msra.mxu0 0.0
        %3844 = vmatprep.subr.mxu0 0.0
        %3845 = vmatpush1.msra.mxu0 0.0
        %3846 = vmatprep.subr.mxu0 0.0
        %3847 = vmatpush1.msra.mxu0 0.0
        %3848 = vmatprep.mubr.f32.mxu0 0.0
        %v3849 = vand.u32 %v2544, 4294901760
        %3850 = vmatmul.mubr.f32.gmra.mrb[0].mxu0 %v3849
        %v3851 = vpop.f32.mrb[0].mxu0
        %v3852 = vadd.f32 %v3775, %v3851
        %v3853 = vpop.f32.mrb[0].mxu0
        %3854 = vdwg.mxu0
        %3855 = vmatprep.subr.mxu0 0.0
        %v3856 = vand.u32 %v3467, 4294901760
        %3857 = vmatpush1.msra.mxu0 %v3856
        %3858 = vmatprep.subr.mxu0 0.0
        %v3859 = vand.u32 %v3468, 4294901760
        %3860 = vmatpush1.msra.mxu0 %v3859
        %3861 = vmatprep.subr.mxu0 0.0
        %3862 = vmatpush1.msra.mxu0 0.0
        %3863 = vmatprep.subr.mxu0 0.0
        %3864 = vmatpush1.msra.mxu0 0.0
        %3865 = vmatprep.subr.mxu0 0.0
        %3866 = vmatpush1.msra.mxu0 0.0
        %3867 = vmatprep.subr.mxu0 0.0
        %3868 = vmatpush1.msra.mxu0 0.0
        %3869 = vmatprep.subr.mxu0 0.0
        %3870 = vmatpush1.msra.mxu0 0.0
        %3871 = vmatprep.subr.mxu0 0.0
        %3872 = vmatpush1.msra.mxu0 0.0
        %3873 = vmatprep.subr.mxu0 0.0
        %3874 = vmatpush1.msra.mxu0 0.0
        %3875 = vmatprep.subr.mxu0 0.0
        %3876 = vmatpush1.msra.mxu0 0.0
        %3877 = vmatprep.subr.mxu0 0.0
        %3878 = vmatpush1.msra.mxu0 0.0
        %3879 = vmatprep.subr.mxu0 0.0
        %3880 = vmatpush1.msra.mxu0 0.0
        %3881 = vmatprep.subr.mxu0 0.0
        %3882 = vmatpush1.msra.mxu0 0.0
        %3883 = vmatprep.subr.mxu0 0.0
        %3884 = vmatpush1.msra.mxu0 0.0
        %3885 = vmatprep.subr.mxu0 0.0
        %3886 = vmatpush1.msra.mxu0 0.0
        %3887 = vmatprep.subr.mxu0 0.0
        %3888 = vmatpush1.msra.mxu0 0.0
        %3889 = vmatprep.subr.mxu0 0.0
        %3890 = vmatpush1.msra.mxu0 0.0
        %3891 = vmatprep.subr.mxu0 0.0
        %3892 = vmatpush1.msra.mxu0 0.0
        %3893 = vmatprep.subr.mxu0 0.0
        %3894 = vmatpush1.msra.mxu0 0.0
        %3895 = vmatprep.subr.mxu0 0.0
        %3896 = vmatpush1.msra.mxu0 0.0
        %3897 = vmatprep.subr.mxu0 0.0
        %3898 = vmatpush1.msra.mxu0 0.0
        %3899 = vmatprep.subr.mxu0 0.0
        %3900 = vmatpush1.msra.mxu0 0.0
        %3901 = vmatprep.subr.mxu0 0.0
        %3902 = vmatpush1.msra.mxu0 0.0
        %3903 = vmatprep.subr.mxu0 0.0
        %3904 = vmatpush1.msra.mxu0 0.0
        %3905 = vmatprep.subr.mxu0 0.0
        %3906 = vmatpush1.msra.mxu0 0.0
        %3907 = vmatprep.subr.mxu0 0.0
        %3908 = vmatpush1.msra.mxu0 0.0
        %3909 = vmatprep.subr.mxu0 0.0
        %3910 = vmatpush1.msra.mxu0 0.0
        %3911 = vmatprep.subr.mxu0 0.0
        %3912 = vmatpush1.msra.mxu0 0.0
        %3913 = vmatprep.subr.mxu0 0.0
        %3914 = vmatpush1.msra.mxu0 0.0
        %3915 = vmatprep.subr.mxu0 0.0
        %3916 = vmatpush1.msra.mxu0 0.0
        %3917 = vmatprep.subr.mxu0 0.0
        %3918 = vmatpush1.msra.mxu0 0.0
        %3919 = vmatprep.subr.mxu0 0.0
        %3920 = vmatpush1.msra.mxu0 0.0
        %3921 = vmatprep.mubr.f32.mxu0 0.0
        %v3922 = vand.u32 %v2544, 4294901760
        %3923 = vmatmul.mubr.f32.gmra.mrb[0].mxu0 %v3922
        %v3924 = vpop.f32.mrb[0].mxu0
        %v3925 = vadd.f32 %v3852, %v3924
        %v3926 = vpop.f32.mrb[0].mxu0
        %3927 = vdwg.mxu0
        %v3929 = vsel %vm499, %v3925, 0
        %3931 = vmatprep.subr.mxu0 0.0
        %v3932 = vand.u32 %v493, 4294901760
        %3933 = vmatpush1.msra.mxu0 %v3932
        %3934 = vmatprep.subr.mxu0 0.0
        %v3935 = vand.u32 %v494, 4294901760
        %3936 = vmatpush1.msra.mxu0 %v3935
        %3937 = vmatprep.subr.mxu0 0.0
        %3938 = vmatpush1.msra.mxu0 0.0
        %3939 = vmatprep.subr.mxu0 0.0
        %3940 = vmatpush1.msra.mxu0 0.0
        %3941 = vmatprep.subr.mxu0 0.0
        %3942 = vmatpush1.msra.mxu0 0.0
        %3943 = vmatprep.subr.mxu0 0.0
        %3944 = vmatpush1.msra.mxu0 0.0
        %3945 = vmatprep.subr.mxu0 0.0
        %3946 = vmatpush1.msra.mxu0 0.0
        %3947 = vmatprep.subr.mxu0 0.0
        %3948 = vmatpush1.msra.mxu0 0.0
        %3949 = vmatprep.subr.mxu0 0.0
        %3950 = vmatpush1.msra.mxu0 0.0
        %3951 = vmatprep.subr.mxu0 0.0
        %3952 = vmatpush1.msra.mxu0 0.0
        %3953 = vmatprep.subr.mxu0 0.0
        %3954 = vmatpush1.msra.mxu0 0.0
        %3955 = vmatprep.subr.mxu0 0.0
        %3956 = vmatpush1.msra.mxu0 0.0
        %3957 = vmatprep.subr.mxu0 0.0
        %3958 = vmatpush1.msra.mxu0 0.0
        %3959 = vmatprep.subr.mxu0 0.0
        %3960 = vmatpush1.msra.mxu0 0.0
        %3961 = vmatprep.subr.mxu0 0.0
        %3962 = vmatpush1.msra.mxu0 0.0
        %3963 = vmatprep.subr.mxu0 0.0
        %3964 = vmatpush1.msra.mxu0 0.0
        %3965 = vmatprep.subr.mxu0 0.0
        %3966 = vmatpush1.msra.mxu0 0.0
        %3967 = vmatprep.subr.mxu0 0.0
        %3968 = vmatpush1.msra.mxu0 0.0
        %3969 = vmatprep.subr.mxu0 0.0
        %3970 = vmatpush1.msra.mxu0 0.0
        %3971 = vmatprep.subr.mxu0 0.0
        %3972 = vmatpush1.msra.mxu0 0.0
        %3973 = vmatprep.subr.mxu0 0.0
        %3974 = vmatpush1.msra.mxu0 0.0
        %3975 = vmatprep.subr.mxu0 0.0
        %3976 = vmatpush1.msra.mxu0 0.0
        %3977 = vmatprep.subr.mxu0 0.0
        %3978 = vmatpush1.msra.mxu0 0.0
        %3979 = vmatprep.subr.mxu0 0.0
        %3980 = vmatpush1.msra.mxu0 0.0
        %3981 = vmatprep.subr.mxu0 0.0
        %3982 = vmatpush1.msra.mxu0 0.0
        %3983 = vmatprep.subr.mxu0 0.0
        %3984 = vmatpush1.msra.mxu0 0.0
        %3985 = vmatprep.subr.mxu0 0.0
        %3986 = vmatpush1.msra.mxu0 0.0
        %3987 = vmatprep.subr.mxu0 0.0
        %3988 = vmatpush1.msra.mxu0 0.0
        %3989 = vmatprep.subr.mxu0 0.0
        %3990 = vmatpush1.msra.mxu0 0.0
        %3991 = vmatprep.subr.mxu0 0.0
        %3992 = vmatpush1.msra.mxu0 0.0
        %3993 = vmatprep.subr.mxu0 0.0
        %3994 = vmatpush1.msra.mxu0 0.0
        %3995 = vmatprep.subr.mxu0 0.0
        %3996 = vmatpush1.msra.mxu0 0.0
        %3997 = vmatprep.mubr.f32.mxu0 0.0
        %v3998 = vand.u32 %v3929, 4294901760
        %v3999 = vsub.f32 %v3929, %v3998
        %v4000 = vand.u32 %v3999, 4294901760
        %v4001 = vsub.f32 %v3999, %v4000
        %v4002 = vand.u32 %v4001, 4294901760
        %4003 = vmatmul.mubr.f32.gmra.mrb[0].mxu0 %v4002
        %v4004 = vpop.f32.mrb[0].mxu0
        %v4005 = vadd.f32 0.0, %v4004
        %v4006 = vpop.f32.mrb[0].mxu0
        %4007 = vdwg.mxu0
        %4008 = vmatprep.subr.mxu0 0.0
        %v4009 = vand.u32 %v493, 4294901760
        %v4010 = vsub.f32 %v493, %v4009
        %v4011 = vand.u32 %v4010, 4294901760
        %v4012 = vsub.f32 %v4010, %v4011
        %v4013 = vand.u32 %v4012, 4294901760
        %4014 = vmatpush1.msra.mxu0 %v4013
        %4015 = vmatprep.subr.mxu0 0.0
        %v4016 = vand.u32 %v494, 4294901760
        %v4017 = vsub.f32 %v494, %v4016
        %v4018 = vand.u32 %v4017, 4294901760
        %v4019 = vsub.f32 %v4017, %v4018
        %v4020 = vand.u32 %v4019, 4294901760
        %4021 = vmatpush1.msra.mxu0 %v4020
        %4022 = vmatprep.subr.mxu0 0.0
        %4023 = vmatpush1.msra.mxu0 0.0
        %4024 = vmatprep.subr.mxu0 0.0
        %4025 = vmatpush1.msra.mxu0 0.0
        %4026 = vmatprep.subr.mxu0 0.0
        %4027 = vmatpush1.msra.mxu0 0.0
        %4028 = vmatprep.subr.mxu0 0.0
        %4029 = vmatpush1.msra.mxu0 0.0
        %4030 = vmatprep.subr.mxu0 0.0
        %4031 = vmatpush1.msra.mxu0 0.0
        %4032 = vmatprep.subr.mxu0 0.0
        %4033 = vmatpush1.msra.mxu0 0.0
        %4034 = vmatprep.subr.mxu0 0.0
        %4035 = vmatpush1.msra.mxu0 0.0
        %4036 = vmatprep.subr.mxu0 0.0
        %4037 = vmatpush1.msra.mxu0 0.0
        %4038 = vmatprep.subr.mxu0 0.0
        %4039 = vmatpush1.msra.mxu0 0.0
        %4040 = vmatprep.subr.mxu0 0.0
        %4041 = vmatpush1.msra.mxu0 0.0
        %4042 = vmatprep.subr.mxu0 0.0
        %4043 = vmatpush1.msra.mxu0 0.0
        %4044 = vmatprep.subr.mxu0 0.0
        %4045 = vmatpush1.msra.mxu0 0.0
        %4046 = vmatprep.subr.mxu0 0.0
        %4047 = vmatpush1.msra.mxu0 0.0
        %4048 = vmatprep.subr.mxu0 0.0
        %4049 = vmatpush1.msra.mxu0 0.0
        %4050 = vmatprep.subr.mxu0 0.0
        %4051 = vmatpush1.msra.mxu0 0.0
        %4052 = vmatprep.subr.mxu0 0.0
        %4053 = vmatpush1.msra.mxu0 0.0
        %4054 = vmatprep.subr.mxu0 0.0
        %4055 = vmatpush1.msra.mxu0 0.0
        %4056 = vmatprep.subr.mxu0 0.0
        %4057 = vmatpush1.msra.mxu0 0.0
        %4058 = vmatprep.subr.mxu0 0.0
        %4059 = vmatpush1.msra.mxu0 0.0
        %4060 = vmatprep.subr.mxu0 0.0
        %4061 = vmatpush1.msra.mxu0 0.0
        %4062 = vmatprep.subr.mxu0 0.0
        %4063 = vmatpush1.msra.mxu0 0.0
        %4064 = vmatprep.subr.mxu0 0.0
        %4065 = vmatpush1.msra.mxu0 0.0
        %4066 = vmatprep.subr.mxu0 0.0
        %4067 = vmatpush1.msra.mxu0 0.0
        %4068 = vmatprep.subr.mxu0 0.0
        %4069 = vmatpush1.msra.mxu0 0.0
        %4070 = vmatprep.subr.mxu0 0.0
        %4071 = vmatpush1.msra.mxu0 0.0
        %4072 = vmatprep.subr.mxu0 0.0
        %4073 = vmatpush1.msra.mxu0 0.0
        %4074 = vmatprep.subr.mxu0 0.0
        %4075 = vmatpush1.msra.mxu0 0.0
        %4076 = vmatprep.subr.mxu0 0.0
        %4077 = vmatpush1.msra.mxu0 0.0
        %4078 = vmatprep.subr.mxu0 0.0
        %4079 = vmatpush1.msra.mxu0 0.0
        %4080 = vmatprep.subr.mxu0 0.0
        %4081 = vmatpush1.msra.mxu0 0.0
        %4082 = vmatprep.mubr.f32.mxu0 0.0
        %v4083 = vand.u32 %v3929, 4294901760
        %4084 = vmatmul.mubr.f32.gmra.mrb[0].mxu0 %v4083
        %v4085 = vpop.f32.mrb[0].mxu0
        %v4086 = vadd.f32 %v4005, %v4085
        %v4087 = vpop.f32.mrb[0].mxu0
        %4088 = vdwg.mxu0
        %4089 = vmatprep.subr.mxu0 0.0
        %v4090 = vand.u32 %v493, 4294901760
        %v4091 = vsub.f32 %v493, %v4090
        %4092 = vmatpush1.msra.mxu0 %v4091
        %4093 = vmatprep.subr.mxu0 0.0
        %v4094 = vand.u32 %v494, 4294901760
        %v4095 = vsub.f32 %v494, %v4094
        %4096 = vmatpush1.msra.mxu0 %v4095
        %4097 = vmatprep.subr.mxu0 0.0
        %4098 = vmatpush1.msra.mxu0 0.0
        %4099 = vmatprep.subr.mxu0 0.0
        %4100 = vmatpush1.msra.mxu0 0.0
        %4101 = vmatprep.subr.mxu0 0.0
        %4102 = vmatpush1.msra.mxu0 0.0
        %4103 = vmatprep.subr.mxu0 0.0
        %4104 = vmatpush1.msra.mxu0 0.0
        %4105 = vmatprep.subr.mxu0 0.0
        %4106 = vmatpush1.msra.mxu0 0.0
        %4107 = vmatprep.subr.mxu0 0.0
        %4108 = vmatpush1.msra.mxu0 0.0
        %4109 = vmatprep.subr.mxu0 0.0
        %4110 = vmatpush1.msra.mxu0 0.0
        %4111 = vmatprep.subr.mxu0 0.0
        %4112 = vmatpush1.msra.mxu0 0.0
        %4113 = vmatprep.subr.mxu0 0.0
        %4114 = vmatpush1.msra.mxu0 0.0
        %4115 = vmatprep.subr.mxu0 0.0
        %4116 = vmatpush1.msra.mxu0 0.0
        %4117 = vmatprep.subr.mxu0 0.0
        %4118 = vmatpush1.msra.mxu0 0.0
        %4119 = vmatprep.subr.mxu0 0.0
        %4120 = vmatpush1.msra.mxu0 0.0
        %4121 = vmatprep.subr.mxu0 0.0
        %4122 = vmatpush1.msra.mxu0 0.0
        %4123 = vmatprep.subr.mxu0 0.0
        %4124 = vmatpush1.msra.mxu0 0.0
        %4125 = vmatprep.subr.mxu0 0.0
        %4126 = vmatpush1.msra.mxu0 0.0
        %4127 = vmatprep.subr.mxu0 0.0
        %4128 = vmatpush1.msra.mxu0 0.0
        %4129 = vmatprep.subr.mxu0 0.0
        %4130 = vmatpush1.msra.mxu0 0.0
        %4131 = vmatprep.subr.mxu0 0.0
        %4132 = vmatpush1.msra.mxu0 0.0
        %4133 = vmatprep.subr.mxu0 0.0
        %4134 = vmatpush1.msra.mxu0 0.0
        %4135 = vmatprep.subr.mxu0 0.0
        %4136 = vmatpush1.msra.mxu0 0.0
        %4137 = vmatprep.subr.mxu0 0.0
        %4138 = vmatpush1.msra.mxu0 0.0
        %4139 = vmatprep.subr.mxu0 0.0
        %4140 = vmatpush1.msra.mxu0 0.0
        %4141 = vmatprep.subr.mxu0 0.0
        %4142 = vmatpush1.msra.mxu0 0.0
        %4143 = vmatprep.subr.mxu0 0.0
        %4144 = vmatpush1.msra.mxu0 0.0
        %4145 = vmatprep.subr.mxu0 0.0
        %4146 = vmatpush1.msra.mxu0 0.0
        %4147 = vmatprep.subr.mxu0 0.0
        %4148 = vmatpush1.msra.mxu0 0.0
        %4149 = vmatprep.subr.mxu0 0.0
        %4150 = vmatpush1.msra.mxu0 0.0
        %4151 = vmatprep.subr.mxu0 0.0
        %4152 = vmatpush1.msra.mxu0 0.0
        %4153 = vmatprep.subr.mxu0 0.0
        %4154 = vmatpush1.msra.mxu0 0.0
        %4155 = vmatprep.subr.mxu0 0.0
        %4156 = vmatpush1.msra.mxu0 0.0
        %4157 = vmatprep.mubr.f32.mxu0 0.0
        %v4158 = vand.u32 %v3929, 4294901760
        %v4159 = vsub.f32 %v3929, %v4158
        %4160 = vmatmul.mubr.f32.gmra.mrb[0].mxu0 %v4159
        %v4161 = vpop.f32.mrb[0].mxu0
        %v4162 = vadd.f32 %v4086, %v4161
        %v4163 = vpop.f32.mrb[0].mxu0
        %4164 = vdwg.mxu0
        %4165 = vmatprep.subr.mxu0 0.0
        %v4166 = vand.u32 %v493, 4294901760
        %4167 = vmatpush1.msra.mxu0 %v4166
        %4168 = vmatprep.subr.mxu0 0.0
        %v4169 = vand.u32 %v494, 4294901760
        %4170 = vmatpush1.msra.mxu0 %v4169
        %4171 = vmatprep.subr.mxu0 0.0
        %4172 = vmatpush1.msra.mxu0 0.0
        %4173 = vmatprep.subr.mxu0 0.0
        %4174 = vmatpush1.msra.mxu0 0.0
        %4175 = vmatprep.subr.mxu0 0.0
        %4176 = vmatpush1.msra.mxu0 0.0
        %4177 = vmatprep.subr.mxu0 0.0
        %4178 = vmatpush1.msra.mxu0 0.0
        %4179 = vmatprep.subr.mxu0 0.0
        %4180 = vmatpush1.msra.mxu0 0.0
        %4181 = vmatprep.subr.mxu0 0.0
        %4182 = vmatpush1.msra.mxu0 0.0
        %4183 = vmatprep.subr.mxu0 0.0
        %4184 = vmatpush1.msra.mxu0 0.0
        %4185 = vmatprep.subr.mxu0 0.0
        %4186 = vmatpush1.msra.mxu0 0.0
        %4187 = vmatprep.subr.mxu0 0.0
        %4188 = vmatpush1.msra.mxu0 0.0
        %4189 = vmatprep.subr.mxu0 0.0
        %4190 = vmatpush1.msra.mxu0 0.0
        %4191 = vmatprep.subr.mxu0 0.0
        %4192 = vmatpush1.msra.mxu0 0.0
        %4193 = vmatprep.subr.mxu0 0.0
        %4194 = vmatpush1.msra.mxu0 0.0
        %4195 = vmatprep.subr.mxu0 0.0
        %4196 = vmatpush1.msra.mxu0 0.0
        %4197 = vmatprep.subr.mxu0 0.0
        %4198 = vmatpush1.msra.mxu0 0.0
        %4199 = vmatprep.subr.mxu0 0.0
        %4200 = vmatpush1.msra.mxu0 0.0
        %4201 = vmatprep.subr.mxu0 0.0
        %4202 = vmatpush1.msra.mxu0 0.0
        %4203 = vmatprep.subr.mxu0 0.0
        %4204 = vmatpush1.msra.mxu0 0.0
        %4205 = vmatprep.subr.mxu0 0.0
        %4206 = vmatpush1.msra.mxu0 0.0
        %4207 = vmatprep.subr.mxu0 0.0
        %4208 = vmatpush1.msra.mxu0 0.0
        %4209 = vmatprep.subr.mxu0 0.0
        %4210 = vmatpush1.msra.mxu0 0.0
        %4211 = vmatprep.subr.mxu0 0.0
        %4212 = vmatpush1.msra.mxu0 0.0
        %4213 = vmatprep.subr.mxu0 0.0
        %4214 = vmatpush1.msra.mxu0 0.0
        %4215 = vmatprep.subr.mxu0 0.0
        %4216 = vmatpush1.msra.mxu0 0.0
        %4217 = vmatprep.subr.mxu0 0.0
        %4218 = vmatpush1.msra.mxu0 0.0
        %4219 = vmatprep.subr.mxu0 0.0
        %4220 = vmatpush1.msra.mxu0 0.0
        %4221 = vmatprep.subr.mxu0 0.0
        %4222 = vmatpush1.msra.mxu0 0.0
        %4223 = vmatprep.subr.mxu0 0.0
        %4224 = vmatpush1.msra.mxu0 0.0
        %4225 = vmatprep.subr.mxu0 0.0
        %4226 = vmatpush1.msra.mxu0 0.0
        %4227 = vmatprep.subr.mxu0 0.0
        %4228 = vmatpush1.msra.mxu0 0.0
        %4229 = vmatprep.subr.mxu0 0.0
        %4230 = vmatpush1.msra.mxu0 0.0
        %4231 = vmatprep.mubr.f32.mxu0 0.0
        %v4232 = vand.u32 %v3929, 4294901760
        %v4233 = vsub.f32 %v3929, %v4232
        %v4234 = vand.u32 %v4233, 4294901760
        %4235 = vmatmul.mubr.f32.gmra.mrb[0].mxu0 %v4234
        %v4236 = vpop.f32.mrb[0].mxu0
        %v4237 = vadd.f32 %v4162, %v4236
        %v4238 = vpop.f32.mrb[0].mxu0
        %4239 = vdwg.mxu0
        %4240 = vmatprep.subr.mxu0 0.0
        %v4241 = vand.u32 %v493, 4294901760
        %v4242 = vsub.f32 %v493, %v4241
        %v4243 = vand.u32 %v4242, 4294901760
        %4244 = vmatpush1.msra.mxu0 %v4243
        %4245 = vmatprep.subr.mxu0 0.0
        %v4246 = vand.u32 %v494, 4294901760
        %v4247 = vsub.f32 %v494, %v4246
        %v4248 = vand.u32 %v4247, 4294901760
        %4249 = vmatpush1.msra.mxu0 %v4248
        %4250 = vmatprep.subr.mxu0 0.0
        %4251 = vmatpush1.msra.mxu0 0.0
        %4252 = vmatprep.subr.mxu0 0.0
        %4253 = vmatpush1.msra.mxu0 0.0
        %4254 = vmatprep.subr.mxu0 0.0
        %4255 = vmatpush1.msra.mxu0 0.0
        %4256 = vmatprep.subr.mxu0 0.0
        %4257 = vmatpush1.msra.mxu0 0.0
        %4258 = vmatprep.subr.mxu0 0.0
        %4259 = vmatpush1.msra.mxu0 0.0
        %4260 = vmatprep.subr.mxu0 0.0
        %4261 = vmatpush1.msra.mxu0 0.0
        %4262 = vmatprep.subr.mxu0 0.0
        %4263 = vmatpush1.msra.mxu0 0.0
        %4264 = vmatprep.subr.mxu0 0.0
        %4265 = vmatpush1.msra.mxu0 0.0
        %4266 = vmatprep.subr.mxu0 0.0
        %4267 = vmatpush1.msra.mxu0 0.0
        %4268 = vmatprep.subr.mxu0 0.0
        %4269 = vmatpush1.msra.mxu0 0.0
        %4270 = vmatprep.subr.mxu0 0.0
        %4271 = vmatpush1.msra.mxu0 0.0
        %4272 = vmatprep.subr.mxu0 0.0
        %4273 = vmatpush1.msra.mxu0 0.0
        %4274 = vmatprep.subr.mxu0 0.0
        %4275 = vmatpush1.msra.mxu0 0.0
        %4276 = vmatprep.subr.mxu0 0.0
        %4277 = vmatpush1.msra.mxu0 0.0
        %4278 = vmatprep.subr.mxu0 0.0
        %4279 = vmatpush1.msra.mxu0 0.0
        %4280 = vmatprep.subr.mxu0 0.0
        %4281 = vmatpush1.msra.mxu0 0.0
        %4282 = vmatprep.subr.mxu0 0.0
        %4283 = vmatpush1.msra.mxu0 0.0
        %4284 = vmatprep.subr.mxu0 0.0
        %4285 = vmatpush1.msra.mxu0 0.0
        %4286 = vmatprep.subr.mxu0 0.0
        %4287 = vmatpush1.msra.mxu0 0.0
        %4288 = vmatprep.subr.mxu0 0.0
        %4289 = vmatpush1.msra.mxu0 0.0
        %4290 = vmatprep.subr.mxu0 0.0
        %4291 = vmatpush1.msra.mxu0 0.0
        %4292 = vmatprep.subr.mxu0 0.0
        %4293 = vmatpush1.msra.mxu0 0.0
        %4294 = vmatprep.subr.mxu0 0.0
        %4295 = vmatpush1.msra.mxu0 0.0
        %4296 = vmatprep.subr.mxu0 0.0
        %4297 = vmatpush1.msra.mxu0 0.0
        %4298 = vmatprep.subr.mxu0 0.0
        %4299 = vmatpush1.msra.mxu0 0.0
        %4300 = vmatprep.subr.mxu0 0.0
        %4301 = vmatpush1.msra.mxu0 0.0
        %4302 = vmatprep.subr.mxu0 0.0
        %4303 = vmatpush1.msra.mxu0 0.0
        %4304 = vmatprep.subr.mxu0 0.0
        %4305 = vmatpush1.msra.mxu0 0.0
        %4306 = vmatprep.subr.mxu0 0.0
        %4307 = vmatpush1.msra.mxu0 0.0
        %4308 = vmatprep.subr.mxu0 0.0
        %4309 = vmatpush1.msra.mxu0 0.0
        %4310 = vmatprep.mubr.f32.mxu0 0.0
        %v4311 = vand.u32 %v3929, 4294901760
        %4312 = vmatmul.mubr.f32.gmra.mrb[0].mxu0 %v4311
        %v4313 = vpop.f32.mrb[0].mxu0
        %v4314 = vadd.f32 %v4237, %v4313
        %v4315 = vpop.f32.mrb[0].mxu0
        %4316 = vdwg.mxu0
        %4317 = vmatprep.subr.mxu0 0.0
        %v4318 = vand.u32 %v493, 4294901760
        %4319 = vmatpush1.msra.mxu0 %v4318
        %4320 = vmatprep.subr.mxu0 0.0
        %v4321 = vand.u32 %v494, 4294901760
        %4322 = vmatpush1.msra.mxu0 %v4321
        %4323 = vmatprep.subr.mxu0 0.0
        %4324 = vmatpush1.msra.mxu0 0.0
        %4325 = vmatprep.subr.mxu0 0.0
        %4326 = vmatpush1.msra.mxu0 0.0
        %4327 = vmatprep.subr.mxu0 0.0
        %4328 = vmatpush1.msra.mxu0 0.0
        %4329 = vmatprep.subr.mxu0 0.0
        %4330 = vmatpush1.msra.mxu0 0.0
        %4331 = vmatprep.subr.mxu0 0.0
        %4332 = vmatpush1.msra.mxu0 0.0
        %4333 = vmatprep.subr.mxu0 0.0
        %4334 = vmatpush1.msra.mxu0 0.0
        %4335 = vmatprep.subr.mxu0 0.0
        %4336 = vmatpush1.msra.mxu0 0.0
        %4337 = vmatprep.subr.mxu0 0.0
        %4338 = vmatpush1.msra.mxu0 0.0
        %4339 = vmatprep.subr.mxu0 0.0
        %4340 = vmatpush1.msra.mxu0 0.0
        %4341 = vmatprep.subr.mxu0 0.0
        %4342 = vmatpush1.msra.mxu0 0.0
        %4343 = vmatprep.subr.mxu0 0.0
        %4344 = vmatpush1.msra.mxu0 0.0
        %4345 = vmatprep.subr.mxu0 0.0
        %4346 = vmatpush1.msra.mxu0 0.0
        %4347 = vmatprep.subr.mxu0 0.0
        %4348 = vmatpush1.msra.mxu0 0.0
        %4349 = vmatprep.subr.mxu0 0.0
        %4350 = vmatpush1.msra.mxu0 0.0
        %4351 = vmatprep.subr.mxu0 0.0
        %4352 = vmatpush1.msra.mxu0 0.0
        %4353 = vmatprep.subr.mxu0 0.0
        %4354 = vmatpush1.msra.mxu0 0.0
        %4355 = vmatprep.subr.mxu0 0.0
        %4356 = vmatpush1.msra.mxu0 0.0
        %4357 = vmatprep.subr.mxu0 0.0
        %4358 = vmatpush1.msra.mxu0 0.0
        %4359 = vmatprep.subr.mxu0 0.0
        %4360 = vmatpush1.msra.mxu0 0.0
        %4361 = vmatprep.subr.mxu0 0.0
        %4362 = vmatpush1.msra.mxu0 0.0
        %4363 = vmatprep.subr.mxu0 0.0
        %4364 = vmatpush1.msra.mxu0 0.0
        %4365 = vmatprep.subr.mxu0 0.0
        %4366 = vmatpush1.msra.mxu0 0.0
        %4367 = vmatprep.subr.mxu0 0.0
        %4368 = vmatpush1.msra.mxu0 0.0
        %4369 = vmatprep.subr.mxu0 0.0
        %4370 = vmatpush1.msra.mxu0 0.0
        %4371 = vmatprep.subr.mxu0 0.0
        %4372 = vmatpush1.msra.mxu0 0.0
        %4373 = vmatprep.subr.mxu0 0.0
        %4374 = vmatpush1.msra.mxu0 0.0
        %4375 = vmatprep.subr.mxu0 0.0
        %4376 = vmatpush1.msra.mxu0 0.0
        %4377 = vmatprep.subr.mxu0 0.0
        %4378 = vmatpush1.msra.mxu0 0.0
        %4379 = vmatprep.subr.mxu0 0.0
        %4380 = vmatpush1.msra.mxu0 0.0
        %4381 = vmatprep.subr.mxu0 0.0
        %4382 = vmatpush1.msra.mxu0 0.0
        %4383 = vmatprep.mubr.f32.mxu0 0.0
        %v4384 = vand.u32 %v3929, 4294901760
        %4385 = vmatmul.mubr.f32.gmra.mrb[0].mxu0 %v4384
        %v4386 = vpop.f32.mrb[0].mxu0
        %v4387 = vadd.f32 %v4314, %v4386
        %v4388 = vpop.f32.mrb[0].mxu0
        %4389 = vdwg.mxu0
        %vm4390 = vcmask 64512
        %4391 = vst.msk [vmem:[%s469] sm:$0xff] %vm4390, %v3464
        %4392 = vst.msk [vmem:[%s476] sm:$0xff] %vm4390, %v4387
        %s4393 = sand.u32 %s242, 1
        %s4394 = scalar_lea.sflag [#allocation5], %s4393
        %s4395 = sand.u32 %s242, 1
        %s4396 = smul.addr %s4395, 16
        %s4397 = scalar_lea.vmem [#allocation11], %s4396
        %s4398 = sand.u32 %s34, 1
        %s4399 = scalar_lea.sflag [#allocation13], %s4398
        %s4400 = sand.u32 %s272, 1
        %s4401 = smul.addr %s4400, 8
        %s4402 = scalar_lea.vmem [#allocation12], %s4401
        %s4403 = sand.u32 %s34, 1
        %s4404 = scalar_lea.sflag [#allocation13], %s4403
        %s4405 = sand.u32 %s302, 1
        %s4406 = smul.addr %s4405, 8
        %s4407 = scalar_lea.vmem [#allocation14], %s4406
        // Predicated region
        $region69: #{tpu_custom_call.1} parent=51 // pred_check
          %p4408 = pneg %p252
        $region70: #{tpu_custom_call.1} parent=51 // pred_check_branch
          %4410 = sbr.rel (%p4408) target = $region72
        $region71: #{tpu_custom_call.1} parent=51 // pred_region
          %s4411 = smul.u32 2, %s40
          %s4413 = ssub.s32 256, 256
          %4414 = vsyncadd %s4394, %s4413
          %s4415 = sadd.s32 %s41, %s4411
          %s4416 = smul.addr %s39, 2
          %s4417 = sadd.s32 %s4415, %s4416
          %s4418 = smul.addr %s4417, 128
          %s4419 = scalar_lea.hbm %s8, %s4418
          %s4420 = sshll.u32 %s4397, 4
          %s4421 = int_to_ptr.vmem [resolvable:$true] %s4420
          %4426 = dma.vmem_to_hbm [thread:$0]  %s4421, 256, %s4419, %s4394, 128, 128, 8
        $region72: #{tpu_custom_call.1} parent=51 // pred_fallthru
          _
        // Predicated region
        $region73: #{tpu_custom_call.1} parent=51 // pred_check
          %p4427 = pneg %p282
        $region74: #{tpu_custom_call.1} parent=51 // pred_check_branch
          %4429 = sbr.rel (%p4427) target = $region76
        $region75: #{tpu_custom_call.1} parent=51 // pred_region
          %s4430 = sadd.s32 %s39, %s40
          %s4431 = sadd.s32 %s4430, %s41
          %s4433 = ssub.s32 128, 128
          %4434 = vsyncadd %s4399, %s4433
          %s4435 = smul.addr %s4431, 128
          %s4436 = scalar_lea.hbm %s9, %s4435
          %s4438 = sshll.u32 %s4402, 4
          %s4439 = int_to_ptr.vmem [resolvable:$true] %s4438
          %4441 = dma.vmem_to_hbm [thread:$0]  %s4439, 128, %s4436, %s4399
        $region76: #{tpu_custom_call.1} parent=51 // pred_fallthru
          _
        // Predicated region
        $region77: #{tpu_custom_call.1} parent=51 // pred_check
          %p4442 = pneg %p312
        $region78: #{tpu_custom_call.1} parent=51 // pred_check_branch
          %4444 = sbr.rel (%p4442) target = $region80
        $region79: #{tpu_custom_call.1} parent=51 // pred_region
          %s4445 = sadd.s32 %s39, %s40
          %s4446 = sadd.s32 %s4445, %s41
          %s4448 = ssub.s32 128, 128
          %4449 = vsyncadd %s4404, %s4448
          %s4450 = smul.addr %s4446, 128
          %s4451 = scalar_lea.hbm %s10, %s4450
          %s4453 = sshll.u32 %s4407, 4
          %s4454 = int_to_ptr.vmem [resolvable:$true] %s4453
          %4456 = dma.vmem_to_hbm [thread:$0]  %s4454, 128, %s4451, %s4404
        $region80: #{tpu_custom_call.1} parent=51 // pred_fallthru
          _
      $region52: #{tpu_custom_call.1} parent=5 // pred_fallthru
        _
      %p4457 = scmp.le.s32.totalorder 2, %s29
      // Predicated region
      $region81: #{tpu_custom_call.1} parent=5 // pred_check
        %p4458 = pneg %p4457
      $region82: #{tpu_custom_call.1} parent=5 // pred_check_branch
        %4460 = sbr.rel (%p4458) target = $region84
      $region83: #{tpu_custom_call.1} parent=5 // pred_region
        %s4461 = ssub.s32 %s29, 2
        // Predicated region
        $region85: #{tpu_custom_call.1} parent=83 // pred_check
          %p4462 = pneg %p258
        $region86: #{tpu_custom_call.1} parent=83 // pred_check_branch
          %4464 = sbr.rel (%p4462) target = $region88
        $region87: #{tpu_custom_call.1} parent=83 // pred_region
          %s4465 = sand.u32 %s243, 1
          %s4466 = scalar_lea.sflag [#allocation5], %s4465
          %s4467 = sand.u32 %s243, 1
          %s4468 = smul.addr %s4467, 16
          %s4469 = scalar_lea.vmem [#allocation11], %s4468
          %4470 = dma.done %s4466, 256
        $region88: #{tpu_custom_call.1} parent=83 // pred_fallthru
          _
        // Predicated region
        $region89: #{tpu_custom_call.1} parent=83 // pred_check
          %p4471 = pneg %p288
        $region90: #{tpu_custom_call.1} parent=83 // pred_check_branch
          %4473 = sbr.rel (%p4471) target = $region92
        $region91: #{tpu_custom_call.1} parent=83 // pred_region
          %s4474 = sand.u32 %s35, 1
          %s4475 = scalar_lea.sflag [#allocation13], %s4474
          %s4476 = sand.u32 %s273, 1
          %s4477 = smul.addr %s4476, 8
          %s4478 = scalar_lea.vmem [#allocation12], %s4477
          %4479 = dma.done %s4475, 128
        $region92: #{tpu_custom_call.1} parent=83 // pred_fallthru
          _
        // Predicated region
        $region93: #{tpu_custom_call.1} parent=83 // pred_check
          %p4480 = pneg %p318
        $region94: #{tpu_custom_call.1} parent=83 // pred_check_branch
          %4482 = sbr.rel (%p4480) target = $region96
        $region95: #{tpu_custom_call.1} parent=83 // pred_region
          %s4483 = sand.u32 %s35, 1
          %s4484 = scalar_lea.sflag [#allocation13], %s4483
          %s4485 = sand.u32 %s303, 1
          %s4486 = smul.addr %s4485, 8
          %s4487 = scalar_lea.vmem [#allocation14], %s4486
          %4488 = dma.done %s4484, 128
        $region96: #{tpu_custom_call.1} parent=83 // pred_fallthru
          _
      $region84: #{tpu_custom_call.1} parent=5 // pred_fallthru
        _
    $region6: #{tpu_custom_call.1} parent=1 // loop_footer
      %s33 = sadd.s32 1, %s29
    $region7: #{tpu_custom_call.1} parent=1 // loop_footer_branch
      %28 = sbr.rel target = $region3
    $region8: #{tpu_custom_call.1} parent=1 // loop_exit
      _
    %4489 = vsyncpa [#allocation4], 1
    %s4490 = scalar_lea.sflag [#allocation4], 1
    %4491 = vsyncpa %s4490, 1
    %4492 = vsyncpa [#allocation7], 1
    %4493 = vsyncpa [#allocation10], 1
    %4494 = vsyncpa [#allocation5], 1
    %s4495 = scalar_lea.sflag [#allocation5], 1
    %4496 = vsyncpa %s4495, 1
    %4497 = vsyncpa [#allocation13], 1
    %s4498 = scalar_lea.sflag [#allocation13], 1
    %4499 = vsyncpa %s4498, 1

</llo_original>
